<compile_context>
chip_gen: v6e
topology: v6e:2x2x1
jax: 0.10.0
libtpu: 0.0.40
codegen_flags: <defaults>
</compile_context>

<pallas_src>
import jax
import jax.numpy as jnp
from jax.experimental import pallas as pl
from jax.experimental.pallas import tpu as pltpu

# Logical model dims (MNIST autoencoder: 784 -> 128 -> 32 -> 128 -> 784).
IN_DIM = 28 * 28          # 784
HID_DIM = 128
LATENT_DIM = 32

# Lane-aligned (multiple-of-128) padded dims used inside the kernel.
IN_PAD = 896              # 7 * 128  (784 zero-padded)
LAT_PAD = 128             # latent 32 zero-padded to a full lane group


def _autoencoder_kernel(x_ref,
                        w1_ref, b1_ref,    # encoder L1: 896 -> 128
                        w2_ref, b2_ref,    # encoder L2: 128 -> 128 (32 real)
                        w3_ref, b3_ref,    # decoder L1: 128 -> 128
                        w4_ref, b4_ref,    # decoder L2: 128 -> 896
                        out_ref):
    x = x_ref[...]                                             # (bt, 896)

    # ---- encoder ----
    h1 = jnp.dot(x, w1_ref[...], preferred_element_type=jnp.float32)
    h1 = jnp.maximum(h1 + b1_ref[...], 0.0)                    # ReLU, (bt, 128)

    z = jnp.dot(h1, w2_ref[...], preferred_element_type=jnp.float32)
    z = z + b2_ref[...]                                        # (bt, 128); lanes >= 32 are exactly 0

    # ---- decoder ----
    h2 = jnp.dot(z, w3_ref[...], preferred_element_type=jnp.float32)
    h2 = jnp.maximum(h2 + b3_ref[...], 0.0)                    # ReLU, (bt, 128)

    logits = jnp.dot(h2, w4_ref[...], preferred_element_type=jnp.float32)
    logits = logits + b4_ref[...]                              # (bt, 896)

    out_ref[...] = jax.nn.sigmoid(logits).astype(out_ref.dtype)


def _pad_params(params):
    """Zero-pad weights/biases to lane-aligned shapes (mathematically exact)."""
    w1, b1, w2, b2, w3, b3, w4, b4 = params
    f32 = jnp.float32
    w1p = jnp.zeros((IN_PAD, HID_DIM), f32).at[:IN_DIM, :].set(w1)
    b1p = b1.reshape(1, HID_DIM).astype(f32)
    w2p = jnp.zeros((HID_DIM, LAT_PAD), f32).at[:, :LATENT_DIM].set(w2)
    b2p = jnp.zeros((1, LAT_PAD), f32).at[:, :LATENT_DIM].set(b2.reshape(1, LATENT_DIM))
    w3p = jnp.zeros((LAT_PAD, HID_DIM), f32).at[:LATENT_DIM, :].set(w3)
    b3p = b3.reshape(1, HID_DIM).astype(f32)
    w4p = jnp.zeros((HID_DIM, IN_PAD), f32).at[:, :IN_DIM].set(w4)
    b4p = jnp.zeros((1, IN_PAD), f32).at[:, :IN_DIM].set(b4.reshape(1, IN_DIM))
    return w1p, b1p, w2p, b2p, w3p, b3p, w4p, b4p


def autoencoder_forward(x, params, *, batch_tile=256):
    """x: (B, 784) float32. Returns x_pred: (B, 784) float32."""
    B, D = x.shape
    assert D == IN_DIM

    # Keep the batch tile sublane-aligned (multiple of 8) and VMEM-safe
    # (<= 2048 rows so double-buffered in/out tiles fit v7x's 64 MiB VMEM).
    batch_tile = max(8, min(int(batch_tile), 2048))
    batch_tile = -(-batch_tile // 8) * 8

    num_tiles = -(-B // batch_tile)          # cdiv
    Bp = num_tiles * batch_tile

    # Pad batch to a tile multiple and features to the lane-aligned width.
    xp = jnp.zeros((Bp, IN_PAD), jnp.float32).at[:B, :IN_DIM].set(x)
    pparams = _pad_params(params)

    # Advisory cost estimate (padded dims).
    flops = 2 * Bp * (IN_PAD * HID_DIM + HID_DIM * LAT_PAD
                      + LAT_PAD * HID_DIM + HID_DIM * IN_PAD)
    weight_elems = (2 * IN_PAD * HID_DIM + 2 * HID_DIM * LAT_PAD
                    + 2 * HID_DIM + LAT_PAD + IN_PAD)
    bytes_accessed = 4 * (2 * Bp * IN_PAD + weight_elems)
    cost = pl.CostEstimate(flops=flops,
                           transcendentals=Bp * IN_PAD,
                           bytes_accessed=bytes_accessed)

    # Grid-invariant (constant index_map) weight/bias blocks.
    full = lambda shape: pl.BlockSpec(shape, lambda i: (0, 0))

    out = pl.pallas_call(
        _autoencoder_kernel,
        out_shape=jax.ShapeDtypeStruct((Bp, IN_PAD), jnp.float32),
        grid_spec=pltpu.PrefetchScalarGridSpec(
            num_scalar_prefetch=0,
            grid=(num_tiles,),
            in_specs=[
                pl.BlockSpec((batch_tile, IN_PAD), lambda i: (i, 0)),   # x
                full((IN_PAD, HID_DIM)), full((1, HID_DIM)),            # w1, b1
                full((HID_DIM, LAT_PAD)), full((1, LAT_PAD)),           # w2, b2
                full((LAT_PAD, HID_DIM)), full((1, HID_DIM)),           # w3, b3
                full((HID_DIM, IN_PAD)), full((1, IN_PAD)),             # w4, b4
            ],
            out_specs=pl.BlockSpec((batch_tile, IN_PAD), lambda i: (i, 0)),
        ),
        compiler_params=pltpu.CompilerParams(
            dimension_semantics=("parallel",),
            vmem_limit_bytes=48 * 1024 * 1024,
        ),
        cost_estimate=cost,
    )(xp, *pparams)

    return out[:B, :IN_DIM]


def init_params(key):
    """Deterministic init mimicking torch.nn.Linear defaults:
    U(-1/sqrt(fan_in), 1/sqrt(fan_in)) for both weight and bias."""
    def linear(k, fan_in, fan_out):
        kw, kb = jax.random.split(k)
        bound = 1.0 / jnp.sqrt(fan_in)
        # Stored as (fan_in, fan_out) so the kernel does x @ W (== x @ W_torch.T).
        w = jax.random.uniform(kw, (fan_in, fan_out), jnp.float32, -bound, bound)
        b = jax.random.uniform(kb, (1, fan_out), jnp.float32, -bound, bound)
        return w, b

    k1, k2, k3, k4 = jax.random.split(key, 4)
    w1, b1 = linear(k1, IN_DIM, HID_DIM)
    w2, b2 = linear(k2, HID_DIM, LATENT_DIM)
    w3, b3 = linear(k3, LATENT_DIM, HID_DIM)
    w4, b4 = linear(k4, HID_DIM, IN_DIM)
    return (w1, b1, w2, b2, w3, b3, w4, b4)


def reference_forward(x, params):
    w1, b1, w2, b2, w3, b3, w4, b4 = params
    h1 = jnp.maximum(x @ w1 + b1, 0.0)
    z = h1 @ w2 + b2
    h2 = jnp.maximum(z @ w3 + b3, 0.0)
    return jax.nn.sigmoid(h2 @ w4 + b4)


if __name__ == "__main__":
    key = jax.random.PRNGKey(0)
    k_params, k_x, k_x2 = jax.random.split(key, 3)

    params = init_params(k_params)

    # MNIST-like NCHW batch (B, 1, 28, 28) -> flatten to (B, 784).
    # B=512 with batch_tile=128 exercises a 4-step "parallel" grid
    # (multi-step pipeline + megacore sharding on v7x).
    B = 512
    x_nchw = jax.random.uniform(k_x, (B, 1, 28, 28), jnp.float32)
    x = x_nchw.reshape(B, IN_DIM)

    x_pred = jax.block_until_ready(autoencoder_forward(x, params, batch_tile=128))
    ref = reference_forward(x, params)
    assert x_pred.shape == (B, IN_DIM)
    assert jnp.allclose(x_pred, ref, atol=1e-5, rtol=1e-5)

    # Ragged batch (not a multiple of the default 256-row tile) goes through
    # the batch pad/slice path.
    B2 = 200
    x2 = jax.random.uniform(k_x2, (B2, IN_DIM), jnp.float32)
    x2_pred = jax.block_until_ready(autoencoder_forward(x2, params))
    assert x2_pred.shape == (B2, IN_DIM)
    assert jnp.allclose(x2_pred, reference_forward(x2, params), atol=1e-5, rtol=1e-5)

    print("KERNEL_OK")
</pallas_src>

<mosaic_0001>
module attributes {stable_mosaic.version = 11 : i64} {
  func.func @_autoencoder_kernel(%arg0: i32, %arg1: memref<128x896xf32, #tpu.memory_space<vmem>>, %arg2: memref<896x128xf32, #tpu.memory_space<vmem>>, %arg3: memref<1x128xf32, #tpu.memory_space<vmem>>, %arg4: memref<128x128xf32, #tpu.memory_space<vmem>>, %arg5: memref<1x128xf32, #tpu.memory_space<vmem>>, %arg6: memref<128x128xf32, #tpu.memory_space<vmem>>, %arg7: memref<1x128xf32, #tpu.memory_space<vmem>>, %arg8: memref<128x896xf32, #tpu.memory_space<vmem>>, %arg9: memref<1x896xf32, #tpu.memory_space<vmem>>, %arg10: memref<128x896xf32, #tpu.memory_space<vmem>>) attributes {dimension_semantics = [#tpu.dimension_semantics<parallel>], iteration_bounds = array<i64: 4>, scalar_prefetch = 0 : i64, scratch_operands = 0 : i64, tpu.core_type = #tpu.core_type<tc>, window_params = [{transform_indices = @transform_0, window_bounds = array<i64: 128, 896>}, {pipeline_mode = #tpu.pipeline_mode<synchronous>, transform_indices = @transform_1, window_bounds = array<i64: 896, 128>}, {pipeline_mode = #tpu.pipeline_mode<synchronous>, transform_indices = @transform_2, window_bounds = array<i64: 1, 128>}, {pipeline_mode = #tpu.pipeline_mode<synchronous>, transform_indices = @transform_3, window_bounds = array<i64: 128, 128>}, {pipeline_mode = #tpu.pipeline_mode<synchronous>, transform_indices = @transform_4, window_bounds = array<i64: 1, 128>}, {pipeline_mode = #tpu.pipeline_mode<synchronous>, transform_indices = @transform_5, window_bounds = array<i64: 128, 128>}, {pipeline_mode = #tpu.pipeline_mode<synchronous>, transform_indices = @transform_6, window_bounds = array<i64: 1, 128>}, {pipeline_mode = #tpu.pipeline_mode<synchronous>, transform_indices = @transform_7, window_bounds = array<i64: 128, 896>}, {pipeline_mode = #tpu.pipeline_mode<synchronous>, transform_indices = @transform_8, window_bounds = array<i64: 1, 896>}, {transform_indices = @transform_9, window_bounds = array<i64: 128, 896>}]} {
    %c0 = arith.constant 0 : index
    %c0_0 = arith.constant 0 : index
    %0 = vector.load %arg1[%c0, %c0_0] : memref<128x896xf32, #tpu.memory_space<vmem>>, vector<128x896xf32>
    %c0_1 = arith.constant 0 : index
    %c0_2 = arith.constant 0 : index
    %1 = vector.load %arg2[%c0_1, %c0_2] : memref<896x128xf32, #tpu.memory_space<vmem>>, vector<896x128xf32>
    %cst = arith.constant dense<0.000000e+00> : vector<128x128xf32>
    %2 = tpu.matmul %0, %1, %cst {dimension_numbers = #tpu.dot_dimension_numbers<[1], [0], [0], [1], [0, 0, 1, 1], [], []>} : vector<128x896xf32>, vector<896x128xf32>, vector<128x128xf32> -> vector<128x128xf32>
    %c0_3 = arith.constant 0 : index
    %c0_4 = arith.constant 0 : index
    %3 = vector.load %arg3[%c0_3, %c0_4] : memref<1x128xf32, #tpu.memory_space<vmem>>, vector<1x128xf32>
    %4 = vector.broadcast %3 : vector<1x128xf32> to vector<128x128xf32>
    %5 = arith.addf %2, %4 : vector<128x128xf32>
    %cst_5 = arith.constant 0.000000e+00 : f32
    %6 = vector.broadcast %cst_5 : f32 to vector<128x128xf32>
    %7 = arith.maximumf %5, %6 : vector<128x128xf32>
    %c0_6 = arith.constant 0 : index
    %c0_7 = arith.constant 0 : index
    %8 = vector.load %arg4[%c0_6, %c0_7] : memref<128x128xf32, #tpu.memory_space<vmem>>, vector<128x128xf32>
    %cst_8 = arith.constant dense<0.000000e+00> : vector<128x128xf32>
    %9 = tpu.matmul %7, %8, %cst_8 {dimension_numbers = #tpu.dot_dimension_numbers<[1], [0], [0], [1], [0, 0, 1, 1], [], []>} : vector<128x128xf32>, vector<128x128xf32>, vector<128x128xf32> -> vector<128x128xf32>
    %c0_9 = arith.constant 0 : index
    %c0_10 = arith.constant 0 : index
    %10 = vector.load %arg5[%c0_9, %c0_10] : memref<1x128xf32, #tpu.memory_space<vmem>>, vector<1x128xf32>
    %11 = vector.broadcast %10 : vector<1x128xf32> to vector<128x128xf32>
    %12 = arith.addf %9, %11 : vector<128x128xf32>
    %c0_11 = arith.constant 0 : index
    %c0_12 = arith.constant 0 : index
    %13 = vector.load %arg6[%c0_11, %c0_12] : memref<128x128xf32, #tpu.memory_space<vmem>>, vector<128x128xf32>
    %cst_13 = arith.constant dense<0.000000e+00> : vector<128x128xf32>
    %14 = tpu.matmul %12, %13, %cst_13 {dimension_numbers = #tpu.dot_dimension_numbers<[1], [0], [0], [1], [0, 0, 1, 1], [], []>} : vector<128x128xf32>, vector<128x128xf32>, vector<128x128xf32> -> vector<128x128xf32>
    %c0_14 = arith.constant 0 : index
    %c0_15 = arith.constant 0 : index
    %15 = vector.load %arg7[%c0_14, %c0_15] : memref<1x128xf32, #tpu.memory_space<vmem>>, vector<1x128xf32>
    %16 = vector.broadcast %15 : vector<1x128xf32> to vector<128x128xf32>
    %17 = arith.addf %14, %16 : vector<128x128xf32>
    %cst_16 = arith.constant 0.000000e+00 : f32
    %18 = vector.broadcast %cst_16 : f32 to vector<128x128xf32>
    %19 = arith.maximumf %17, %18 : vector<128x128xf32>
    %c0_17 = arith.constant 0 : index
    %c0_18 = arith.constant 0 : index
    %20 = vector.load %arg8[%c0_17, %c0_18] : memref<128x896xf32, #tpu.memory_space<vmem>>, vector<128x896xf32>
    %cst_19 = arith.constant dense<0.000000e+00> : vector<128x896xf32>
    %21 = tpu.matmul %19, %20, %cst_19 {dimension_numbers = #tpu.dot_dimension_numbers<[1], [0], [0], [1], [0, 0, 1, 1], [], []>} : vector<128x128xf32>, vector<128x896xf32>, vector<128x896xf32> -> vector<128x896xf32>
    %c0_20 = arith.constant 0 : index
    %c0_21 = arith.constant 0 : index
    %22 = vector.load %arg9[%c0_20, %c0_21] : memref<1x896xf32, #tpu.memory_space<vmem>>, vector<1x896xf32>
    %23 = vector.broadcast %22 : vector<1x896xf32> to vector<128x896xf32>
    %24 = arith.addf %21, %23 : vector<128x896xf32>
    %25 = arith.negf %24 : vector<128x896xf32>
    %26 = math.exp %25 : vector<128x896xf32>
    %cst_22 = arith.constant 1.000000e+00 : f32
    %27 = vector.broadcast %cst_22 : f32 to vector<128x896xf32>
    %28 = arith.addf %27, %26 : vector<128x896xf32>
    %29 = arith.divf %27, %28 : vector<128x896xf32>
    %c0_23 = arith.constant 0 : index
    %c0_24 = arith.constant 0 : index
    %30 = vector.load %arg10[%c0_23, %c0_24] : memref<128x896xf32, #tpu.memory_space<vmem>>, vector<128x896xf32>
    tpu.vector_store %arg10[%c0_23, %c0_24], %29 {strides = array<i32>} : memref<128x896xf32, #tpu.memory_space<vmem>>, vector<128x896xf32>,
    return
  }
  func.func @transform_0(%arg0: i32) -> (i32, i32) {
    %c0_i32 = arith.constant 0 : i32
    %c0_i32_0 = arith.constant 0 : i32
    return %arg0, %c0_i32 : i32, i32
  }
  func.func @transform_1(%arg0: i32) -> (i32, i32) {
    %c0_i32 = arith.constant 0 : i32
    %c0_i32_0 = arith.constant 0 : i32
    %c0_i32_1 = arith.constant 0 : i32
    return %c0_i32, %c0_i32_0 : i32, i32
  }
  func.func @transform_2(%arg0: i32) -> (i32, i32) {
    %c0_i32 = arith.constant 0 : i32
    %c0_i32_0 = arith.constant 0 : i32
    %c0_i32_1 = arith.constant 0 : i32
    return %c0_i32, %c0_i32_0 : i32, i32
  }
  func.func @transform_3(%arg0: i32) -> (i32, i32) {
    %c0_i32 = arith.constant 0 : i32
    %c0_i32_0 = arith.constant 0 : i32
    %c0_i32_1 = arith.constant 0 : i32
    return %c0_i32, %c0_i32_0 : i32, i32
  }
  func.func @transform_4(%arg0: i32) -> (i32, i32) {
    %c0_i32 = arith.constant 0 : i32
    %c0_i32_0 = arith.constant 0 : i32
    %c0_i32_1 = arith.constant 0 : i32
    return %c0_i32, %c0_i32_0 : i32, i32
  }
  func.func @transform_5(%arg0: i32) -> (i32, i32) {
    %c0_i32 = arith.constant 0 : i32
    %c0_i32_0 = arith.constant 0 : i32
    %c0_i32_1 = arith.constant 0 : i32
    return %c0_i32, %c0_i32_0 : i32, i32
  }
  func.func @transform_6(%arg0: i32) -> (i32, i32) {
    %c0_i32 = arith.constant 0 : i32
    %c0_i32_0 = arith.constant 0 : i32
    %c0_i32_1 = arith.constant 0 : i32
    return %c0_i32, %c0_i32_0 : i32, i32
  }
  func.func @transform_7(%arg0: i32) -> (i32, i32) {
    %c0_i32 = arith.constant 0 : i32
    %c0_i32_0 = arith.constant 0 : i32
    %c0_i32_1 = arith.constant 0 : i32
    return %c0_i32, %c0_i32_0 : i32, i32
  }
  func.func @transform_8(%arg0: i32) -> (i32, i32) {
    %c0_i32 = arith.constant 0 : i32
    %c0_i32_0 = arith.constant 0 : i32
    %c0_i32_1 = arith.constant 0 : i32
    return %c0_i32, %c0_i32_0 : i32, i32
  }
  func.func @transform_9(%arg0: i32) -> (i32, i32) {
    %c0_i32 = arith.constant 0 : i32
    %c0_i32_0 = arith.constant 0 : i32
    return %arg0, %c0_i32 : i32, i32
  }
}

</mosaic_0001>

<llo_original>
// kernel: tpu_custom_call.1
$region0: #{tpu_custom_call.1}
  #allocation0 [shape = 'u32[]', space=smem, size = 0x4, offset = 0x4, fixed_abs, tag = 'smem constant byte address 0x4 - core index']
  #allocation1 [shape = 'u32[144,128]{1,0:T(1,128)}', space=vmem, size = 0x12000, scoped, tag = 'internal scratch']
  %s0 = inlined_call_operand.hbm [shape: f32[512,896], index: 0, kind: input, shape index: {}]
  %s1 = inlined_call_operand.hbm [shape: f32[896,128], index: 1, kind: input, shape index: {}]
  %s2 = inlined_call_operand.hbm [shape: f32[1,128], index: 2, kind: input, shape index: {}]
  %s3 = inlined_call_operand.hbm [shape: f32[128,128], index: 3, kind: input, shape index: {}]
  %s4 = inlined_call_operand.hbm [shape: f32[1,128], index: 4, kind: input, shape index: {}]
  %s5 = inlined_call_operand.hbm [shape: f32[128,128], index: 5, kind: input, shape index: {}]
  %s6 = inlined_call_operand.hbm [shape: f32[1,128], index: 6, kind: input, shape index: {}]
  %s7 = inlined_call_operand.hbm [shape: f32[128,896], index: 7, kind: input, shape index: {}]
  %s8 = inlined_call_operand.hbm [shape: f32[1,896], index: 8, kind: input, shape index: {}]
  %s9 = inlined_call_operand.hbm [shape: f32[512,896], index: 9, kind: output, shape index: {}]
  %s10 = sld [smem:[#allocation0]]
  $region105: #{tpu_custom_call.1} parent=0
    _
  %s12 = ssub.s32 1, %s10
  %s13 = scalar_select 0, %s12, %s10
  $region1: #{tpu_custom_call.1} parent=0
    #allocation2 [shape = 'u8[917504]{0}', space=vmem, size = 0xe0000, scoped, tag = 'input window, operand 0']
    #allocation3 [shape = 's32[2]{0}', space=sflag, size = 0x8, scoped, tag = 'scoped memory for tpu_custom_call.1']
    #allocation4 [shape = 's32[2]{0}', space=sflag, size = 0x8, scoped, tag = 'scoped memory for tpu_custom_call.1']
    #allocation5 [shape = 'u8[458752]{0}', space=vmem, size = 0x70000, scoped, tag = 'input window, operand 1, single buffered']
    #allocation6 [shape = 's32[1]{0}', space=sflag, size = 0x4, scoped, tag = 'scoped memory for tpu_custom_call.1']
    #allocation7 [shape = 'u8[512]{0}', space=vmem, size = 0x400, scoped, tag = 'input window, operand 2, single buffered']
    #allocation8 [shape = 'u8[65536]{0}', space=vmem, size = 0x10000, scoped, tag = 'input window, operand 3, single buffered']
    #allocation9 [shape = 's32[1]{0}', space=sflag, size = 0x4, scoped, tag = 'scoped memory for tpu_custom_call.1']
    #allocation10 [shape = 'u8[512]{0}', space=vmem, size = 0x400, scoped, tag = 'input window, operand 4, single buffered']
    #allocation11 [shape = 'u8[65536]{0}', space=vmem, size = 0x10000, scoped, tag = 'input window, operand 5, single buffered']
    #allocation12 [shape = 's32[1]{0}', space=sflag, size = 0x4, scoped, tag = 'scoped memory for tpu_custom_call.1']
    #allocation13 [shape = 'u8[512]{0}', space=vmem, size = 0x400, scoped, tag = 'input window, operand 6, single buffered']
    #allocation14 [shape = 'u8[458752]{0}', space=vmem, size = 0x70000, scoped, tag = 'input window, operand 7, single buffered']
    #allocation15 [shape = 's32[1]{0}', space=sflag, size = 0x4, scoped, tag = 'scoped memory for tpu_custom_call.1']
    #allocation16 [shape = 'u8[3584]{0}', space=vmem, size = 0x1000, scoped, tag = 'input window, operand 8, single buffered']
    #allocation17 [shape = 'u8[917504]{0}', space=vmem, size = 0xe0000, scoped, tag = 'output window, operand 0']
    %14 = vsyncpa [#allocation3], 0
    %s15 = scalar_lea.sflag [#allocation3], 1
    %16 = vsyncpa %s15, 0
    %17 = vsyncpa [#allocation6], 0
    %18 = vsyncpa [#allocation9], 0
    %19 = vsyncpa [#allocation12], 0
    %20 = vsyncpa [#allocation15], 0
    %21 = vsyncpa [#allocation4], 0
    %s22 = scalar_lea.sflag [#allocation4], 1
    %23 = vsyncpa %s22, 0
    loop: start=0, step=1, limit=6
    $region2: #{tpu_custom_call.1} parent=1 // loop_pre_header
      _
    $region3: #{tpu_custom_call.1} parent=1 // loop_header
      %s25 = sphi 0, %s29
      %p26 = scmp.ge.s32.totalorder %s25, 6
      %s35 = sphi 0, %s37
      %s38 = sphi 0, %s35
      %s39 = sphi 0, %s38
      %s55 = sphi 0, %s39
      %s59 = sphi 0, %s59
      %s61 = sphi 0, %s59
      %s62 = sphi 0, %s61
      %s76 = sphi 0, %s62
      %s80 = sphi 0, %s80
      %s82 = sphi 0, %s80
      %s83 = sphi 0, %s82
      %s97 = sphi 0, %s83
      %s101 = sphi 0, %s101
      %s103 = sphi 0, %s101
      %s104 = sphi 0, %s103
      %s118 = sphi 0, %s104
      %s122 = sphi 0, %s122
      %s124 = sphi 0, %s122
      %s125 = sphi 0, %s124
      %s139 = sphi 0, %s125
      %s143 = sphi 0, %s143
      %s145 = sphi 0, %s143
      %s146 = sphi 0, %s145
      %s160 = sphi 0, %s146
      %s164 = sphi 0, %s164
      %s166 = sphi 0, %s164
      %s167 = sphi 0, %s166
      %s181 = sphi 0, %s167
      %s185 = sphi 0, %s185
      %s187 = sphi 0, %s185
      %s188 = sphi 0, %s187
      %s202 = sphi 0, %s188
      %s206 = sphi 0, %s206
      %s208 = sphi 0, %s206
      %s209 = sphi 0, %s208
      %s223 = sphi 0, %s209
      %s229 = sphi 0, %s231
      %s232 = sphi 0, %s229
      %s233 = sphi 0, %s232
      %s249 = sphi 0, %s233
    $region4: #{tpu_custom_call.1} parent=1 // loop_header_branch
      %28 = sbr.rel (%p26) target = $region8
    $region5: #{tpu_custom_call.1} parent=1 // loop_body
      %s30 = ssub.s32 %s25, 1
      %s31 = ssub.s32 %s25, 2
      %s32 = sadd.s32 %s25, 1
      %s33 = ssub.s32 %s25, %s32
      %p34 = scmp.eq.s32.totalorder %s33, 0
      %s36 = sadd.s32 %s35, 1
      %s37 = scalar_select %p34, %s35, %s36
      %p40 = pneg %p34
      %p41 = scmp.eq.s32.totalorder %s25, 3
      %p42 = por %p40, %p41
      %p43 = scmp.ne.s32.totalorder %s35, %s38
      %p44 = scmp.eq.s32.totalorder %s25, 0
      %p45 = por %p43, %p44
      %p46 = scmp.ne.s32.totalorder %s35, %s38
      %p47 = scmp.eq.s32.totalorder %s30, 3
      %p48 = por %p46, %p47
      %p49 = scmp.ne.s32.totalorder %s38, %s39
      %p50 = scmp.eq.s32.totalorder %s30, 0
      %p51 = por %p49, %p50
      %p52 = scmp.ne.s32.totalorder %s38, %s39
      %p53 = scmp.eq.s32.totalorder %s31, 3
      %p54 = por %p52, %p53
      %p56 = scmp.ne.s32.totalorder %s39, %s55
      %p57 = scmp.eq.s32.totalorder %s31, 0
      %p58 = por %p56, %p57
      %s60 = sadd.s32 %s59, 1
      %p63 = scmp.eq.s32.totalorder %s25, 3
      %p64 = scmp.ne.s32.totalorder %s59, %s61
      %p65 = scmp.eq.s32.totalorder %s25, 0
      %p66 = por %p64, %p65
      %p67 = scmp.ne.s32.totalorder %s59, %s61
      %p68 = scmp.eq.s32.totalorder %s30, 3
      %p69 = por %p67, %p68
      %p70 = scmp.ne.s32.totalorder %s61, %s62
      %p71 = scmp.eq.s32.totalorder %s30, 0
      %p72 = por %p70, %p71
      %p73 = scmp.ne.s32.totalorder %s61, %s62
      %p74 = scmp.eq.s32.totalorder %s31, 3
      %p75 = por %p73, %p74
      %p77 = scmp.ne.s32.totalorder %s62, %s76
      %p78 = scmp.eq.s32.totalorder %s31, 0
      %p79 = por %p77, %p78
      %s81 = sadd.s32 %s80, 1
      %p84 = scmp.eq.s32.totalorder %s25, 3
      %p85 = scmp.ne.s32.totalorder %s80, %s82
      %p86 = scmp.eq.s32.totalorder %s25, 0
      %p87 = por %p85, %p86
      %p88 = scmp.ne.s32.totalorder %s80, %s82
      %p89 = scmp.eq.s32.totalorder %s30, 3
      %p90 = por %p88, %p89
      %p91 = scmp.ne.s32.totalorder %s82, %s83
      %p92 = scmp.eq.s32.totalorder %s30, 0
      %p93 = por %p91, %p92
      %p94 = scmp.ne.s32.totalorder %s82, %s83
      %p95 = scmp.eq.s32.totalorder %s31, 3
      %p96 = por %p94, %p95
      %p98 = scmp.ne.s32.totalorder %s83, %s97
      %p99 = scmp.eq.s32.totalorder %s31, 0
      %p100 = por %p98, %p99
      %s102 = sadd.s32 %s101, 1
      %p105 = scmp.eq.s32.totalorder %s25, 3
      %p106 = scmp.ne.s32.totalorder %s101, %s103
      %p107 = scmp.eq.s32.totalorder %s25, 0
      %p108 = por %p106, %p107
      %p109 = scmp.ne.s32.totalorder %s101, %s103
      %p110 = scmp.eq.s32.totalorder %s30, 3
      %p111 = por %p109, %p110
      %p112 = scmp.ne.s32.totalorder %s103, %s104
      %p113 = scmp.eq.s32.totalorder %s30, 0
      %p114 = por %p112, %p113
      %p115 = scmp.ne.s32.totalorder %s103, %s104
      %p116 = scmp.eq.s32.totalorder %s31, 3
      %p117 = por %p115, %p116
      %p119 = scmp.ne.s32.totalorder %s104, %s118
      %p120 = scmp.eq.s32.totalorder %s31, 0
      %p121 = por %p119, %p120
      %s123 = sadd.s32 %s122, 1
      %p126 = scmp.eq.s32.totalorder %s25, 3
      %p127 = scmp.ne.s32.totalorder %s122, %s124
      %p128 = scmp.eq.s32.totalorder %s25, 0
      %p129 = por %p127, %p128
      %p130 = scmp.ne.s32.totalorder %s122, %s124
      %p131 = scmp.eq.s32.totalorder %s30, 3
      %p132 = por %p130, %p131
      %p133 = scmp.ne.s32.totalorder %s124, %s125
      %p134 = scmp.eq.s32.totalorder %s30, 0
      %p135 = por %p133, %p134
      %p136 = scmp.ne.s32.totalorder %s124, %s125
      %p137 = scmp.eq.s32.totalorder %s31, 3
      %p138 = por %p136, %p137
      %p140 = scmp.ne.s32.totalorder %s125, %s139
      %p141 = scmp.eq.s32.totalorder %s31, 0
      %p142 = por %p140, %p141
      %s144 = sadd.s32 %s143, 1
      %p147 = scmp.eq.s32.totalorder %s25, 3
      %p148 = scmp.ne.s32.totalorder %s143, %s145
      %p149 = scmp.eq.s32.totalorder %s25, 0
      %p150 = por %p148, %p149
      %p151 = scmp.ne.s32.totalorder %s143, %s145
      %p152 = scmp.eq.s32.totalorder %s30, 3
      %p153 = por %p151, %p152
      %p154 = scmp.ne.s32.totalorder %s145, %s146
      %p155 = scmp.eq.s32.totalorder %s30, 0
      %p156 = por %p154, %p155
      %p157 = scmp.ne.s32.totalorder %s145, %s146
      %p158 = scmp.eq.s32.totalorder %s31, 3
      %p159 = por %p157, %p158
      %p161 = scmp.ne.s32.totalorder %s146, %s160
      %p162 = scmp.eq.s32.totalorder %s31, 0
      %p163 = por %p161, %p162
      %s165 = sadd.s32 %s164, 1
      %p168 = scmp.eq.s32.totalorder %s25, 3
      %p169 = scmp.ne.s32.totalorder %s164, %s166
      %p170 = scmp.eq.s32.totalorder %s25, 0
      %p171 = por %p169, %p170
      %p172 = scmp.ne.s32.totalorder %s164, %s166
      %p173 = scmp.eq.s32.totalorder %s30, 3
      %p174 = por %p172, %p173
      %p175 = scmp.ne.s32.totalorder %s166, %s167
      %p176 = scmp.eq.s32.totalorder %s30, 0
      %p177 = por %p175, %p176
      %p178 = scmp.ne.s32.totalorder %s166, %s167
      %p179 = scmp.eq.s32.totalorder %s31, 3
      %p180 = por %p178, %p179
      %p182 = scmp.ne.s32.totalorder %s167, %s181
      %p183 = scmp.eq.s32.totalorder %s31, 0
      %p184 = por %p182, %p183
      %s186 = sadd.s32 %s185, 1
      %p189 = scmp.eq.s32.totalorder %s25, 3
      %p190 = scmp.ne.s32.totalorder %s185, %s187
      %p191 = scmp.eq.s32.totalorder %s25, 0
      %p192 = por %p190, %p191
      %p193 = scmp.ne.s32.totalorder %s185, %s187
      %p194 = scmp.eq.s32.totalorder %s30, 3
      %p195 = por %p193, %p194
      %p196 = scmp.ne.s32.totalorder %s187, %s188
      %p197 = scmp.eq.s32.totalorder %s30, 0
      %p198 = por %p196, %p197
      %p199 = scmp.ne.s32.totalorder %s187, %s188
      %p200 = scmp.eq.s32.totalorder %s31, 3
      %p201 = por %p199, %p200
      %p203 = scmp.ne.s32.totalorder %s188, %s202
      %p204 = scmp.eq.s32.totalorder %s31, 0
      %p205 = por %p203, %p204
      %s207 = sadd.s32 %s206, 1
      %p210 = scmp.eq.s32.totalorder %s25, 3
      %p211 = scmp.ne.s32.totalorder %s206, %s208
      %p212 = scmp.eq.s32.totalorder %s25, 0
      %p213 = por %p211, %p212
      %p214 = scmp.ne.s32.totalorder %s206, %s208
      %p215 = scmp.eq.s32.totalorder %s30, 3
      %p216 = por %p214, %p215
      %p217 = scmp.ne.s32.totalorder %s208, %s209
      %p218 = scmp.eq.s32.totalorder %s30, 0
      %p219 = por %p217, %p218
      %p220 = scmp.ne.s32.totalorder %s208, %s209
      %p221 = scmp.eq.s32.totalorder %s31, 3
      %p222 = por %p220, %p221
      %p224 = scmp.ne.s32.totalorder %s209, %s223
      %p225 = scmp.eq.s32.totalorder %s31, 0
      %p226 = por %p224, %p225
      %s227 = ssub.s32 %s25, %s32
      %p228 = scmp.eq.s32.totalorder %s227, 0
      %s230 = sadd.s32 %s229, 1
      %s231 = scalar_select %p228, %s229, %s230
      %p234 = pneg %p228
      %p235 = scmp.eq.s32.totalorder %s25, 3
      %p236 = por %p234, %p235
      %p237 = scmp.ne.s32.totalorder %s229, %s232
      %p238 = scmp.eq.s32.totalorder %s25, 0
      %p239 = por %p237, %p238
      %p240 = scmp.ne.s32.totalorder %s229, %s232
      %p241 = scmp.eq.s32.totalorder %s30, 3
      %p242 = por %p240, %p241
      %p243 = scmp.ne.s32.totalorder %s232, %s233
      %p244 = scmp.eq.s32.totalorder %s30, 0
      %p245 = por %p243, %p244
      %p246 = scmp.ne.s32.totalorder %s232, %s233
      %p247 = scmp.eq.s32.totalorder %s31, 3
      %p248 = por %p246, %p247
      %p250 = scmp.ne.s32.totalorder %s233, %s249
      %p251 = scmp.eq.s32.totalorder %s31, 0
      %p252 = por %p250, %p251
      %p253 = scmp.le.s32.totalorder 1, %s25
      %p254 = scmp.lt.s32.totalorder %s25, 5
      %p255 = pnand %p253, %p254
      %p256 = pneg %p255
      // Predicated region
      $region9: #{tpu_custom_call.1} parent=5 // pred_check
        _
      $region10: #{tpu_custom_call.1} parent=5 // pred_check_branch
        %258 = sbr.rel (%p255) target = $region12
      $region11: #{tpu_custom_call.1} parent=5 // pred_region
        %s259 = ssub.s32 %s25, 1
        // Predicated region
        $region13: #{tpu_custom_call.1} parent=11 // pred_check
          %p260 = pneg %p72
        $region14: #{tpu_custom_call.1} parent=11 // pred_check_branch
          %262 = sbr.rel (%p260) target = $region16
        $region15: #{tpu_custom_call.1} parent=11 // pred_region
          %s264 = ssub.s32 14336, 14336
          %265 = vsyncadd [#allocation6], %s264
          %s266 = sshll.u32 [#allocation5], 4
          %s267 = int_to_ptr.vmem [resolvable:$true] %s266
          %272 = dma.hbm_to_vmem [thread:$0]  %s1, 14336, %s267, [#allocation6], 128, 128, 8
        $region16: #{tpu_custom_call.1} parent=11 // pred_fallthru
          _
        // Predicated region
        $region17: #{tpu_custom_call.1} parent=11 // pred_check
          %p273 = pneg %p93
        $region18: #{tpu_custom_call.1} parent=11 // pred_check_branch
          %275 = sbr.rel (%p273) target = $region20
        $region19: #{tpu_custom_call.1} parent=11 // pred_region
          %s277 = ssub.s32 16, 16
          %278 = vsyncadd [#allocation6], %s277
          %s280 = sshll.u32 [#allocation7], 4
          %s281 = int_to_ptr.vmem [resolvable:$true] %s280
          %283 = dma.hbm_to_vmem [thread:$0]  %s2, 16, %s281, [#allocation6]
        $region20: #{tpu_custom_call.1} parent=11 // pred_fallthru
          _
        // Predicated region
        $region21: #{tpu_custom_call.1} parent=11 // pred_check
          %p284 = pneg %p114
        $region22: #{tpu_custom_call.1} parent=11 // pred_check_branch
          %286 = sbr.rel (%p284) target = $region24
        $region23: #{tpu_custom_call.1} parent=11 // pred_region
          %s288 = ssub.s32 2048, 2048
          %289 = vsyncadd [#allocation9], %s288
          %s290 = sshll.u32 [#allocation8], 4
          %s291 = int_to_ptr.vmem [resolvable:$true] %s290
          %296 = dma.hbm_to_vmem [thread:$0]  %s3, 2048, %s291, [#allocation9], 128, 128, 8
        $region24: #{tpu_custom_call.1} parent=11 // pred_fallthru
          _
        // Predicated region
        $region25: #{tpu_custom_call.1} parent=11 // pred_check
          %p297 = pneg %p135
        $region26: #{tpu_custom_call.1} parent=11 // pred_check_branch
          %299 = sbr.rel (%p297) target = $region28
        $region27: #{tpu_custom_call.1} parent=11 // pred_region
          %s301 = ssub.s32 16, 16
          %302 = vsyncadd [#allocation9], %s301
          %s304 = sshll.u32 [#allocation10], 4
          %s305 = int_to_ptr.vmem [resolvable:$true] %s304
          %307 = dma.hbm_to_vmem [thread:$0]  %s4, 16, %s305, [#allocation9]
        $region28: #{tpu_custom_call.1} parent=11 // pred_fallthru
          _
        // Predicated region
        $region29: #{tpu_custom_call.1} parent=11 // pred_check
          %p308 = pneg %p156
        $region30: #{tpu_custom_call.1} parent=11 // pred_check_branch
          %310 = sbr.rel (%p308) target = $region32
        $region31: #{tpu_custom_call.1} parent=11 // pred_region
          %s312 = ssub.s32 2048, 2048
          %313 = vsyncadd [#allocation12], %s312
          %s314 = sshll.u32 [#allocation11], 4
          %s315 = int_to_ptr.vmem [resolvable:$true] %s314
          %320 = dma.hbm_to_vmem [thread:$0]  %s5, 2048, %s315, [#allocation12], 128, 128, 8
        $region32: #{tpu_custom_call.1} parent=11 // pred_fallthru
          _
        // Predicated region
        $region33: #{tpu_custom_call.1} parent=11 // pred_check
          %p321 = pneg %p177
        $region34: #{tpu_custom_call.1} parent=11 // pred_check_branch
          %323 = sbr.rel (%p321) target = $region36
        $region35: #{tpu_custom_call.1} parent=11 // pred_region
          %s325 = ssub.s32 16, 16
          %326 = vsyncadd [#allocation12], %s325
          %s328 = sshll.u32 [#allocation13], 4
          %s329 = int_to_ptr.vmem [resolvable:$true] %s328
          %331 = dma.hbm_to_vmem [thread:$0]  %s6, 16, %s329, [#allocation12]
        $region36: #{tpu_custom_call.1} parent=11 // pred_fallthru
          _
        // Predicated region
        $region37: #{tpu_custom_call.1} parent=11 // pred_check
          %p332 = pneg %p198
        $region38: #{tpu_custom_call.1} parent=11 // pred_check_branch
          %334 = sbr.rel (%p332) target = $region40
        $region39: #{tpu_custom_call.1} parent=11 // pred_region
          %s336 = ssub.s32 14336, 14336
          %337 = vsyncadd [#allocation15], %s336
          %s338 = sshll.u32 [#allocation14], 4
          %s339 = int_to_ptr.vmem [resolvable:$true] %s338
          %344 = dma.hbm_to_vmem [thread:$0]  %s7, 14336, %s339, [#allocation15], 896, 896, 56
        $region40: #{tpu_custom_call.1} parent=11 // pred_fallthru
          _
        // Predicated region
        $region41: #{tpu_custom_call.1} parent=11 // pred_check
          %p345 = pneg %p219
        $region42: #{tpu_custom_call.1} parent=11 // pred_check_branch
          %347 = sbr.rel (%p345) target = $region44
        $region43: #{tpu_custom_call.1} parent=11 // pred_region
          %s349 = ssub.s32 112, 112
          %350 = vsyncadd [#allocation15], %s349
          %s352 = sshll.u32 [#allocation16], 4
          %s353 = int_to_ptr.vmem [resolvable:$true] %s352
          %355 = dma.hbm_to_vmem [thread:$0]  %s8, 112, %s353, [#allocation15]
        $region44: #{tpu_custom_call.1} parent=11 // pred_fallthru
          _
      $region12: #{tpu_custom_call.1} parent=5 // pred_fallthru
        _
      %p356 = scmp.lt.s32.totalorder %s25, 4
      // Predicated region
      $region45: #{tpu_custom_call.1} parent=5 // pred_check
        %p357 = pneg %p356
      $region46: #{tpu_custom_call.1} parent=5 // pred_check_branch
        %359 = sbr.rel (%p357) target = $region48
      $region47: #{tpu_custom_call.1} parent=5 // pred_region
        // Predicated region
        $region49: #{tpu_custom_call.1} parent=47 // pred_check
          %p360 = pneg %p45
        $region50: #{tpu_custom_call.1} parent=47 // pred_check_branch
          %362 = sbr.rel (%p360) target = $region52
        $region51: #{tpu_custom_call.1} parent=47 // pred_region
          %s363 = sand.u32 %s35, 1
          %s364 = scalar_lea.sflag [#allocation3], %s363
          %s365 = sand.u32 %s35, 1
          %s366 = smul.addr %s365, 896
          %s367 = scalar_lea.vmem [#allocation2], %s366
          %s368 = smul.u32 16, %s25
          %s370 = ssub.s32 14336, 14336
          %371 = vsyncadd %s364, %s370
          %s372 = smul.addr %s368, 7
          %s373 = smul.addr %s372, 128
          %s374 = scalar_lea.hbm %s0, %s373
          %s375 = sshll.u32 %s367, 4
          %s376 = int_to_ptr.vmem [resolvable:$true] %s375
          %381 = dma.hbm_to_vmem [thread:$0]  %s374, 14336, %s376, %s364, 896, 896, 56
        $region52: #{tpu_custom_call.1} parent=47 // pred_fallthru
          _
      $region48: #{tpu_custom_call.1} parent=5 // pred_fallthru
        _
      %p382 = scmp.le.s32.totalorder 1, %s25
      %p383 = scmp.lt.s32.totalorder %s25, 5
      %p384 = pnand %p382, %p383
      %p385 = pneg %p384
      // Predicated region
      $region53: #{tpu_custom_call.1} parent=5 // pred_check
        _
      $region54: #{tpu_custom_call.1} parent=5 // pred_check_branch
        %387 = sbr.rel (%p384) target = $region56
      $region55: #{tpu_custom_call.1} parent=5 // pred_region
        %s388 = ssub.s32 %s25, 1
        %s389 = sand.u32 %s38, 1
        %s390 = scalar_lea.sflag [#allocation3], %s389
        %s391 = sand.u32 %s38, 1
        %s392 = smul.addr %s391, 896
        %s393 = scalar_lea.vmem [#allocation2], %s392
        // Predicated region
        $region57: #{tpu_custom_call.1} parent=55 // pred_check
          %p394 = pneg %p51
        $region58: #{tpu_custom_call.1} parent=55 // pred_check_branch
          %396 = sbr.rel (%p394) target = $region60
        $region59: #{tpu_custom_call.1} parent=55 // pred_region
          %397 = dma.done %s390, 14336
        $region60: #{tpu_custom_call.1} parent=55 // pred_fallthru
          _
        // Predicated region
        $region61: #{tpu_custom_call.1} parent=55 // pred_check
          %p398 = pneg %p72
        $region62: #{tpu_custom_call.1} parent=55 // pred_check_branch
          %400 = sbr.rel (%p398) target = $region64
        $region63: #{tpu_custom_call.1} parent=55 // pred_region
          %401 = dma.done [#allocation6], 14336
        $region64: #{tpu_custom_call.1} parent=55 // pred_fallthru
          _
        // Predicated region
        $region65: #{tpu_custom_call.1} parent=55 // pred_check
          %p402 = pneg %p93
        $region66: #{tpu_custom_call.1} parent=55 // pred_check_branch
          %404 = sbr.rel (%p402) target = $region68
        $region67: #{tpu_custom_call.1} parent=55 // pred_region
          %405 = dma.done [#allocation6], 16
        $region68: #{tpu_custom_call.1} parent=55 // pred_fallthru
          _
        // Predicated region
        $region69: #{tpu_custom_call.1} parent=55 // pred_check
          %p406 = pneg %p114
        $region70: #{tpu_custom_call.1} parent=55 // pred_check_branch
          %408 = sbr.rel (%p406) target = $region72
        $region71: #{tpu_custom_call.1} parent=55 // pred_region
          %409 = dma.done [#allocation9], 2048
        $region72: #{tpu_custom_call.1} parent=55 // pred_fallthru
          _
        // Predicated region
        $region73: #{tpu_custom_call.1} parent=55 // pred_check
          %p410 = pneg %p135
        $region74: #{tpu_custom_call.1} parent=55 // pred_check_branch
          %412 = sbr.rel (%p410) target = $region76
        $region75: #{tpu_custom_call.1} parent=55 // pred_region
          %413 = dma.done [#allocation9], 16
        $region76: #{tpu_custom_call.1} parent=55 // pred_fallthru
          _
        // Predicated region
        $region77: #{tpu_custom_call.1} parent=55 // pred_check
          %p414 = pneg %p156
        $region78: #{tpu_custom_call.1} parent=55 // pred_check_branch
          %416 = sbr.rel (%p414) target = $region80
        $region79: #{tpu_custom_call.1} parent=55 // pred_region
          %417 = dma.done [#allocation12], 2048
        $region80: #{tpu_custom_call.1} parent=55 // pred_fallthru
          _
        // Predicated region
        $region81: #{tpu_custom_call.1} parent=55 // pred_check
          %p418 = pneg %p177
        $region82: #{tpu_custom_call.1} parent=55 // pred_check_branch
          %420 = sbr.rel (%p418) target = $region84
        $region83: #{tpu_custom_call.1} parent=55 // pred_region
          %421 = dma.done [#allocation12], 16
        $region84: #{tpu_custom_call.1} parent=55 // pred_fallthru
          _
        // Predicated region
        $region85: #{tpu_custom_call.1} parent=55 // pred_check
          %p422 = pneg %p198
        $region86: #{tpu_custom_call.1} parent=55 // pred_check_branch
          %424 = sbr.rel (%p422) target = $region88
        $region87: #{tpu_custom_call.1} parent=55 // pred_region
          %425 = dma.done [#allocation15], 14336
        $region88: #{tpu_custom_call.1} parent=55 // pred_fallthru
          _
        // Predicated region
        $region89: #{tpu_custom_call.1} parent=55 // pred_check
          %p426 = pneg %p219
        $region90: #{tpu_custom_call.1} parent=55 // pred_check_branch
          %428 = sbr.rel (%p426) target = $region92
        $region91: #{tpu_custom_call.1} parent=55 // pred_region
          %429 = dma.done [#allocation15], 112
        $region92: #{tpu_custom_call.1} parent=55 // pred_fallthru
          _
        %s430 = sand.u32 %s38, 1
        %s431 = scalar_lea.sflag [#allocation3], %s430
        %s432 = sand.u32 %s38, 1
        %s433 = smul.addr %s432, 896
        %s434 = scalar_lea.vmem [#allocation2], %s433
        %p435 = pneg %p51
        %p436 = pneg %p48
        %p437 = pneg %p72
        %p438 = pneg %p69
        %p439 = pneg %p93
        %p440 = pneg %p90
        %p441 = pneg %p114
        %p442 = pneg %p111
        %p443 = pneg %p135
        %p444 = pneg %p132
        %p445 = pneg %p156
        %p446 = pneg %p153
        %p447 = pneg %p177
        %p448 = pneg %p174
        %p449 = pneg %p198
        %p450 = pneg %p195
        %p451 = pneg %p219
        %p452 = pneg %p216
        %p453 = pneg %p245
        %p454 = pneg %p242
        %s455 = sand.u32 %s232, 1
        %s456 = scalar_lea.sflag [#allocation4], %s455
        %s457 = sand.u32 %s232, 1
        %s458 = smul.addr %s457, 896
        %s459 = scalar_lea.vmem [#allocation17], %s458
        %s460 = smul.u32 16, %s30
        %s461 = smul.u32 16, %s30
        %v462 = vld [vmem:[%s393] sm:$0xff]
        %v463 = vld [vmem:[%s393 + $0x8] sm:$0xff]
        %v464 = vld [vmem:[%s393 + $0x10] sm:$0xff]
        %v465 = vld [vmem:[%s393 + $0x18] sm:$0xff]
        %v466 = vld [vmem:[%s393 + $0x20] sm:$0xff]
        %v467 = vld [vmem:[%s393 + $0x28] sm:$0xff]
        %v468 = vld [vmem:[%s393 + $0x30] sm:$0xff]
        %v469 = vld [vmem:[%s393 + $0x38] sm:$0xff]
        %v470 = vld [vmem:[%s393 + $0x40] sm:$0xff]
        %v471 = vld [vmem:[%s393 + $0x48] sm:$0xff]
        %v472 = vld [vmem:[%s393 + $0x50] sm:$0xff]
        %v473 = vld [vmem:[%s393 + $0x58] sm:$0xff]
        %v474 = vld [vmem:[%s393 + $0x60] sm:$0xff]
        %v475 = vld [vmem:[%s393 + $0x68] sm:$0xff]
        %v476 = vld [vmem:[%s393 + $0x70] sm:$0xff]
        %v477 = vld [vmem:[%s393 + $0x78] sm:$0xff]
        %v478 = vld [vmem:[%s393 + $0x80] sm:$0xff]
        %v479 = vld [vmem:[%s393 + $0x88] sm:$0xff]
        %v480 = vld [vmem:[%s393 + $0x90] sm:$0xff]
        %v481 = vld [vmem:[%s393 + $0x98] sm:$0xff]
        %v482 = vld [vmem:[%s393 + $0xa0] sm:$0xff]
        %v483 = vld [vmem:[%s393 + $0xa8] sm:$0xff]
        %v484 = vld [vmem:[%s393 + $0xb0] sm:$0xff]
        %v485 = vld [vmem:[%s393 + $0xb8] sm:$0xff]
        %v486 = vld [vmem:[%s393 + $0xc0] sm:$0xff]
        %v487 = vld [vmem:[%s393 + $0xc8] sm:$0xff]
        %v488 = vld [vmem:[%s393 + $0xd0] sm:$0xff]
        %v489 = vld [vmem:[%s393 + $0xd8] sm:$0xff]
        %v490 = vld [vmem:[%s393 + $0xe0] sm:$0xff]
        %v491 = vld [vmem:[%s393 + $0xe8] sm:$0xff]
        %v492 = vld [vmem:[%s393 + $0xf0] sm:$0xff]
        %v493 = vld [vmem:[%s393 + $0xf8] sm:$0xff]
        %v494 = vld [vmem:[%s393 + $0x100] sm:$0xff]
        %v495 = vld [vmem:[%s393 + $0x108] sm:$0xff]
        %v496 = vld [vmem:[%s393 + $0x110] sm:$0xff]
        %v497 = vld [vmem:[%s393 + $0x118] sm:$0xff]
        %v498 = vld [vmem:[%s393 + $0x120] sm:$0xff]
        %v499 = vld [vmem:[%s393 + $0x128] sm:$0xff]
        %v500 = vld [vmem:[%s393 + $0x130] sm:$0xff]
        %v501 = vld [vmem:[%s393 + $0x138] sm:$0xff]
        %v502 = vld [vmem:[%s393 + $0x140] sm:$0xff]
        %v503 = vld [vmem:[%s393 + $0x148] sm:$0xff]
        %v504 = vld [vmem:[%s393 + $0x150] sm:$0xff]
        %v505 = vld [vmem:[%s393 + $0x158] sm:$0xff]
        %v506 = vld [vmem:[%s393 + $0x160] sm:$0xff]
        %v507 = vld [vmem:[%s393 + $0x168] sm:$0xff]
        %v508 = vld [vmem:[%s393 + $0x170] sm:$0xff]
        %v509 = vld [vmem:[%s393 + $0x178] sm:$0xff]
        %v510 = vld [vmem:[%s393 + $0x180] sm:$0xff]
        %v511 = vld [vmem:[%s393 + $0x188] sm:$0xff]
        %v512 = vld [vmem:[%s393 + $0x190] sm:$0xff]
        %v513 = vld [vmem:[%s393 + $0x198] sm:$0xff]
        %v514 = vld [vmem:[%s393 + $0x1a0] sm:$0xff]
        %v515 = vld [vmem:[%s393 + $0x1a8] sm:$0xff]
        %v516 = vld [vmem:[%s393 + $0x1b0] sm:$0xff]
        %v517 = vld [vmem:[%s393 + $0x1b8] sm:$0xff]
        %v518 = vld [vmem:[%s393 + $0x1c0] sm:$0xff]
        %v519 = vld [vmem:[%s393 + $0x1c8] sm:$0xff]
        %v520 = vld [vmem:[%s393 + $0x1d0] sm:$0xff]
        %v521 = vld [vmem:[%s393 + $0x1d8] sm:$0xff]
        %v522 = vld [vmem:[%s393 + $0x1e0] sm:$0xff]
        %v523 = vld [vmem:[%s393 + $0x1e8] sm:$0xff]
        %v524 = vld [vmem:[%s393 + $0x1f0] sm:$0xff]
        %v525 = vld [vmem:[%s393 + $0x1f8] sm:$0xff]
        %v526 = vld [vmem:[%s393 + $0x200] sm:$0xff]
        %v527 = vld [vmem:[%s393 + $0x208] sm:$0xff]
        %v528 = vld [vmem:[%s393 + $0x210] sm:$0xff]
        %v529 = vld [vmem:[%s393 + $0x218] sm:$0xff]
        %v530 = vld [vmem:[%s393 + $0x220] sm:$0xff]
        %v531 = vld [vmem:[%s393 + $0x228] sm:$0xff]
        %v532 = vld [vmem:[%s393 + $0x230] sm:$0xff]
        %v533 = vld [vmem:[%s393 + $0x238] sm:$0xff]
        %v534 = vld [vmem:[%s393 + $0x240] sm:$0xff]
        %v535 = vld [vmem:[%s393 + $0x248] sm:$0xff]
        %v536 = vld [vmem:[%s393 + $0x250] sm:$0xff]
        %v537 = vld [vmem:[%s393 + $0x258] sm:$0xff]
        %v538 = vld [vmem:[%s393 + $0x260] sm:$0xff]
        %v539 = vld [vmem:[%s393 + $0x268] sm:$0xff]
        %v540 = vld [vmem:[%s393 + $0x270] sm:$0xff]
        %v541 = vld [vmem:[%s393 + $0x278] sm:$0xff]
        %v542 = vld [vmem:[%s393 + $0x280] sm:$0xff]
        %v543 = vld [vmem:[%s393 + $0x288] sm:$0xff]
        %v544 = vld [vmem:[%s393 + $0x290] sm:$0xff]
        %v545 = vld [vmem:[%s393 + $0x298] sm:$0xff]
        %v546 = vld [vmem:[%s393 + $0x2a0] sm:$0xff]
        %v547 = vld [vmem:[%s393 + $0x2a8] sm:$0xff]
        %v548 = vld [vmem:[%s393 + $0x2b0] sm:$0xff]
        %v549 = vld [vmem:[%s393 + $0x2b8] sm:$0xff]
        %v550 = vld [vmem:[%s393 + $0x2c0] sm:$0xff]
        %v551 = vld [vmem:[%s393 + $0x2c8] sm:$0xff]
        %v552 = vld [vmem:[%s393 + $0x2d0] sm:$0xff]
        %v553 = vld [vmem:[%s393 + $0x2d8] sm:$0xff]
        %v554 = vld [vmem:[%s393 + $0x2e0] sm:$0xff]
        %v555 = vld [vmem:[%s393 + $0x2e8] sm:$0xff]
        %v556 = vld [vmem:[%s393 + $0x2f0] sm:$0xff]
        %v557 = vld [vmem:[%s393 + $0x2f8] sm:$0xff]
        %v558 = vld [vmem:[%s393 + $0x300] sm:$0xff]
        %v559 = vld [vmem:[%s393 + $0x308] sm:$0xff]
        %v560 = vld [vmem:[%s393 + $0x310] sm:$0xff]
        %v561 = vld [vmem:[%s393 + $0x318] sm:$0xff]
        %v562 = vld [vmem:[%s393 + $0x320] sm:$0xff]
        %v563 = vld [vmem:[%s393 + $0x328] sm:$0xff]
        %v564 = vld [vmem:[%s393 + $0x330] sm:$0xff]
        %v565 = vld [vmem:[%s393 + $0x338] sm:$0xff]
        %v566 = vld [vmem:[%s393 + $0x340] sm:$0xff]
        %v567 = vld [vmem:[%s393 + $0x348] sm:$0xff]
        %v568 = vld [vmem:[%s393 + $0x350] sm:$0xff]
        %v569 = vld [vmem:[%s393 + $0x358] sm:$0xff]
        %v570 = vld [vmem:[%s393 + $0x360] sm:$0xff]
        %v571 = vld [vmem:[%s393 + $0x368] sm:$0xff]
        %v572 = vld [vmem:[%s393 + $0x370] sm:$0xff]
        %v573 = vld [vmem:[%s393 + $0x378] sm:$0xff]
        %v574 = vld [vmem:[#allocation5] sm:$0xff]
        %v575 = vld [vmem:[#allocation5 + $0x8] sm:$0xff]
        %v576 = vld [vmem:[#allocation5 + $0x10] sm:$0xff]
        %v577 = vld [vmem:[#allocation5 + $0x18] sm:$0xff]
        %v578 = vld [vmem:[#allocation5 + $0x20] sm:$0xff]
        %v579 = vld [vmem:[#allocation5 + $0x28] sm:$0xff]
        %v580 = vld [vmem:[#allocation5 + $0x30] sm:$0xff]
        %v581 = vld [vmem:[#allocation5 + $0x38] sm:$0xff]
        %v582 = vld [vmem:[#allocation5 + $0x40] sm:$0xff]
        %v583 = vld [vmem:[#allocation5 + $0x48] sm:$0xff]
        %v584 = vld [vmem:[#allocation5 + $0x50] sm:$0xff]
        %v585 = vld [vmem:[#allocation5 + $0x58] sm:$0xff]
        %v586 = vld [vmem:[#allocation5 + $0x60] sm:$0xff]
        %v587 = vld [vmem:[#allocation5 + $0x68] sm:$0xff]
        %v588 = vld [vmem:[#allocation5 + $0x70] sm:$0xff]
        %v589 = vld [vmem:[#allocation5 + $0x78] sm:$0xff]
        %v590 = vld [vmem:[#allocation5 + $0x80] sm:$0xff]
        %v591 = vld [vmem:[#allocation5 + $0x88] sm:$0xff]
        %v592 = vld [vmem:[#allocation5 + $0x90] sm:$0xff]
        %v593 = vld [vmem:[#allocation5 + $0x98] sm:$0xff]
        %v594 = vld [vmem:[#allocation5 + $0xa0] sm:$0xff]
        %v595 = vld [vmem:[#allocation5 + $0xa8] sm:$0xff]
        %v596 = vld [vmem:[#allocation5 + $0xb0] sm:$0xff]
        %v597 = vld [vmem:[#allocation5 + $0xb8] sm:$0xff]
        %v598 = vld [vmem:[#allocation5 + $0xc0] sm:$0xff]
        %v599 = vld [vmem:[#allocation5 + $0xc8] sm:$0xff]
        %v600 = vld [vmem:[#allocation5 + $0xd0] sm:$0xff]
        %v601 = vld [vmem:[#allocation5 + $0xd8] sm:$0xff]
        %v602 = vld [vmem:[#allocation5 + $0xe0] sm:$0xff]
        %v603 = vld [vmem:[#allocation5 + $0xe8] sm:$0xff]
        %v604 = vld [vmem:[#allocation5 + $0xf0] sm:$0xff]
        %v605 = vld [vmem:[#allocation5 + $0xf8] sm:$0xff]
        %v606 = vld [vmem:[#allocation5 + $0x100] sm:$0xff]
        %v607 = vld [vmem:[#allocation5 + $0x108] sm:$0xff]
        %v608 = vld [vmem:[#allocation5 + $0x110] sm:$0xff]
        %v609 = vld [vmem:[#allocation5 + $0x118] sm:$0xff]
        %v610 = vld [vmem:[#allocation5 + $0x120] sm:$0xff]
        %v611 = vld [vmem:[#allocation5 + $0x128] sm:$0xff]
        %v612 = vld [vmem:[#allocation5 + $0x130] sm:$0xff]
        %v613 = vld [vmem:[#allocation5 + $0x138] sm:$0xff]
        %v614 = vld [vmem:[#allocation5 + $0x140] sm:$0xff]
        %v615 = vld [vmem:[#allocation5 + $0x148] sm:$0xff]
        %v616 = vld [vmem:[#allocation5 + $0x150] sm:$0xff]
        %v617 = vld [vmem:[#allocation5 + $0x158] sm:$0xff]
        %v618 = vld [vmem:[#allocation5 + $0x160] sm:$0xff]
        %v619 = vld [vmem:[#allocation5 + $0x168] sm:$0xff]
        %v620 = vld [vmem:[#allocation5 + $0x170] sm:$0xff]
        %v621 = vld [vmem:[#allocation5 + $0x178] sm:$0xff]
        %v622 = vld [vmem:[#allocation5 + $0x180] sm:$0xff]
        %v623 = vld [vmem:[#allocation5 + $0x188] sm:$0xff]
        %v624 = vld [vmem:[#allocation5 + $0x190] sm:$0xff]
        %v625 = vld [vmem:[#allocation5 + $0x198] sm:$0xff]
        %v626 = vld [vmem:[#allocation5 + $0x1a0] sm:$0xff]
        %v627 = vld [vmem:[#allocation5 + $0x1a8] sm:$0xff]
        %v628 = vld [vmem:[#allocation5 + $0x1b0] sm:$0xff]
        %v629 = vld [vmem:[#allocation5 + $0x1b8] sm:$0xff]
        %v630 = vld [vmem:[#allocation5 + $0x1c0] sm:$0xff]
        %v631 = vld [vmem:[#allocation5 + $0x1c8] sm:$0xff]
        %v632 = vld [vmem:[#allocation5 + $0x1d0] sm:$0xff]
        %v633 = vld [vmem:[#allocation5 + $0x1d8] sm:$0xff]
        %v634 = vld [vmem:[#allocation5 + $0x1e0] sm:$0xff]
        %v635 = vld [vmem:[#allocation5 + $0x1e8] sm:$0xff]
        %v636 = vld [vmem:[#allocation5 + $0x1f0] sm:$0xff]
        %v637 = vld [vmem:[#allocation5 + $0x1f8] sm:$0xff]
        %v638 = vld [vmem:[#allocation5 + $0x200] sm:$0xff]
        %v639 = vld [vmem:[#allocation5 + $0x208] sm:$0xff]
        %v640 = vld [vmem:[#allocation5 + $0x210] sm:$0xff]
        %v641 = vld [vmem:[#allocation5 + $0x218] sm:$0xff]
        %v642 = vld [vmem:[#allocation5 + $0x220] sm:$0xff]
        %v643 = vld [vmem:[#allocation5 + $0x228] sm:$0xff]
        %v644 = vld [vmem:[#allocation5 + $0x230] sm:$0xff]
        %v645 = vld [vmem:[#allocation5 + $0x238] sm:$0xff]
        %v646 = vld [vmem:[#allocation5 + $0x240] sm:$0xff]
        %v647 = vld [vmem:[#allocation5 + $0x248] sm:$0xff]
        %v648 = vld [vmem:[#allocation5 + $0x250] sm:$0xff]
        %v649 = vld [vmem:[#allocation5 + $0x258] sm:$0xff]
        %v650 = vld [vmem:[#allocation5 + $0x260] sm:$0xff]
        %v651 = vld [vmem:[#allocation5 + $0x268] sm:$0xff]
        %v652 = vld [vmem:[#allocation5 + $0x270] sm:$0xff]
        %v653 = vld [vmem:[#allocation5 + $0x278] sm:$0xff]
        %v654 = vld [vmem:[#allocation5 + $0x280] sm:$0xff]
        %v655 = vld [vmem:[#allocation5 + $0x288] sm:$0xff]
        %v656 = vld [vmem:[#allocation5 + $0x290] sm:$0xff]
        %v657 = vld [vmem:[#allocation5 + $0x298] sm:$0xff]
        %v658 = vld [vmem:[#allocation5 + $0x2a0] sm:$0xff]
        %v659 = vld [vmem:[#allocation5 + $0x2a8] sm:$0xff]
        %v660 = vld [vmem:[#allocation5 + $0x2b0] sm:$0xff]
        %v661 = vld [vmem:[#allocation5 + $0x2b8] sm:$0xff]
        %v662 = vld [vmem:[#allocation5 + $0x2c0] sm:$0xff]
        %v663 = vld [vmem:[#allocation5 + $0x2c8] sm:$0xff]
        %v664 = vld [vmem:[#allocation5 + $0x2d0] sm:$0xff]
        %v665 = vld [vmem:[#allocation5 + $0x2d8] sm:$0xff]
        %v666 = vld [vmem:[#allocation5 + $0x2e0] sm:$0xff]
        %v667 = vld [vmem:[#allocation5 + $0x2e8] sm:$0xff]
        %v668 = vld [vmem:[#allocation5 + $0x2f0] sm:$0xff]
        %v669 = vld [vmem:[#allocation5 + $0x2f8] sm:$0xff]
        %v670 = vld [vmem:[#allocation5 + $0x300] sm:$0xff]
        %v671 = vld [vmem:[#allocation5 + $0x308] sm:$0xff]
        %v672 = vld [vmem:[#allocation5 + $0x310] sm:$0xff]
        %v673 = vld [vmem:[#allocation5 + $0x318] sm:$0xff]
        %v674 = vld [vmem:[#allocation5 + $0x320] sm:$0xff]
        %v675 = vld [vmem:[#allocation5 + $0x328] sm:$0xff]
        %v676 = vld [vmem:[#allocation5 + $0x330] sm:$0xff]
        %v677 = vld [vmem:[#allocation5 + $0x338] sm:$0xff]
        %v678 = vld [vmem:[#allocation5 + $0x340] sm:$0xff]
        %v679 = vld [vmem:[#allocation5 + $0x348] sm:$0xff]
        %v680 = vld [vmem:[#allocation5 + $0x350] sm:$0xff]
        %v681 = vld [vmem:[#allocation5 + $0x358] sm:$0xff]
        %v682 = vld [vmem:[#allocation5 + $0x360] sm:$0xff]
        %v683 = vld [vmem:[#allocation5 + $0x368] sm:$0xff]
        %v684 = vld [vmem:[#allocation5 + $0x370] sm:$0xff]
        %v685 = vld [vmem:[#allocation5 + $0x378] sm:$0xff]
        %v686 = vld [vmem:[#allocation7] sm:$0x1]
        %v688 = vlaneseq
        %v689 = vshrl.u32 %v688, 7
        %v690 = vsub.s32 0, %v689
        %v691 = vrot.slane %v686, %v690
        %693 = vmatprep.subr.mxu0 0.0
        %694 = vmatpush1.msra.mxu0 %v589
        %695 = vmatprep.subr.mxu0 0.0
        %696 = vmatpush1.msra.mxu0 %v588
        %697 = vmatprep.subr.mxu0 0.0
        %698 = vmatpush1.msra.mxu0 %v587
        %699 = vmatprep.subr.mxu0 0.0
        %700 = vmatpush1.msra.mxu0 %v586
        %701 = vmatprep.subr.mxu0 0.0
        %702 = vmatpush1.msra.mxu0 %v585
        %703 = vmatprep.subr.mxu0 0.0
        %704 = vmatpush1.msra.mxu0 %v584
        %705 = vmatprep.subr.mxu0 0.0
        %706 = vmatpush1.msra.mxu0 %v583
        %707 = vmatprep.subr.mxu0 0.0
        %708 = vmatpush1.msra.mxu0 %v582
        %709 = vmatprep.subr.mxu0 0.0
        %710 = vmatpush1.msra.mxu0 %v581
        %711 = vmatprep.subr.mxu0 0.0
        %712 = vmatpush1.msra.mxu0 %v580
        %713 = vmatprep.subr.mxu0 0.0
        %714 = vmatpush1.msra.mxu0 %v579
        %715 = vmatprep.subr.mxu0 0.0
        %716 = vmatpush1.msra.mxu0 %v578
        %717 = vmatprep.subr.mxu0 0.0
        %718 = vmatpush1.msra.mxu0 %v577
        %719 = vmatprep.subr.mxu0 0.0
        %720 = vmatpush1.msra.mxu0 %v576
        %721 = vmatprep.subr.mxu0 0.0
        %722 = vmatpush1.msra.mxu0 %v575
        %723 = vmatprep.subr.mxu0 0.0
        %724 = vmatpush1.msra.mxu0 %v574
        %725 = vmatprep.subr.mxu0 0.0
        %726 = vmatpush2.msra.mxu0 %v605
        %727 = vmatprep.subr.mxu0 0.0
        %728 = vmatpush2.msra.mxu0 %v604
        %729 = vmatprep.subr.mxu0 0.0
        %730 = vmatpush2.msra.mxu0 %v603
        %731 = vmatprep.subr.mxu0 0.0
        %732 = vmatpush2.msra.mxu0 %v602
        %733 = vmatprep.subr.mxu0 0.0
        %734 = vmatpush2.msra.mxu0 %v601
        %735 = vmatprep.subr.mxu0 0.0
        %736 = vmatpush2.msra.mxu0 %v600
        %737 = vmatprep.subr.mxu0 0.0
        %738 = vmatpush2.msra.mxu0 %v599
        %739 = vmatprep.subr.mxu0 0.0
        %740 = vmatpush2.msra.mxu0 %v598
        %741 = vmatprep.subr.mxu0 0.0
        %742 = vmatpush2.msra.mxu0 %v597
        %743 = vmatprep.subr.mxu0 0.0
        %744 = vmatpush2.msra.mxu0 %v596
        %745 = vmatprep.subr.mxu0 0.0
        %746 = vmatpush2.msra.mxu0 %v595
        %747 = vmatprep.subr.mxu0 0.0
        %748 = vmatpush2.msra.mxu0 %v594
        %749 = vmatprep.subr.mxu0 0.0
        %750 = vmatpush2.msra.mxu0 %v593
        %751 = vmatprep.subr.mxu0 0.0
        %752 = vmatpush2.msra.mxu0 %v592
        %753 = vmatprep.subr.mxu0 0.0
        %754 = vmatpush2.msra.mxu0 %v591
        %755 = vmatprep.subr.mxu0 0.0
        %756 = vmatpush2.msra.mxu0 %v590
        %757 = vmatprep.mubr.f32.mxu0 %v463
        %758 = vmatmul.mubr.f32.gmra.mxu0 %v462
        %v759 = vpop.f32.mrf.mxu0
        %v760 = vadd.f32 %v691, %v759
        %v761 = vpop.f32.mrf.mxu0
        %762 = vmatprep.mubr.f32.mxu0 %v470
        %763 = vmatmul.mubr.f32.gmra.mxu0 %v469
        %v764 = vpop.f32.mrf.mxu0
        %v765 = vadd.f32 %v691, %v764
        %v766 = vpop.f32.mrf.mxu0
        %767 = vmatprep.mubr.f32.mxu0 %v477
        %768 = vmatmul.mubr.f32.gmra.mxu0 %v476
        %v769 = vpop.f32.mrf.mxu0
        %v770 = vadd.f32 %v691, %v769
        %v771 = vpop.f32.mrf.mxu0
        %772 = vmatprep.mubr.f32.mxu0 %v484
        %773 = vmatmul.mubr.f32.gmra.mxu0 %v483
        %v774 = vpop.f32.mrf.mxu0
        %v775 = vadd.f32 %v691, %v774
        %v776 = vpop.f32.mrf.mxu0
        %777 = vmatprep.mubr.f32.mxu0 %v491
        %778 = vmatmul.mubr.f32.gmra.mxu0 %v490
        %v779 = vpop.f32.mrf.mxu0
        %v780 = vadd.f32 %v691, %v779
        %v781 = vpop.f32.mrf.mxu0
        %782 = vmatprep.mubr.f32.mxu0 %v498
        %783 = vmatmul.mubr.f32.gmra.mxu0 %v497
        %v784 = vpop.f32.mrf.mxu0
        %v785 = vadd.f32 %v691, %v784
        %v786 = vpop.f32.mrf.mxu0
        %787 = vmatprep.mubr.f32.mxu0 %v505
        %788 = vmatmul.mubr.f32.gmra.mxu0 %v504
        %v789 = vpop.f32.mrf.mxu0
        %v790 = vadd.f32 %v691, %v789
        %v791 = vpop.f32.mrf.mxu0
        %792 = vmatprep.mubr.f32.mxu0 %v512
        %793 = vmatmul.mubr.f32.gmra.mxu0 %v511
        %v794 = vpop.f32.mrf.mxu0
        %v795 = vadd.f32 %v691, %v794
        %v796 = vpop.f32.mrf.mxu0
        %797 = vmatprep.mubr.f32.mxu0 %v519
        %798 = vmatmul.mubr.f32.gmra.mxu0 %v518
        %v799 = vpop.f32.mrf.mxu0
        %v800 = vadd.f32 %v691, %v799
        %v801 = vpop.f32.mrf.mxu0
        %802 = vmatprep.mubr.f32.mxu0 %v526
        %803 = vmatmul.mubr.f32.gmra.mxu0 %v525
        %v804 = vpop.f32.mrf.mxu0
        %v805 = vadd.f32 %v691, %v804
        %v806 = vpop.f32.mrf.mxu0
        %807 = vmatprep.mubr.f32.mxu0 %v533
        %808 = vmatmul.mubr.f32.gmra.mxu0 %v532
        %v809 = vpop.f32.mrf.mxu0
        %v810 = vadd.f32 %v691, %v809
        %v811 = vpop.f32.mrf.mxu0
        %812 = vmatprep.mubr.f32.mxu0 %v540
        %813 = vmatmul.mubr.f32.gmra.mxu0 %v539
        %v814 = vpop.f32.mrf.mxu0
        %v815 = vadd.f32 %v691, %v814
        %v816 = vpop.f32.mrf.mxu0
        %817 = vmatprep.mubr.f32.mxu0 %v547
        %818 = vmatmul.mubr.f32.gmra.mxu0 %v546
        %v819 = vpop.f32.mrf.mxu0
        %v820 = vadd.f32 %v691, %v819
        %v821 = vpop.f32.mrf.mxu0
        %822 = vmatprep.mubr.f32.mxu0 %v554
        %823 = vmatmul.mubr.f32.gmra.mxu0 %v553
        %v824 = vpop.f32.mrf.mxu0
        %v825 = vadd.f32 %v691, %v824
        %v826 = vpop.f32.mrf.mxu0
        %827 = vmatprep.mubr.f32.mxu0 %v561
        %828 = vmatmul.mubr.f32.gmra.mxu0 %v560
        %v829 = vpop.f32.mrf.mxu0
        %v830 = vadd.f32 %v691, %v829
        %v831 = vpop.f32.mrf.mxu0
        %832 = vmatprep.mubr.f32.mxu0 %v568
        %833 = vmatmul.mubr.f32.gmra.mxu0 %v567
        %v834 = vpop.f32.mrf.mxu0
        %v835 = vadd.f32 %v691, %v834
        %v836 = vpop.f32.mrf.mxu0
        %837 = vdwg.mxu0
        %838 = vmatprep.subr.mxu0 0.0
        %839 = vmatpush1.msra.mxu0 %v621
        %840 = vmatprep.subr.mxu0 0.0
        %841 = vmatpush1.msra.mxu0 %v620
        %842 = vmatprep.subr.mxu0 0.0
        %843 = vmatpush1.msra.mxu0 %v619
        %844 = vmatprep.subr.mxu0 0.0
        %845 = vmatpush1.msra.mxu0 %v618
        %846 = vmatprep.subr.mxu0 0.0
        %847 = vmatpush1.msra.mxu0 %v617
        %848 = vmatprep.subr.mxu0 0.0
        %849 = vmatpush1.msra.mxu0 %v616
        %850 = vmatprep.subr.mxu0 0.0
        %851 = vmatpush1.msra.mxu0 %v615
        %852 = vmatprep.subr.mxu0 0.0
        %853 = vmatpush1.msra.mxu0 %v614
        %854 = vmatprep.subr.mxu0 0.0
        %855 = vmatpush1.msra.mxu0 %v613
        %856 = vmatprep.subr.mxu0 0.0
        %857 = vmatpush1.msra.mxu0 %v612
        %858 = vmatprep.subr.mxu0 0.0
        %859 = vmatpush1.msra.mxu0 %v611
        %860 = vmatprep.subr.mxu0 0.0
        %861 = vmatpush1.msra.mxu0 %v610
        %862 = vmatprep.subr.mxu0 0.0
        %863 = vmatpush1.msra.mxu0 %v609
        %864 = vmatprep.subr.mxu0 0.0
        %865 = vmatpush1.msra.mxu0 %v608
        %866 = vmatprep.subr.mxu0 0.0
        %867 = vmatpush1.msra.mxu0 %v607
        %868 = vmatprep.subr.mxu0 0.0
        %869 = vmatpush1.msra.mxu0 %v606
        %870 = vmatprep.subr.mxu0 0.0
        %871 = vmatpush2.msra.mxu0 %v637
        %872 = vmatprep.subr.mxu0 0.0
        %873 = vmatpush2.msra.mxu0 %v636
        %874 = vmatprep.subr.mxu0 0.0
        %875 = vmatpush2.msra.mxu0 %v635
        %876 = vmatprep.subr.mxu0 0.0
        %877 = vmatpush2.msra.mxu0 %v634
        %878 = vmatprep.subr.mxu0 0.0
        %879 = vmatpush2.msra.mxu0 %v633
        %880 = vmatprep.subr.mxu0 0.0
        %881 = vmatpush2.msra.mxu0 %v632
        %882 = vmatprep.subr.mxu0 0.0
        %883 = vmatpush2.msra.mxu0 %v631
        %884 = vmatprep.subr.mxu0 0.0
        %885 = vmatpush2.msra.mxu0 %v630
        %886 = vmatprep.subr.mxu0 0.0
        %887 = vmatpush2.msra.mxu0 %v629
        %888 = vmatprep.subr.mxu0 0.0
        %889 = vmatpush2.msra.mxu0 %v628
        %890 = vmatprep.subr.mxu0 0.0
        %891 = vmatpush2.msra.mxu0 %v627
        %892 = vmatprep.subr.mxu0 0.0
        %893 = vmatpush2.msra.mxu0 %v626
        %894 = vmatprep.subr.mxu0 0.0
        %895 = vmatpush2.msra.mxu0 %v625
        %896 = vmatprep.subr.mxu0 0.0
        %897 = vmatpush2.msra.mxu0 %v624
        %898 = vmatprep.subr.mxu0 0.0
        %899 = vmatpush2.msra.mxu0 %v623
        %900 = vmatprep.subr.mxu0 0.0
        %901 = vmatpush2.msra.mxu0 %v622
        %902 = vmatprep.mubr.f32.mxu0 %v465
        %903 = vmatmul.mubr.f32.gmra.mxu0 %v464
        %v904 = vpop.f32.mrf.mxu0
        %v905 = vadd.f32 %v760, %v904
        %v906 = vpop.f32.mrf.mxu0
        %907 = vmatprep.mubr.f32.mxu0 %v472
        %908 = vmatmul.mubr.f32.gmra.mxu0 %v471
        %v909 = vpop.f32.mrf.mxu0
        %v910 = vadd.f32 %v765, %v909
        %v911 = vpop.f32.mrf.mxu0
        %912 = vmatprep.mubr.f32.mxu0 %v479
        %913 = vmatmul.mubr.f32.gmra.mxu0 %v478
        %v914 = vpop.f32.mrf.mxu0
        %v915 = vadd.f32 %v770, %v914
        %v916 = vpop.f32.mrf.mxu0
        %917 = vmatprep.mubr.f32.mxu0 %v486
        %918 = vmatmul.mubr.f32.gmra.mxu0 %v485
        %v919 = vpop.f32.mrf.mxu0
        %v920 = vadd.f32 %v775, %v919
        %v921 = vpop.f32.mrf.mxu0
        %922 = vmatprep.mubr.f32.mxu0 %v493
        %923 = vmatmul.mubr.f32.gmra.mxu0 %v492
        %v924 = vpop.f32.mrf.mxu0
        %v925 = vadd.f32 %v780, %v924
        %v926 = vpop.f32.mrf.mxu0
        %927 = vmatprep.mubr.f32.mxu0 %v500
        %928 = vmatmul.mubr.f32.gmra.mxu0 %v499
        %v929 = vpop.f32.mrf.mxu0
        %v930 = vadd.f32 %v785, %v929
        %v931 = vpop.f32.mrf.mxu0
        %932 = vmatprep.mubr.f32.mxu0 %v507
        %933 = vmatmul.mubr.f32.gmra.mxu0 %v506
        %v934 = vpop.f32.mrf.mxu0
        %v935 = vadd.f32 %v790, %v934
        %v936 = vpop.f32.mrf.mxu0
        %937 = vmatprep.mubr.f32.mxu0 %v514
        %938 = vmatmul.mubr.f32.gmra.mxu0 %v513
        %v939 = vpop.f32.mrf.mxu0
        %v940 = vadd.f32 %v795, %v939
        %v941 = vpop.f32.mrf.mxu0
        %942 = vmatprep.mubr.f32.mxu0 %v521
        %943 = vmatmul.mubr.f32.gmra.mxu0 %v520
        %v944 = vpop.f32.mrf.mxu0
        %v945 = vadd.f32 %v800, %v944
        %v946 = vpop.f32.mrf.mxu0
        %947 = vmatprep.mubr.f32.mxu0 %v528
        %948 = vmatmul.mubr.f32.gmra.mxu0 %v527
        %v949 = vpop.f32.mrf.mxu0
        %v950 = vadd.f32 %v805, %v949
        %v951 = vpop.f32.mrf.mxu0
        %952 = vmatprep.mubr.f32.mxu0 %v535
        %953 = vmatmul.mubr.f32.gmra.mxu0 %v534
        %v954 = vpop.f32.mrf.mxu0
        %v955 = vadd.f32 %v810, %v954
        %v956 = vpop.f32.mrf.mxu0
        %957 = vmatprep.mubr.f32.mxu0 %v542
        %958 = vmatmul.mubr.f32.gmra.mxu0 %v541
        %v959 = vpop.f32.mrf.mxu0
        %v960 = vadd.f32 %v815, %v959
        %v961 = vpop.f32.mrf.mxu0
        %962 = vmatprep.mubr.f32.mxu0 %v549
        %963 = vmatmul.mubr.f32.gmra.mxu0 %v548
        %v964 = vpop.f32.mrf.mxu0
        %v965 = vadd.f32 %v820, %v964
        %v966 = vpop.f32.mrf.mxu0
        %967 = vmatprep.mubr.f32.mxu0 %v556
        %968 = vmatmul.mubr.f32.gmra.mxu0 %v555
        %v969 = vpop.f32.mrf.mxu0
        %v970 = vadd.f32 %v825, %v969
        %v971 = vpop.f32.mrf.mxu0
        %972 = vmatprep.mubr.f32.mxu0 %v563
        %973 = vmatmul.mubr.f32.gmra.mxu0 %v562
        %v974 = vpop.f32.mrf.mxu0
        %v975 = vadd.f32 %v830, %v974
        %v976 = vpop.f32.mrf.mxu0
        %977 = vmatprep.mubr.f32.mxu0 %v570
        %978 = vmatmul.mubr.f32.gmra.mxu0 %v569
        %v979 = vpop.f32.mrf.mxu0
        %v980 = vadd.f32 %v835, %v979
        %v981 = vpop.f32.mrf.mxu0
        %982 = vdwg.mxu0
        %983 = vmatprep.subr.mxu0 0.0
        %984 = vmatpush1.msra.mxu0 %v653
        %985 = vmatprep.subr.mxu0 0.0
        %986 = vmatpush1.msra.mxu0 %v652
        %987 = vmatprep.subr.mxu0 0.0
        %988 = vmatpush1.msra.mxu0 %v651
        %989 = vmatprep.subr.mxu0 0.0
        %990 = vmatpush1.msra.mxu0 %v650
        %991 = vmatprep.subr.mxu0 0.0
        %992 = vmatpush1.msra.mxu0 %v649
        %993 = vmatprep.subr.mxu0 0.0
        %994 = vmatpush1.msra.mxu0 %v648
        %995 = vmatprep.subr.mxu0 0.0
        %996 = vmatpush1.msra.mxu0 %v647
        %997 = vmatprep.subr.mxu0 0.0
        %998 = vmatpush1.msra.mxu0 %v646
        %999 = vmatprep.subr.mxu0 0.0
        %1000 = vmatpush1.msra.mxu0 %v645
        %1001 = vmatprep.subr.mxu0 0.0
        %1002 = vmatpush1.msra.mxu0 %v644
        %1003 = vmatprep.subr.mxu0 0.0
        %1004 = vmatpush1.msra.mxu0 %v643
        %1005 = vmatprep.subr.mxu0 0.0
        %1006 = vmatpush1.msra.mxu0 %v642
        %1007 = vmatprep.subr.mxu0 0.0
        %1008 = vmatpush1.msra.mxu0 %v641
        %1009 = vmatprep.subr.mxu0 0.0
        %1010 = vmatpush1.msra.mxu0 %v640
        %1011 = vmatprep.subr.mxu0 0.0
        %1012 = vmatpush1.msra.mxu0 %v639
        %1013 = vmatprep.subr.mxu0 0.0
        %1014 = vmatpush1.msra.mxu0 %v638
        %1015 = vmatprep.subr.mxu0 0.0
        %1016 = vmatpush2.msra.mxu0 %v669
        %1017 = vmatprep.subr.mxu0 0.0
        %1018 = vmatpush2.msra.mxu0 %v668
        %1019 = vmatprep.subr.mxu0 0.0
        %1020 = vmatpush2.msra.mxu0 %v667
        %1021 = vmatprep.subr.mxu0 0.0
        %1022 = vmatpush2.msra.mxu0 %v666
        %1023 = vmatprep.subr.mxu0 0.0
        %1024 = vmatpush2.msra.mxu0 %v665
        %1025 = vmatprep.subr.mxu0 0.0
        %1026 = vmatpush2.msra.mxu0 %v664
        %1027 = vmatprep.subr.mxu0 0.0
        %1028 = vmatpush2.msra.mxu0 %v663
        %1029 = vmatprep.subr.mxu0 0.0
        %1030 = vmatpush2.msra.mxu0 %v662
        %1031 = vmatprep.subr.mxu0 0.0
        %1032 = vmatpush2.msra.mxu0 %v661
        %1033 = vmatprep.subr.mxu0 0.0
        %1034 = vmatpush2.msra.mxu0 %v660
        %1035 = vmatprep.subr.mxu0 0.0
        %1036 = vmatpush2.msra.mxu0 %v659
        %1037 = vmatprep.subr.mxu0 0.0
        %1038 = vmatpush2.msra.mxu0 %v658
        %1039 = vmatprep.subr.mxu0 0.0
        %1040 = vmatpush2.msra.mxu0 %v657
        %1041 = vmatprep.subr.mxu0 0.0
        %1042 = vmatpush2.msra.mxu0 %v656
        %1043 = vmatprep.subr.mxu0 0.0
        %1044 = vmatpush2.msra.mxu0 %v655
        %1045 = vmatprep.subr.mxu0 0.0
        %1046 = vmatpush2.msra.mxu0 %v654
        %1047 = vmatprep.mubr.f32.mxu0 %v467
        %1048 = vmatmul.mubr.f32.gmra.mxu0 %v466
        %v1049 = vpop.f32.mrf.mxu0
        %v1050 = vadd.f32 %v905, %v1049
        %v1051 = vpop.f32.mrf.mxu0
        %1052 = vmatprep.mubr.f32.mxu0 %v474
        %1053 = vmatmul.mubr.f32.gmra.mxu0 %v473
        %v1054 = vpop.f32.mrf.mxu0
        %v1055 = vadd.f32 %v910, %v1054
        %v1056 = vpop.f32.mrf.mxu0
        %1057 = vmatprep.mubr.f32.mxu0 %v481
        %1058 = vmatmul.mubr.f32.gmra.mxu0 %v480
        %v1059 = vpop.f32.mrf.mxu0
        %v1060 = vadd.f32 %v915, %v1059
        %v1061 = vpop.f32.mrf.mxu0
        %1062 = vmatprep.mubr.f32.mxu0 %v488
        %1063 = vmatmul.mubr.f32.gmra.mxu0 %v487
        %v1064 = vpop.f32.mrf.mxu0
        %v1065 = vadd.f32 %v920, %v1064
        %v1066 = vpop.f32.mrf.mxu0
        %1067 = vmatprep.mubr.f32.mxu0 %v495
        %1068 = vmatmul.mubr.f32.gmra.mxu0 %v494
        %v1069 = vpop.f32.mrf.mxu0
        %v1070 = vadd.f32 %v925, %v1069
        %v1071 = vpop.f32.mrf.mxu0
        %1072 = vmatprep.mubr.f32.mxu0 %v502
        %1073 = vmatmul.mubr.f32.gmra.mxu0 %v501
        %v1074 = vpop.f32.mrf.mxu0
        %v1075 = vadd.f32 %v930, %v1074
        %v1076 = vpop.f32.mrf.mxu0
        %1077 = vmatprep.mubr.f32.mxu0 %v509
        %1078 = vmatmul.mubr.f32.gmra.mxu0 %v508
        %v1079 = vpop.f32.mrf.mxu0
        %v1080 = vadd.f32 %v935, %v1079
        %v1081 = vpop.f32.mrf.mxu0
        %1082 = vmatprep.mubr.f32.mxu0 %v516
        %1083 = vmatmul.mubr.f32.gmra.mxu0 %v515
        %v1084 = vpop.f32.mrf.mxu0
        %v1085 = vadd.f32 %v940, %v1084
        %v1086 = vpop.f32.mrf.mxu0
        %1087 = vmatprep.mubr.f32.mxu0 %v523
        %1088 = vmatmul.mubr.f32.gmra.mxu0 %v522
        %v1089 = vpop.f32.mrf.mxu0
        %v1090 = vadd.f32 %v945, %v1089
        %v1091 = vpop.f32.mrf.mxu0
        %1092 = vmatprep.mubr.f32.mxu0 %v530
        %1093 = vmatmul.mubr.f32.gmra.mxu0 %v529
        %v1094 = vpop.f32.mrf.mxu0
        %v1095 = vadd.f32 %v950, %v1094
        %v1096 = vpop.f32.mrf.mxu0
        %1097 = vmatprep.mubr.f32.mxu0 %v537
        %1098 = vmatmul.mubr.f32.gmra.mxu0 %v536
        %v1099 = vpop.f32.mrf.mxu0
        %v1100 = vadd.f32 %v955, %v1099
        %v1101 = vpop.f32.mrf.mxu0
        %1102 = vmatprep.mubr.f32.mxu0 %v544
        %1103 = vmatmul.mubr.f32.gmra.mxu0 %v543
        %v1104 = vpop.f32.mrf.mxu0
        %v1105 = vadd.f32 %v960, %v1104
        %v1106 = vpop.f32.mrf.mxu0
        %1107 = vmatprep.mubr.f32.mxu0 %v551
        %1108 = vmatmul.mubr.f32.gmra.mxu0 %v550
        %v1109 = vpop.f32.mrf.mxu0
        %v1110 = vadd.f32 %v965, %v1109
        %v1111 = vpop.f32.mrf.mxu0
        %1112 = vmatprep.mubr.f32.mxu0 %v558
        %1113 = vmatmul.mubr.f32.gmra.mxu0 %v557
        %v1114 = vpop.f32.mrf.mxu0
        %v1115 = vadd.f32 %v970, %v1114
        %v1116 = vpop.f32.mrf.mxu0
        %1117 = vmatprep.mubr.f32.mxu0 %v565
        %1118 = vmatmul.mubr.f32.gmra.mxu0 %v564
        %v1119 = vpop.f32.mrf.mxu0
        %v1120 = vadd.f32 %v975, %v1119
        %v1121 = vpop.f32.mrf.mxu0
        %1122 = vmatprep.mubr.f32.mxu0 %v572
        %1123 = vmatmul.mubr.f32.gmra.mxu0 %v571
        %v1124 = vpop.f32.mrf.mxu0
        %v1125 = vadd.f32 %v980, %v1124
        %v1126 = vpop.f32.mrf.mxu0
        %1127 = vdwg.mxu0
        %1128 = vmatprep.subr.mxu0 0.0
        %1129 = vmatpush1.msra.mxu0 %v685
        %1130 = vmatprep.subr.mxu0 0.0
        %1131 = vmatpush1.msra.mxu0 %v684
        %1132 = vmatprep.subr.mxu0 0.0
        %1133 = vmatpush1.msra.mxu0 %v683
        %1134 = vmatprep.subr.mxu0 0.0
        %1135 = vmatpush1.msra.mxu0 %v682
        %1136 = vmatprep.subr.mxu0 0.0
        %1137 = vmatpush1.msra.mxu0 %v681
        %1138 = vmatprep.subr.mxu0 0.0
        %1139 = vmatpush1.msra.mxu0 %v680
        %1140 = vmatprep.subr.mxu0 0.0
        %1141 = vmatpush1.msra.mxu0 %v679
        %1142 = vmatprep.subr.mxu0 0.0
        %1143 = vmatpush1.msra.mxu0 %v678
        %1144 = vmatprep.subr.mxu0 0.0
        %1145 = vmatpush1.msra.mxu0 %v677
        %1146 = vmatprep.subr.mxu0 0.0
        %1147 = vmatpush1.msra.mxu0 %v676
        %1148 = vmatprep.subr.mxu0 0.0
        %1149 = vmatpush1.msra.mxu0 %v675
        %1150 = vmatprep.subr.mxu0 0.0
        %1151 = vmatpush1.msra.mxu0 %v674
        %1152 = vmatprep.subr.mxu0 0.0
        %1153 = vmatpush1.msra.mxu0 %v673
        %1154 = vmatprep.subr.mxu0 0.0
        %1155 = vmatpush1.msra.mxu0 %v672
        %1156 = vmatprep.subr.mxu0 0.0
        %1157 = vmatpush1.msra.mxu0 %v671
        %1158 = vmatprep.subr.mxu0 0.0
        %1159 = vmatpush1.msra.mxu0 %v670
        %1160 = vmatprep.subr.mxu0 0.0
        %1161 = vmatpush2.msra.mxu0 0.0
        %1162 = vmatprep.subr.mxu0 0.0
        %1163 = vmatpush2.msra.mxu0 0.0
        %1164 = vmatprep.subr.mxu0 0.0
        %1165 = vmatpush2.msra.mxu0 0.0
        %1166 = vmatprep.subr.mxu0 0.0
        %1167 = vmatpush2.msra.mxu0 0.0
        %1168 = vmatprep.subr.mxu0 0.0
        %1169 = vmatpush2.msra.mxu0 0.0
        %1170 = vmatprep.subr.mxu0 0.0
        %1171 = vmatpush2.msra.mxu0 0.0
        %1172 = vmatprep.subr.mxu0 0.0
        %1173 = vmatpush2.msra.mxu0 0.0
        %1174 = vmatprep.subr.mxu0 0.0
        %1175 = vmatpush2.msra.mxu0 0.0
        %1176 = vmatprep.subr.mxu0 0.0
        %1177 = vmatpush2.msra.mxu0 0.0
        %1178 = vmatprep.subr.mxu0 0.0
        %1179 = vmatpush2.msra.mxu0 0.0
        %1180 = vmatprep.subr.mxu0 0.0
        %1181 = vmatpush2.msra.mxu0 0.0
        %1182 = vmatprep.subr.mxu0 0.0
        %1183 = vmatpush2.msra.mxu0 0.0
        %1184 = vmatprep.subr.mxu0 0.0
        %1185 = vmatpush2.msra.mxu0 0.0
        %1186 = vmatprep.subr.mxu0 0.0
        %1187 = vmatpush2.msra.mxu0 0.0
        %1188 = vmatprep.subr.mxu0 0.0
        %1189 = vmatpush2.msra.mxu0 0.0
        %1190 = vmatprep.subr.mxu0 0.0
        %1191 = vmatpush2.msra.mxu0 0.0
        %1192 = vmatprep.mubr.f32.mxu0 0.0
        %1193 = vmatmul.mubr.f32.gmra.mxu0 %v468
        %v1194 = vpop.f32.mrf.mxu0
        %v1195 = vadd.f32 %v1050, %v1194
        %v1196 = vpop.f32.mrf.mxu0
        %1197 = vmatprep.mubr.f32.mxu0 0.0
        %1198 = vmatmul.mubr.f32.gmra.mxu0 %v475
        %v1199 = vpop.f32.mrf.mxu0
        %v1200 = vadd.f32 %v1055, %v1199
        %v1201 = vpop.f32.mrf.mxu0
        %1202 = vmatprep.mubr.f32.mxu0 0.0
        %1203 = vmatmul.mubr.f32.gmra.mxu0 %v482
        %v1204 = vpop.f32.mrf.mxu0
        %v1205 = vadd.f32 %v1060, %v1204
        %v1206 = vpop.f32.mrf.mxu0
        %1207 = vmatprep.mubr.f32.mxu0 0.0
        %1208 = vmatmul.mubr.f32.gmra.mxu0 %v489
        %v1209 = vpop.f32.mrf.mxu0
        %v1210 = vadd.f32 %v1065, %v1209
        %v1211 = vpop.f32.mrf.mxu0
        %1212 = vmatprep.mubr.f32.mxu0 0.0
        %1213 = vmatmul.mubr.f32.gmra.mxu0 %v496
        %v1214 = vpop.f32.mrf.mxu0
        %v1215 = vadd.f32 %v1070, %v1214
        %v1216 = vpop.f32.mrf.mxu0
        %1217 = vmatprep.mubr.f32.mxu0 0.0
        %1218 = vmatmul.mubr.f32.gmra.mxu0 %v503
        %v1219 = vpop.f32.mrf.mxu0
        %v1220 = vadd.f32 %v1075, %v1219
        %v1221 = vpop.f32.mrf.mxu0
        %1222 = vmatprep.mubr.f32.mxu0 0.0
        %1223 = vmatmul.mubr.f32.gmra.mxu0 %v510
        %v1224 = vpop.f32.mrf.mxu0
        %v1225 = vadd.f32 %v1080, %v1224
        %v1226 = vpop.f32.mrf.mxu0
        %1227 = vmatprep.mubr.f32.mxu0 0.0
        %1228 = vmatmul.mubr.f32.gmra.mxu0 %v517
        %v1229 = vpop.f32.mrf.mxu0
        %v1230 = vadd.f32 %v1085, %v1229
        %v1231 = vpop.f32.mrf.mxu0
        %1232 = vmatprep.mubr.f32.mxu0 0.0
        %1233 = vmatmul.mubr.f32.gmra.mxu0 %v524
        %v1234 = vpop.f32.mrf.mxu0
        %v1235 = vadd.f32 %v1090, %v1234
        %v1236 = vpop.f32.mrf.mxu0
        %1237 = vmatprep.mubr.f32.mxu0 0.0
        %1238 = vmatmul.mubr.f32.gmra.mxu0 %v531
        %v1239 = vpop.f32.mrf.mxu0
        %v1240 = vadd.f32 %v1095, %v1239
        %v1241 = vpop.f32.mrf.mxu0
        %1242 = vmatprep.mubr.f32.mxu0 0.0
        %1243 = vmatmul.mubr.f32.gmra.mxu0 %v538
        %v1244 = vpop.f32.mrf.mxu0
        %v1245 = vadd.f32 %v1100, %v1244
        %v1246 = vpop.f32.mrf.mxu0
        %1247 = vmatprep.mubr.f32.mxu0 0.0
        %1248 = vmatmul.mubr.f32.gmra.mxu0 %v545
        %v1249 = vpop.f32.mrf.mxu0
        %v1250 = vadd.f32 %v1105, %v1249
        %v1251 = vpop.f32.mrf.mxu0
        %1252 = vmatprep.mubr.f32.mxu0 0.0
        %1253 = vmatmul.mubr.f32.gmra.mxu0 %v552
        %v1254 = vpop.f32.mrf.mxu0
        %v1255 = vadd.f32 %v1110, %v1254
        %v1256 = vpop.f32.mrf.mxu0
        %1257 = vmatprep.mubr.f32.mxu0 0.0
        %1258 = vmatmul.mubr.f32.gmra.mxu0 %v559
        %v1259 = vpop.f32.mrf.mxu0
        %v1260 = vadd.f32 %v1115, %v1259
        %v1261 = vpop.f32.mrf.mxu0
        %1262 = vmatprep.mubr.f32.mxu0 0.0
        %1263 = vmatmul.mubr.f32.gmra.mxu0 %v566
        %v1264 = vpop.f32.mrf.mxu0
        %v1265 = vadd.f32 %v1120, %v1264
        %v1266 = vpop.f32.mrf.mxu0
        %1267 = vmatprep.mubr.f32.mxu0 0.0
        %1268 = vmatmul.mubr.f32.gmra.mxu0 %v573
        %v1269 = vpop.f32.mrf.mxu0
        %v1270 = vadd.f32 %v1125, %v1269
        %v1271 = vpop.f32.mrf.mxu0
        %1272 = vdwg.mxu0
        %v1273 = vmax.f32 %v1195, 0.0
        %v1274 = vmax.f32 %v1200, 0.0
        %v1275 = vmax.f32 %v1205, 0.0
        %v1276 = vmax.f32 %v1210, 0.0
        %v1277 = vmax.f32 %v1215, 0.0
        %v1278 = vmax.f32 %v1220, 0.0
        %v1279 = vmax.f32 %v1225, 0.0
        %v1280 = vmax.f32 %v1230, 0.0
        %v1281 = vmax.f32 %v1235, 0.0
        %v1282 = vmax.f32 %v1240, 0.0
        %v1283 = vmax.f32 %v1245, 0.0
        %v1284 = vmax.f32 %v1250, 0.0
        %v1285 = vmax.f32 %v1255, 0.0
        %v1286 = vmax.f32 %v1260, 0.0
        %v1287 = vmax.f32 %v1265, 0.0
        %v1288 = vmax.f32 %v1270, 0.0
        %v1289 = vld [vmem:[#allocation8] sm:$0xff]
        %v1290 = vld [vmem:[#allocation8 + $0x8] sm:$0xff]
        %v1291 = vld [vmem:[#allocation8 + $0x10] sm:$0xff]
        %v1292 = vld [vmem:[#allocation8 + $0x18] sm:$0xff]
        %v1293 = vld [vmem:[#allocation8 + $0x20] sm:$0xff]
        %v1294 = vld [vmem:[#allocation8 + $0x28] sm:$0xff]
        %v1295 = vld [vmem:[#allocation8 + $0x30] sm:$0xff]
        %v1296 = vld [vmem:[#allocation8 + $0x38] sm:$0xff]
        %v1297 = vld [vmem:[#allocation8 + $0x40] sm:$0xff]
        %v1298 = vld [vmem:[#allocation8 + $0x48] sm:$0xff]
        %v1299 = vld [vmem:[#allocation8 + $0x50] sm:$0xff]
        %v1300 = vld [vmem:[#allocation8 + $0x58] sm:$0xff]
        %v1301 = vld [vmem:[#allocation8 + $0x60] sm:$0xff]
        %v1302 = vld [vmem:[#allocation8 + $0x68] sm:$0xff]
        %v1303 = vld [vmem:[#allocation8 + $0x70] sm:$0xff]
        %v1304 = vld [vmem:[#allocation8 + $0x78] sm:$0xff]
        %v1305 = vld [vmem:[#allocation10] sm:$0x1]
        %v1307 = vlaneseq
        %v1308 = vshrl.u32 %v1307, 7
        %v1309 = vsub.s32 0, %v1308
        %v1310 = vrot.slane %v1305, %v1309
        %1312 = vmatprep.subr.mxu0 0.0
        %1313 = vmatpush1.msra.mxu0 %v1304
        %1314 = vmatprep.subr.mxu0 0.0
        %1315 = vmatpush1.msra.mxu0 %v1303
        %1316 = vmatprep.subr.mxu0 0.0
        %1317 = vmatpush1.msra.mxu0 %v1302
        %1318 = vmatprep.subr.mxu0 0.0
        %1319 = vmatpush1.msra.mxu0 %v1301
        %1320 = vmatprep.subr.mxu0 0.0
        %1321 = vmatpush1.msra.mxu0 %v1300
        %1322 = vmatprep.subr.mxu0 0.0
        %1323 = vmatpush1.msra.mxu0 %v1299
        %1324 = vmatprep.subr.mxu0 0.0
        %1325 = vmatpush1.msra.mxu0 %v1298
        %1326 = vmatprep.subr.mxu0 0.0
        %1327 = vmatpush1.msra.mxu0 %v1297
        %1328 = vmatprep.subr.mxu0 0.0
        %1329 = vmatpush1.msra.mxu0 %v1296
        %1330 = vmatprep.subr.mxu0 0.0
        %1331 = vmatpush1.msra.mxu0 %v1295
        %1332 = vmatprep.subr.mxu0 0.0
        %1333 = vmatpush1.msra.mxu0 %v1294
        %1334 = vmatprep.subr.mxu0 0.0
        %1335 = vmatpush1.msra.mxu0 %v1293
        %1336 = vmatprep.subr.mxu0 0.0
        %1337 = vmatpush1.msra.mxu0 %v1292
        %1338 = vmatprep.subr.mxu0 0.0
        %1339 = vmatpush1.msra.mxu0 %v1291
        %1340 = vmatprep.subr.mxu0 0.0
        %1341 = vmatpush1.msra.mxu0 %v1290
        %1342 = vmatprep.subr.mxu0 0.0
        %1343 = vmatpush1.msra.mxu0 %v1289
        %1344 = vmatprep.subr.mxu0 0.0
        %1345 = vmatpush2.msra.mxu0 0.0
        %1346 = vmatprep.subr.mxu0 0.0
        %1347 = vmatpush2.msra.mxu0 0.0
        %1348 = vmatprep.subr.mxu0 0.0
        %1349 = vmatpush2.msra.mxu0 0.0
        %1350 = vmatprep.subr.mxu0 0.0
        %1351 = vmatpush2.msra.mxu0 0.0
        %1352 = vmatprep.subr.mxu0 0.0
        %1353 = vmatpush2.msra.mxu0 0.0
        %1354 = vmatprep.subr.mxu0 0.0
        %1355 = vmatpush2.msra.mxu0 0.0
        %1356 = vmatprep.subr.mxu0 0.0
        %1357 = vmatpush2.msra.mxu0 0.0
        %1358 = vmatprep.subr.mxu0 0.0
        %1359 = vmatpush2.msra.mxu0 0.0
        %1360 = vmatprep.subr.mxu0 0.0
        %1361 = vmatpush2.msra.mxu0 0.0
        %1362 = vmatprep.subr.mxu0 0.0
        %1363 = vmatpush2.msra.mxu0 0.0
        %1364 = vmatprep.subr.mxu0 0.0
        %1365 = vmatpush2.msra.mxu0 0.0
        %1366 = vmatprep.subr.mxu0 0.0
        %1367 = vmatpush2.msra.mxu0 0.0
        %1368 = vmatprep.subr.mxu0 0.0
        %1369 = vmatpush2.msra.mxu0 0.0
        %1370 = vmatprep.subr.mxu0 0.0
        %1371 = vmatpush2.msra.mxu0 0.0
        %1372 = vmatprep.subr.mxu0 0.0
        %1373 = vmatpush2.msra.mxu0 0.0
        %1374 = vmatprep.subr.mxu0 0.0
        %1375 = vmatpush2.msra.mxu0 0.0
        %1376 = vmatprep.mubr.f32.mxu0 0.0
        %1377 = vmatmul.mubr.f32.gmra.mxu0 %v1273
        %v1378 = vpop.f32.mrf.mxu0
        %v1379 = vadd.f32 %v1310, %v1378
        %v1380 = vpop.f32.mrf.mxu0
        %1381 = vmatprep.mubr.f32.mxu0 0.0
        %1382 = vmatmul.mubr.f32.gmra.mxu0 %v1274
        %v1383 = vpop.f32.mrf.mxu0
        %v1384 = vadd.f32 %v1310, %v1383
        %v1385 = vpop.f32.mrf.mxu0
        %1386 = vmatprep.mubr.f32.mxu0 0.0
        %1387 = vmatmul.mubr.f32.gmra.mxu0 %v1275
        %v1388 = vpop.f32.mrf.mxu0
        %v1389 = vadd.f32 %v1310, %v1388
        %v1390 = vpop.f32.mrf.mxu0
        %1391 = vmatprep.mubr.f32.mxu0 0.0
        %1392 = vmatmul.mubr.f32.gmra.mxu0 %v1276
        %v1393 = vpop.f32.mrf.mxu0
        %v1394 = vadd.f32 %v1310, %v1393
        %v1395 = vpop.f32.mrf.mxu0
        %1396 = vmatprep.mubr.f32.mxu0 0.0
        %1397 = vmatmul.mubr.f32.gmra.mxu0 %v1277
        %v1398 = vpop.f32.mrf.mxu0
        %v1399 = vadd.f32 %v1310, %v1398
        %v1400 = vpop.f32.mrf.mxu0
        %1401 = vmatprep.mubr.f32.mxu0 0.0
        %1402 = vmatmul.mubr.f32.gmra.mxu0 %v1278
        %v1403 = vpop.f32.mrf.mxu0
        %v1404 = vadd.f32 %v1310, %v1403
        %v1405 = vpop.f32.mrf.mxu0
        %1406 = vmatprep.mubr.f32.mxu0 0.0
        %1407 = vmatmul.mubr.f32.gmra.mxu0 %v1279
        %v1408 = vpop.f32.mrf.mxu0
        %v1409 = vadd.f32 %v1310, %v1408
        %v1410 = vpop.f32.mrf.mxu0
        %1411 = vmatprep.mubr.f32.mxu0 0.0
        %1412 = vmatmul.mubr.f32.gmra.mxu0 %v1280
        %v1413 = vpop.f32.mrf.mxu0
        %v1414 = vadd.f32 %v1310, %v1413
        %v1415 = vpop.f32.mrf.mxu0
        %1416 = vmatprep.mubr.f32.mxu0 0.0
        %1417 = vmatmul.mubr.f32.gmra.mxu0 %v1281
        %v1418 = vpop.f32.mrf.mxu0
        %v1419 = vadd.f32 %v1310, %v1418
        %v1420 = vpop.f32.mrf.mxu0
        %1421 = vmatprep.mubr.f32.mxu0 0.0
        %1422 = vmatmul.mubr.f32.gmra.mxu0 %v1282
        %v1423 = vpop.f32.mrf.mxu0
        %v1424 = vadd.f32 %v1310, %v1423
        %v1425 = vpop.f32.mrf.mxu0
        %1426 = vmatprep.mubr.f32.mxu0 0.0
        %1427 = vmatmul.mubr.f32.gmra.mxu0 %v1283
        %v1428 = vpop.f32.mrf.mxu0
        %v1429 = vadd.f32 %v1310, %v1428
        %v1430 = vpop.f32.mrf.mxu0
        %1431 = vmatprep.mubr.f32.mxu0 0.0
        %1432 = vmatmul.mubr.f32.gmra.mxu0 %v1284
        %v1433 = vpop.f32.mrf.mxu0
        %v1434 = vadd.f32 %v1310, %v1433
        %v1435 = vpop.f32.mrf.mxu0
        %1436 = vmatprep.mubr.f32.mxu0 0.0
        %1437 = vmatmul.mubr.f32.gmra.mxu0 %v1285
        %v1438 = vpop.f32.mrf.mxu0
        %v1439 = vadd.f32 %v1310, %v1438
        %v1440 = vpop.f32.mrf.mxu0
        %1441 = vmatprep.mubr.f32.mxu0 0.0
        %1442 = vmatmul.mubr.f32.gmra.mxu0 %v1286
        %v1443 = vpop.f32.mrf.mxu0
        %v1444 = vadd.f32 %v1310, %v1443
        %v1445 = vpop.f32.mrf.mxu0
        %1446 = vmatprep.mubr.f32.mxu0 0.0
        %1447 = vmatmul.mubr.f32.gmra.mxu0 %v1287
        %v1448 = vpop.f32.mrf.mxu0
        %v1449 = vadd.f32 %v1310, %v1448
        %v1450 = vpop.f32.mrf.mxu0
        %1451 = vmatprep.mubr.f32.mxu0 0.0
        %1452 = vmatmul.mubr.f32.gmra.mxu0 %v1288
        %v1453 = vpop.f32.mrf.mxu0
        %v1454 = vadd.f32 %v1310, %v1453
        %v1455 = vpop.f32.mrf.mxu0
        %1456 = vdwg.mxu0
        %v1457 = vld [vmem:[#allocation11] sm:$0xff]
        %v1458 = vld [vmem:[#allocation11 + $0x8] sm:$0xff]
        %v1459 = vld [vmem:[#allocation11 + $0x10] sm:$0xff]
        %v1460 = vld [vmem:[#allocation11 + $0x18] sm:$0xff]
        %v1461 = vld [vmem:[#allocation11 + $0x20] sm:$0xff]
        %v1462 = vld [vmem:[#allocation11 + $0x28] sm:$0xff]
        %v1463 = vld [vmem:[#allocation11 + $0x30] sm:$0xff]
        %v1464 = vld [vmem:[#allocation11 + $0x38] sm:$0xff]
        %v1465 = vld [vmem:[#allocation11 + $0x40] sm:$0xff]
        %v1466 = vld [vmem:[#allocation11 + $0x48] sm:$0xff]
        %v1467 = vld [vmem:[#allocation11 + $0x50] sm:$0xff]
        %v1468 = vld [vmem:[#allocation11 + $0x58] sm:$0xff]
        %v1469 = vld [vmem:[#allocation11 + $0x60] sm:$0xff]
        %v1470 = vld [vmem:[#allocation11 + $0x68] sm:$0xff]
        %v1471 = vld [vmem:[#allocation11 + $0x70] sm:$0xff]
        %v1472 = vld [vmem:[#allocation11 + $0x78] sm:$0xff]
        %v1473 = vld [vmem:[#allocation13] sm:$0x1]
        %v1475 = vlaneseq
        %v1476 = vshrl.u32 %v1475, 7
        %v1477 = vsub.s32 0, %v1476
        %v1478 = vrot.slane %v1473, %v1477
        %1480 = vmatprep.subr.mxu0 0.0
        %1481 = vmatpush1.msra.mxu0 %v1472
        %1482 = vmatprep.subr.mxu0 0.0
        %1483 = vmatpush1.msra.mxu0 %v1471
        %1484 = vmatprep.subr.mxu0 0.0
        %1485 = vmatpush1.msra.mxu0 %v1470
        %1486 = vmatprep.subr.mxu0 0.0
        %1487 = vmatpush1.msra.mxu0 %v1469
        %1488 = vmatprep.subr.mxu0 0.0
        %1489 = vmatpush1.msra.mxu0 %v1468
        %1490 = vmatprep.subr.mxu0 0.0
        %1491 = vmatpush1.msra.mxu0 %v1467
        %1492 = vmatprep.subr.mxu0 0.0
        %1493 = vmatpush1.msra.mxu0 %v1466
        %1494 = vmatprep.subr.mxu0 0.0
        %1495 = vmatpush1.msra.mxu0 %v1465
        %1496 = vmatprep.subr.mxu0 0.0
        %1497 = vmatpush1.msra.mxu0 %v1464
        %1498 = vmatprep.subr.mxu0 0.0
        %1499 = vmatpush1.msra.mxu0 %v1463
        %1500 = vmatprep.subr.mxu0 0.0
        %1501 = vmatpush1.msra.mxu0 %v1462
        %1502 = vmatprep.subr.mxu0 0.0
        %1503 = vmatpush1.msra.mxu0 %v1461
        %1504 = vmatprep.subr.mxu0 0.0
        %1505 = vmatpush1.msra.mxu0 %v1460
        %1506 = vmatprep.subr.mxu0 0.0
        %1507 = vmatpush1.msra.mxu0 %v1459
        %1508 = vmatprep.subr.mxu0 0.0
        %1509 = vmatpush1.msra.mxu0 %v1458
        %1510 = vmatprep.subr.mxu0 0.0
        %1511 = vmatpush1.msra.mxu0 %v1457
        %1512 = vmatprep.subr.mxu0 0.0
        %1513 = vmatpush2.msra.mxu0 0.0
        %1514 = vmatprep.subr.mxu0 0.0
        %1515 = vmatpush2.msra.mxu0 0.0
        %1516 = vmatprep.subr.mxu0 0.0
        %1517 = vmatpush2.msra.mxu0 0.0
        %1518 = vmatprep.subr.mxu0 0.0
        %1519 = vmatpush2.msra.mxu0 0.0
        %1520 = vmatprep.subr.mxu0 0.0
        %1521 = vmatpush2.msra.mxu0 0.0
        %1522 = vmatprep.subr.mxu0 0.0
        %1523 = vmatpush2.msra.mxu0 0.0
        %1524 = vmatprep.subr.mxu0 0.0
        %1525 = vmatpush2.msra.mxu0 0.0
        %1526 = vmatprep.subr.mxu0 0.0
        %1527 = vmatpush2.msra.mxu0 0.0
        %1528 = vmatprep.subr.mxu0 0.0
        %1529 = vmatpush2.msra.mxu0 0.0
        %1530 = vmatprep.subr.mxu0 0.0
        %1531 = vmatpush2.msra.mxu0 0.0
        %1532 = vmatprep.subr.mxu0 0.0
        %1533 = vmatpush2.msra.mxu0 0.0
        %1534 = vmatprep.subr.mxu0 0.0
        %1535 = vmatpush2.msra.mxu0 0.0
        %1536 = vmatprep.subr.mxu0 0.0
        %1537 = vmatpush2.msra.mxu0 0.0
        %1538 = vmatprep.subr.mxu0 0.0
        %1539 = vmatpush2.msra.mxu0 0.0
        %1540 = vmatprep.subr.mxu0 0.0
        %1541 = vmatpush2.msra.mxu0 0.0
        %1542 = vmatprep.subr.mxu0 0.0
        %1543 = vmatpush2.msra.mxu0 0.0
        %1544 = vmatprep.mubr.f32.mxu0 0.0
        %1545 = vmatmul.mubr.f32.gmra.mxu0 %v1379
        %v1546 = vpop.f32.mrf.mxu0
        %v1547 = vadd.f32 %v1478, %v1546
        %v1548 = vpop.f32.mrf.mxu0
        %1549 = vmatprep.mubr.f32.mxu0 0.0
        %1550 = vmatmul.mubr.f32.gmra.mxu0 %v1384
        %v1551 = vpop.f32.mrf.mxu0
        %v1552 = vadd.f32 %v1478, %v1551
        %v1553 = vpop.f32.mrf.mxu0
        %1554 = vmatprep.mubr.f32.mxu0 0.0
        %1555 = vmatmul.mubr.f32.gmra.mxu0 %v1389
        %v1556 = vpop.f32.mrf.mxu0
        %v1557 = vadd.f32 %v1478, %v1556
        %v1558 = vpop.f32.mrf.mxu0
        %1559 = vmatprep.mubr.f32.mxu0 0.0
        %1560 = vmatmul.mubr.f32.gmra.mxu0 %v1394
        %v1561 = vpop.f32.mrf.mxu0
        %v1562 = vadd.f32 %v1478, %v1561
        %v1563 = vpop.f32.mrf.mxu0
        %1564 = vmatprep.mubr.f32.mxu0 0.0
        %1565 = vmatmul.mubr.f32.gmra.mxu0 %v1399
        %v1566 = vpop.f32.mrf.mxu0
        %v1567 = vadd.f32 %v1478, %v1566
        %v1568 = vpop.f32.mrf.mxu0
        %1569 = vmatprep.mubr.f32.mxu0 0.0
        %1570 = vmatmul.mubr.f32.gmra.mxu0 %v1404
        %v1571 = vpop.f32.mrf.mxu0
        %v1572 = vadd.f32 %v1478, %v1571
        %v1573 = vpop.f32.mrf.mxu0
        %1574 = vmatprep.mubr.f32.mxu0 0.0
        %1575 = vmatmul.mubr.f32.gmra.mxu0 %v1409
        %v1576 = vpop.f32.mrf.mxu0
        %v1577 = vadd.f32 %v1478, %v1576
        %v1578 = vpop.f32.mrf.mxu0
        %1579 = vmatprep.mubr.f32.mxu0 0.0
        %1580 = vmatmul.mubr.f32.gmra.mxu0 %v1414
        %v1581 = vpop.f32.mrf.mxu0
        %v1582 = vadd.f32 %v1478, %v1581
        %v1583 = vpop.f32.mrf.mxu0
        %1584 = vmatprep.mubr.f32.mxu0 0.0
        %1585 = vmatmul.mubr.f32.gmra.mxu0 %v1419
        %v1586 = vpop.f32.mrf.mxu0
        %v1587 = vadd.f32 %v1478, %v1586
        %v1588 = vpop.f32.mrf.mxu0
        %1589 = vmatprep.mubr.f32.mxu0 0.0
        %1590 = vmatmul.mubr.f32.gmra.mxu0 %v1424
        %v1591 = vpop.f32.mrf.mxu0
        %v1592 = vadd.f32 %v1478, %v1591
        %v1593 = vpop.f32.mrf.mxu0
        %1594 = vmatprep.mubr.f32.mxu0 0.0
        %1595 = vmatmul.mubr.f32.gmra.mxu0 %v1429
        %v1596 = vpop.f32.mrf.mxu0
        %v1597 = vadd.f32 %v1478, %v1596
        %v1598 = vpop.f32.mrf.mxu0
        %1599 = vmatprep.mubr.f32.mxu0 0.0
        %1600 = vmatmul.mubr.f32.gmra.mxu0 %v1434
        %v1601 = vpop.f32.mrf.mxu0
        %v1602 = vadd.f32 %v1478, %v1601
        %v1603 = vpop.f32.mrf.mxu0
        %1604 = vmatprep.mubr.f32.mxu0 0.0
        %1605 = vmatmul.mubr.f32.gmra.mxu0 %v1439
        %v1606 = vpop.f32.mrf.mxu0
        %v1607 = vadd.f32 %v1478, %v1606
        %v1608 = vpop.f32.mrf.mxu0
        %1609 = vmatprep.mubr.f32.mxu0 0.0
        %1610 = vmatmul.mubr.f32.gmra.mxu0 %v1444
        %v1611 = vpop.f32.mrf.mxu0
        %v1612 = vadd.f32 %v1478, %v1611
        %v1613 = vpop.f32.mrf.mxu0
        %1614 = vmatprep.mubr.f32.mxu0 0.0
        %1615 = vmatmul.mubr.f32.gmra.mxu0 %v1449
        %v1616 = vpop.f32.mrf.mxu0
        %v1617 = vadd.f32 %v1478, %v1616
        %v1618 = vpop.f32.mrf.mxu0
        %1619 = vmatprep.mubr.f32.mxu0 0.0
        %1620 = vmatmul.mubr.f32.gmra.mxu0 %v1454
        %v1621 = vpop.f32.mrf.mxu0
        %v1622 = vadd.f32 %v1478, %v1621
        %v1623 = vpop.f32.mrf.mxu0
        %1624 = vdwg.mxu0
        %v1625 = vmax.f32 %v1547, 0.0
        %v1626 = vmax.f32 %v1552, 0.0
        %v1627 = vmax.f32 %v1557, 0.0
        %v1628 = vmax.f32 %v1562, 0.0
        %v1629 = vmax.f32 %v1567, 0.0
        %v1630 = vmax.f32 %v1572, 0.0
        %v1631 = vmax.f32 %v1577, 0.0
        %v1632 = vmax.f32 %v1582, 0.0
        %v1633 = vmax.f32 %v1587, 0.0
        %v1634 = vmax.f32 %v1592, 0.0
        %v1635 = vmax.f32 %v1597, 0.0
        %v1636 = vmax.f32 %v1602, 0.0
        %v1637 = vmax.f32 %v1607, 0.0
        %v1638 = vmax.f32 %v1612, 0.0
        %v1639 = vmax.f32 %v1617, 0.0
        %v1640 = vmax.f32 %v1622, 0.0
        %v1641 = vld [vmem:[#allocation14] sm:$0xff]
        %v1642 = vld [vmem:[#allocation14 + $0x8] sm:$0xff]
        %v1643 = vld [vmem:[#allocation14 + $0x10] sm:$0xff]
        %v1644 = vld [vmem:[#allocation14 + $0x18] sm:$0xff]
        %v1645 = vld [vmem:[#allocation14 + $0x20] sm:$0xff]
        %v1646 = vld [vmem:[#allocation14 + $0x28] sm:$0xff]
        %v1647 = vld [vmem:[#allocation14 + $0x30] sm:$0xff]
        %v1648 = vld [vmem:[#allocation14 + $0x38] sm:$0xff]
        %v1649 = vld [vmem:[#allocation14 + $0x40] sm:$0xff]
        %v1650 = vld [vmem:[#allocation14 + $0x48] sm:$0xff]
        %v1651 = vld [vmem:[#allocation14 + $0x50] sm:$0xff]
        %v1652 = vld [vmem:[#allocation14 + $0x58] sm:$0xff]
        %v1653 = vld [vmem:[#allocation14 + $0x60] sm:$0xff]
        %v1654 = vld [vmem:[#allocation14 + $0x68] sm:$0xff]
        %v1655 = vld [vmem:[#allocation14 + $0x70] sm:$0xff]
        %v1656 = vld [vmem:[#allocation14 + $0x78] sm:$0xff]
        %v1657 = vld [vmem:[#allocation14 + $0x80] sm:$0xff]
        %v1658 = vld [vmem:[#allocation14 + $0x88] sm:$0xff]
        %v1659 = vld [vmem:[#allocation14 + $0x90] sm:$0xff]
        %v1660 = vld [vmem:[#allocation14 + $0x98] sm:$0xff]
        %v1661 = vld [vmem:[#allocation14 + $0xa0] sm:$0xff]
        %v1662 = vld [vmem:[#allocation14 + $0xa8] sm:$0xff]
        %v1663 = vld [vmem:[#allocation14 + $0xb0] sm:$0xff]
        %v1664 = vld [vmem:[#allocation14 + $0xb8] sm:$0xff]
        %v1665 = vld [vmem:[#allocation14 + $0xc0] sm:$0xff]
        %v1666 = vld [vmem:[#allocation14 + $0xc8] sm:$0xff]
        %v1667 = vld [vmem:[#allocation14 + $0xd0] sm:$0xff]
        %v1668 = vld [vmem:[#allocation14 + $0xd8] sm:$0xff]
        %v1669 = vld [vmem:[#allocation14 + $0xe0] sm:$0xff]
        %v1670 = vld [vmem:[#allocation14 + $0xe8] sm:$0xff]
        %v1671 = vld [vmem:[#allocation14 + $0xf0] sm:$0xff]
        %v1672 = vld [vmem:[#allocation14 + $0xf8] sm:$0xff]
        %v1673 = vld [vmem:[#allocation14 + $0x100] sm:$0xff]
        %v1674 = vld [vmem:[#allocation14 + $0x108] sm:$0xff]
        %v1675 = vld [vmem:[#allocation14 + $0x110] sm:$0xff]
        %v1676 = vld [vmem:[#allocation14 + $0x118] sm:$0xff]
        %v1677 = vld [vmem:[#allocation14 + $0x120] sm:$0xff]
        %v1678 = vld [vmem:[#allocation14 + $0x128] sm:$0xff]
        %v1679 = vld [vmem:[#allocation14 + $0x130] sm:$0xff]
        %v1680 = vld [vmem:[#allocation14 + $0x138] sm:$0xff]
        %v1681 = vld [vmem:[#allocation14 + $0x140] sm:$0xff]
        %v1682 = vld [vmem:[#allocation14 + $0x148] sm:$0xff]
        %v1683 = vld [vmem:[#allocation14 + $0x150] sm:$0xff]
        %v1684 = vld [vmem:[#allocation14 + $0x158] sm:$0xff]
        %v1685 = vld [vmem:[#allocation14 + $0x160] sm:$0xff]
        %v1686 = vld [vmem:[#allocation14 + $0x168] sm:$0xff]
        %v1687 = vld [vmem:[#allocation14 + $0x170] sm:$0xff]
        %v1688 = vld [vmem:[#allocation14 + $0x178] sm:$0xff]
        %v1689 = vld [vmem:[#allocation14 + $0x180] sm:$0xff]
        %v1690 = vld [vmem:[#allocation14 + $0x188] sm:$0xff]
        %v1691 = vld [vmem:[#allocation14 + $0x190] sm:$0xff]
        %v1692 = vld [vmem:[#allocation14 + $0x198] sm:$0xff]
        %v1693 = vld [vmem:[#allocation14 + $0x1a0] sm:$0xff]
        %v1694 = vld [vmem:[#allocation14 + $0x1a8] sm:$0xff]
        %v1695 = vld [vmem:[#allocation14 + $0x1b0] sm:$0xff]
        %v1696 = vld [vmem:[#allocation14 + $0x1b8] sm:$0xff]
        %v1697 = vld [vmem:[#allocation14 + $0x1c0] sm:$0xff]
        %v1698 = vld [vmem:[#allocation14 + $0x1c8] sm:$0xff]
        %v1699 = vld [vmem:[#allocation14 + $0x1d0] sm:$0xff]
        %v1700 = vld [vmem:[#allocation14 + $0x1d8] sm:$0xff]
        %v1701 = vld [vmem:[#allocation14 + $0x1e0] sm:$0xff]
        %v1702 = vld [vmem:[#allocation14 + $0x1e8] sm:$0xff]
        %v1703 = vld [vmem:[#allocation14 + $0x1f0] sm:$0xff]
        %v1704 = vld [vmem:[#allocation14 + $0x1f8] sm:$0xff]
        %v1705 = vld [vmem:[#allocation14 + $0x200] sm:$0xff]
        %v1706 = vld [vmem:[#allocation14 + $0x208] sm:$0xff]
        %v1707 = vld [vmem:[#allocation14 + $0x210] sm:$0xff]
        %v1708 = vld [vmem:[#allocation14 + $0x218] sm:$0xff]
        %v1709 = vld [vmem:[#allocation14 + $0x220] sm:$0xff]
        %v1710 = vld [vmem:[#allocation14 + $0x228] sm:$0xff]
        %v1711 = vld [vmem:[#allocation14 + $0x230] sm:$0xff]
        %v1712 = vld [vmem:[#allocation14 + $0x238] sm:$0xff]
        %v1713 = vld [vmem:[#allocation14 + $0x240] sm:$0xff]
        %v1714 = vld [vmem:[#allocation14 + $0x248] sm:$0xff]
        %v1715 = vld [vmem:[#allocation14 + $0x250] sm:$0xff]
        %v1716 = vld [vmem:[#allocation14 + $0x258] sm:$0xff]
        %v1717 = vld [vmem:[#allocation14 + $0x260] sm:$0xff]
        %v1718 = vld [vmem:[#allocation14 + $0x268] sm:$0xff]
        %v1719 = vld [vmem:[#allocation14 + $0x270] sm:$0xff]
        %v1720 = vld [vmem:[#allocation14 + $0x278] sm:$0xff]
        %v1721 = vld [vmem:[#allocation14 + $0x280] sm:$0xff]
        %v1722 = vld [vmem:[#allocation14 + $0x288] sm:$0xff]
        %v1723 = vld [vmem:[#allocation14 + $0x290] sm:$0xff]
        %v1724 = vld [vmem:[#allocation14 + $0x298] sm:$0xff]
        %v1725 = vld [vmem:[#allocation14 + $0x2a0] sm:$0xff]
        %v1726 = vld [vmem:[#allocation14 + $0x2a8] sm:$0xff]
        %v1727 = vld [vmem:[#allocation14 + $0x2b0] sm:$0xff]
        %v1728 = vld [vmem:[#allocation14 + $0x2b8] sm:$0xff]
        %v1729 = vld [vmem:[#allocation14 + $0x2c0] sm:$0xff]
        %v1730 = vld [vmem:[#allocation14 + $0x2c8] sm:$0xff]
        %v1731 = vld [vmem:[#allocation14 + $0x2d0] sm:$0xff]
        %v1732 = vld [vmem:[#allocation14 + $0x2d8] sm:$0xff]
        %v1733 = vld [vmem:[#allocation14 + $0x2e0] sm:$0xff]
        %v1734 = vld [vmem:[#allocation14 + $0x2e8] sm:$0xff]
        %v1735 = vld [vmem:[#allocation14 + $0x2f0] sm:$0xff]
        %v1736 = vld [vmem:[#allocation14 + $0x2f8] sm:$0xff]
        %v1737 = vld [vmem:[#allocation14 + $0x300] sm:$0xff]
        %v1738 = vld [vmem:[#allocation14 + $0x308] sm:$0xff]
        %v1739 = vld [vmem:[#allocation14 + $0x310] sm:$0xff]
        %v1740 = vld [vmem:[#allocation14 + $0x318] sm:$0xff]
        %v1741 = vld [vmem:[#allocation14 + $0x320] sm:$0xff]
        %v1742 = vld [vmem:[#allocation14 + $0x328] sm:$0xff]
        %v1743 = vld [vmem:[#allocation14 + $0x330] sm:$0xff]
        %v1744 = vld [vmem:[#allocation14 + $0x338] sm:$0xff]
        %v1745 = vld [vmem:[#allocation14 + $0x340] sm:$0xff]
        %v1746 = vld [vmem:[#allocation14 + $0x348] sm:$0xff]
        %v1747 = vld [vmem:[#allocation14 + $0x350] sm:$0xff]
        %v1748 = vld [vmem:[#allocation14 + $0x358] sm:$0xff]
        %v1749 = vld [vmem:[#allocation14 + $0x360] sm:$0xff]
        %v1750 = vld [vmem:[#allocation14 + $0x368] sm:$0xff]
        %v1751 = vld [vmem:[#allocation14 + $0x370] sm:$0xff]
        %v1752 = vld [vmem:[#allocation14 + $0x378] sm:$0xff]
        %v1753 = vld [vmem:[#allocation16] sm:$0xff]
        %v1755 = vlaneseq
        %v1756 = vshrl.u32 %v1755, 7
        %v1757 = vsub.s32 0, %v1756
        %v1758 = vrot.slane %v1753, %v1757
        %v1759 = vlaneseq
        %v1760 = vshrl.u32 %v1759, 7
        %v1761 = vsub.s32 1, %v1760
        %v1762 = vrot.slane %v1753, %v1761
        %v1763 = vlaneseq
        %v1764 = vshrl.u32 %v1763, 7
        %v1765 = vsub.s32 2, %v1764
        %v1766 = vrot.slane %v1753, %v1765
        %v1767 = vlaneseq
        %v1768 = vshrl.u32 %v1767, 7
        %v1769 = vsub.s32 3, %v1768
        %v1770 = vrot.slane %v1753, %v1769
        %v1771 = vlaneseq
        %v1772 = vshrl.u32 %v1771, 7
        %v1773 = vsub.s32 4, %v1772
        %v1774 = vrot.slane %v1753, %v1773
        %v1775 = vlaneseq
        %v1776 = vshrl.u32 %v1775, 7
        %v1777 = vsub.s32 5, %v1776
        %v1778 = vrot.slane %v1753, %v1777
        %v1779 = vlaneseq
        %v1780 = vshrl.u32 %v1779, 7
        %v1781 = vsub.s32 6, %v1780
        %v1782 = vrot.slane %v1753, %v1781
        %1790 = vmatprep.subr.mxu0 %v1747
        %1791 = vmatpush1.msra.mxu0 %v1746
        %1792 = vmatprep.subr.mxu0 %v1740
        %1793 = vmatpush1.msra.mxu0 %v1739
        %1794 = vmatprep.subr.mxu0 %v1733
        %1795 = vmatpush1.msra.mxu0 %v1732
        %1796 = vmatprep.subr.mxu0 %v1726
        %1797 = vmatpush1.msra.mxu0 %v1725
        %1798 = vmatprep.subr.mxu0 %v1719
        %1799 = vmatpush1.msra.mxu0 %v1718
        %1800 = vmatprep.subr.mxu0 %v1712
        %1801 = vmatpush1.msra.mxu0 %v1711
        %1802 = vmatprep.subr.mxu0 %v1705
        %1803 = vmatpush1.msra.mxu0 %v1704
        %1804 = vmatprep.subr.mxu0 %v1698
        %1805 = vmatpush1.msra.mxu0 %v1697
        %1806 = vmatprep.subr.mxu0 %v1691
        %1807 = vmatpush1.msra.mxu0 %v1690
        %1808 = vmatprep.subr.mxu0 %v1684
        %1809 = vmatpush1.msra.mxu0 %v1683
        %1810 = vmatprep.subr.mxu0 %v1677
        %1811 = vmatpush1.msra.mxu0 %v1676
        %1812 = vmatprep.subr.mxu0 %v1670
        %1813 = vmatpush1.msra.mxu0 %v1669
        %1814 = vmatprep.subr.mxu0 %v1663
        %1815 = vmatpush1.msra.mxu0 %v1662
        %1816 = vmatprep.subr.mxu0 %v1656
        %1817 = vmatpush1.msra.mxu0 %v1655
        %1818 = vmatprep.subr.mxu0 %v1649
        %1819 = vmatpush1.msra.mxu0 %v1648
        %1820 = vmatprep.subr.mxu0 %v1642
        %1821 = vmatpush1.msra.mxu0 %v1641
        %1822 = vmatprep.subr.mxu0 0.0
        %1823 = vmatpush2.msra.mxu0 0.0
        %1824 = vmatprep.subr.mxu0 0.0
        %1825 = vmatpush2.msra.mxu0 0.0
        %1826 = vmatprep.subr.mxu0 0.0
        %1827 = vmatpush2.msra.mxu0 0.0
        %1828 = vmatprep.subr.mxu0 0.0
        %1829 = vmatpush2.msra.mxu0 0.0
        %1830 = vmatprep.subr.mxu0 0.0
        %1831 = vmatpush2.msra.mxu0 0.0
        %1832 = vmatprep.subr.mxu0 0.0
        %1833 = vmatpush2.msra.mxu0 0.0
        %1834 = vmatprep.subr.mxu0 0.0
        %1835 = vmatpush2.msra.mxu0 0.0
        %1836 = vmatprep.subr.mxu0 0.0
        %1837 = vmatpush2.msra.mxu0 0.0
        %1838 = vmatprep.subr.mxu0 0.0
        %1839 = vmatpush2.msra.mxu0 0.0
        %1840 = vmatprep.subr.mxu0 0.0
        %1841 = vmatpush2.msra.mxu0 0.0
        %1842 = vmatprep.subr.mxu0 0.0
        %1843 = vmatpush2.msra.mxu0 0.0
        %1844 = vmatprep.subr.mxu0 0.0
        %1845 = vmatpush2.msra.mxu0 0.0
        %1846 = vmatprep.subr.mxu0 0.0
        %1847 = vmatpush2.msra.mxu0 0.0
        %1848 = vmatprep.subr.mxu0 0.0
        %1849 = vmatpush2.msra.mxu0 0.0
        %1850 = vmatprep.subr.mxu0 0.0
        %1851 = vmatpush2.msra.mxu0 0.0
        %1852 = vmatprep.subr.mxu0 0.0
        %1853 = vmatpush2.msra.mxu0 0.0
        %1854 = vmatprep.mubr.f32.mxu0 0.0
        %1855 = vmatmul.mubr.f32.gmra.mxu0 %v1625
        %v1856 = vpop.f32.mrf.mxu0
        %v1857 = vadd.f32 %v1758, %v1856
        %v1858 = vpop.f32.mrf.mxu0
        %v1859 = vadd.f32 %v1762, %v1858
        %1860 = vmatprep.mubr.f32.mxu0 0.0
        %1861 = vmatmul.mubr.f32.gmra.mxu0 %v1626
        %v1862 = vpop.f32.mrf.mxu0
        %v1863 = vadd.f32 %v1758, %v1862
        %v1864 = vpop.f32.mrf.mxu0
        %v1865 = vadd.f32 %v1762, %v1864
        %1866 = vmatprep.mubr.f32.mxu0 0.0
        %1867 = vmatmul.mubr.f32.gmra.mxu0 %v1627
        %v1868 = vpop.f32.mrf.mxu0
        %v1869 = vadd.f32 %v1758, %v1868
        %v1870 = vpop.f32.mrf.mxu0
        %v1871 = vadd.f32 %v1762, %v1870
        %1872 = vmatprep.mubr.f32.mxu0 0.0
        %1873 = vmatmul.mubr.f32.gmra.mxu0 %v1628
        %v1874 = vpop.f32.mrf.mxu0
        %v1875 = vadd.f32 %v1758, %v1874
        %v1876 = vpop.f32.mrf.mxu0
        %v1877 = vadd.f32 %v1762, %v1876
        %1878 = vmatprep.mubr.f32.mxu0 0.0
        %1879 = vmatmul.mubr.f32.gmra.mxu0 %v1629
        %v1880 = vpop.f32.mrf.mxu0
        %v1881 = vadd.f32 %v1758, %v1880
        %v1882 = vpop.f32.mrf.mxu0
        %v1883 = vadd.f32 %v1762, %v1882
        %1884 = vmatprep.mubr.f32.mxu0 0.0
        %1885 = vmatmul.mubr.f32.gmra.mxu0 %v1630
        %v1886 = vpop.f32.mrf.mxu0
        %v1887 = vadd.f32 %v1758, %v1886
        %v1888 = vpop.f32.mrf.mxu0
        %v1889 = vadd.f32 %v1762, %v1888
        %1890 = vmatprep.mubr.f32.mxu0 0.0
        %1891 = vmatmul.mubr.f32.gmra.mxu0 %v1631
        %v1892 = vpop.f32.mrf.mxu0
        %v1893 = vadd.f32 %v1758, %v1892
        %v1894 = vpop.f32.mrf.mxu0
        %v1895 = vadd.f32 %v1762, %v1894
        %1896 = vmatprep.mubr.f32.mxu0 0.0
        %1897 = vmatmul.mubr.f32.gmra.mxu0 %v1632
        %v1898 = vpop.f32.mrf.mxu0
        %v1899 = vadd.f32 %v1758, %v1898
        %v1900 = vpop.f32.mrf.mxu0
        %v1901 = vadd.f32 %v1762, %v1900
        %1902 = vmatprep.mubr.f32.mxu0 0.0
        %1903 = vmatmul.mubr.f32.gmra.mxu0 %v1633
        %v1904 = vpop.f32.mrf.mxu0
        %v1905 = vadd.f32 %v1758, %v1904
        %v1906 = vpop.f32.mrf.mxu0
        %v1907 = vadd.f32 %v1762, %v1906
        %1908 = vmatprep.mubr.f32.mxu0 0.0
        %1909 = vmatmul.mubr.f32.gmra.mxu0 %v1634
        %v1910 = vpop.f32.mrf.mxu0
        %v1911 = vadd.f32 %v1758, %v1910
        %v1912 = vpop.f32.mrf.mxu0
        %v1913 = vadd.f32 %v1762, %v1912
        %1914 = vmatprep.mubr.f32.mxu0 0.0
        %1915 = vmatmul.mubr.f32.gmra.mxu0 %v1635
        %v1916 = vpop.f32.mrf.mxu0
        %v1917 = vadd.f32 %v1758, %v1916
        %v1918 = vpop.f32.mrf.mxu0
        %v1919 = vadd.f32 %v1762, %v1918
        %1920 = vmatprep.mubr.f32.mxu0 0.0
        %1921 = vmatmul.mubr.f32.gmra.mxu0 %v1636
        %v1922 = vpop.f32.mrf.mxu0
        %v1923 = vadd.f32 %v1758, %v1922
        %v1924 = vpop.f32.mrf.mxu0
        %v1925 = vadd.f32 %v1762, %v1924
        %1926 = vmatprep.mubr.f32.mxu0 0.0
        %1927 = vmatmul.mubr.f32.gmra.mxu0 %v1637
        %v1928 = vpop.f32.mrf.mxu0
        %v1929 = vadd.f32 %v1758, %v1928
        %v1930 = vpop.f32.mrf.mxu0
        %v1931 = vadd.f32 %v1762, %v1930
        %1932 = vmatprep.mubr.f32.mxu0 0.0
        %1933 = vmatmul.mubr.f32.gmra.mxu0 %v1638
        %v1934 = vpop.f32.mrf.mxu0
        %v1935 = vadd.f32 %v1758, %v1934
        %v1936 = vpop.f32.mrf.mxu0
        %v1937 = vadd.f32 %v1762, %v1936
        %1938 = vmatprep.mubr.f32.mxu0 0.0
        %1939 = vmatmul.mubr.f32.gmra.mxu0 %v1639
        %v1940 = vpop.f32.mrf.mxu0
        %v1941 = vadd.f32 %v1758, %v1940
        %v1942 = vpop.f32.mrf.mxu0
        %v1943 = vadd.f32 %v1762, %v1942
        %1944 = vmatprep.mubr.f32.mxu0 0.0
        %1945 = vmatmul.mubr.f32.gmra.mxu0 %v1640
        %v1946 = vpop.f32.mrf.mxu0
        %v1947 = vadd.f32 %v1758, %v1946
        %v1948 = vpop.f32.mrf.mxu0
        %v1949 = vadd.f32 %v1762, %v1948
        %1950 = vdwg.mxu0
        %1951 = vmatprep.subr.mxu0 %v1749
        %1952 = vmatpush1.msra.mxu0 %v1748
        %1953 = vmatprep.subr.mxu0 %v1742
        %1954 = vmatpush1.msra.mxu0 %v1741
        %1955 = vmatprep.subr.mxu0 %v1735
        %1956 = vmatpush1.msra.mxu0 %v1734
        %1957 = vmatprep.subr.mxu0 %v1728
        %1958 = vmatpush1.msra.mxu0 %v1727
        %1959 = vmatprep.subr.mxu0 %v1721
        %1960 = vmatpush1.msra.mxu0 %v1720
        %1961 = vmatprep.subr.mxu0 %v1714
        %1962 = vmatpush1.msra.mxu0 %v1713
        %1963 = vmatprep.subr.mxu0 %v1707
        %1964 = vmatpush1.msra.mxu0 %v1706
        %1965 = vmatprep.subr.mxu0 %v1700
        %1966 = vmatpush1.msra.mxu0 %v1699
        %1967 = vmatprep.subr.mxu0 %v1693
        %1968 = vmatpush1.msra.mxu0 %v1692
        %1969 = vmatprep.subr.mxu0 %v1686
        %1970 = vmatpush1.msra.mxu0 %v1685
        %1971 = vmatprep.subr.mxu0 %v1679
        %1972 = vmatpush1.msra.mxu0 %v1678
        %1973 = vmatprep.subr.mxu0 %v1672
        %1974 = vmatpush1.msra.mxu0 %v1671
        %1975 = vmatprep.subr.mxu0 %v1665
        %1976 = vmatpush1.msra.mxu0 %v1664
        %1977 = vmatprep.subr.mxu0 %v1658
        %1978 = vmatpush1.msra.mxu0 %v1657
        %1979 = vmatprep.subr.mxu0 %v1651
        %1980 = vmatpush1.msra.mxu0 %v1650
        %1981 = vmatprep.subr.mxu0 %v1644
        %1982 = vmatpush1.msra.mxu0 %v1643
        %1983 = vmatprep.subr.mxu0 0.0
        %1984 = vmatpush2.msra.mxu0 0.0
        %1985 = vmatprep.subr.mxu0 0.0
        %1986 = vmatpush2.msra.mxu0 0.0
        %1987 = vmatprep.subr.mxu0 0.0
        %1988 = vmatpush2.msra.mxu0 0.0
        %1989 = vmatprep.subr.mxu0 0.0
        %1990 = vmatpush2.msra.mxu0 0.0
        %1991 = vmatprep.subr.mxu0 0.0
        %1992 = vmatpush2.msra.mxu0 0.0
        %1993 = vmatprep.subr.mxu0 0.0
        %1994 = vmatpush2.msra.mxu0 0.0
        %1995 = vmatprep.subr.mxu0 0.0
        %1996 = vmatpush2.msra.mxu0 0.0
        %1997 = vmatprep.subr.mxu0 0.0
        %1998 = vmatpush2.msra.mxu0 0.0
        %1999 = vmatprep.subr.mxu0 0.0
        %2000 = vmatpush2.msra.mxu0 0.0
        %2001 = vmatprep.subr.mxu0 0.0
        %2002 = vmatpush2.msra.mxu0 0.0
        %2003 = vmatprep.subr.mxu0 0.0
        %2004 = vmatpush2.msra.mxu0 0.0
        %2005 = vmatprep.subr.mxu0 0.0
        %2006 = vmatpush2.msra.mxu0 0.0
        %2007 = vmatprep.subr.mxu0 0.0
        %2008 = vmatpush2.msra.mxu0 0.0
        %2009 = vmatprep.subr.mxu0 0.0
        %2010 = vmatpush2.msra.mxu0 0.0
        %2011 = vmatprep.subr.mxu0 0.0
        %2012 = vmatpush2.msra.mxu0 0.0
        %2013 = vmatprep.subr.mxu0 0.0
        %2014 = vmatpush2.msra.mxu0 0.0
        %2015 = vmatprep.mubr.f32.mxu0 0.0
        %2016 = vmatmul.mubr.f32.gmra.mxu0 %v1625
        %v2017 = vpop.f32.mrf.mxu0
        %v2018 = vadd.f32 %v1766, %v2017
        %v2019 = vpop.f32.mrf.mxu0
        %v2020 = vadd.f32 %v1770, %v2019
        %2021 = vmatprep.mubr.f32.mxu0 0.0
        %2022 = vmatmul.mubr.f32.gmra.mxu0 %v1626
        %v2023 = vpop.f32.mrf.mxu0
        %v2024 = vadd.f32 %v1766, %v2023
        %v2025 = vpop.f32.mrf.mxu0
        %v2026 = vadd.f32 %v1770, %v2025
        %2027 = vmatprep.mubr.f32.mxu0 0.0
        %2028 = vmatmul.mubr.f32.gmra.mxu0 %v1627
        %v2029 = vpop.f32.mrf.mxu0
        %v2030 = vadd.f32 %v1766, %v2029
        %v2031 = vpop.f32.mrf.mxu0
        %v2032 = vadd.f32 %v1770, %v2031
        %2033 = vmatprep.mubr.f32.mxu0 0.0
        %2034 = vmatmul.mubr.f32.gmra.mxu0 %v1628
        %v2035 = vpop.f32.mrf.mxu0
        %v2036 = vadd.f32 %v1766, %v2035
        %v2037 = vpop.f32.mrf.mxu0
        %v2038 = vadd.f32 %v1770, %v2037
        %2039 = vmatprep.mubr.f32.mxu0 0.0
        %2040 = vmatmul.mubr.f32.gmra.mxu0 %v1629
        %v2041 = vpop.f32.mrf.mxu0
        %v2042 = vadd.f32 %v1766, %v2041
        %v2043 = vpop.f32.mrf.mxu0
        %v2044 = vadd.f32 %v1770, %v2043
        %2045 = vmatprep.mubr.f32.mxu0 0.0
        %2046 = vmatmul.mubr.f32.gmra.mxu0 %v1630
        %v2047 = vpop.f32.mrf.mxu0
        %v2048 = vadd.f32 %v1766, %v2047
        %v2049 = vpop.f32.mrf.mxu0
        %v2050 = vadd.f32 %v1770, %v2049
        %2051 = vmatprep.mubr.f32.mxu0 0.0
        %2052 = vmatmul.mubr.f32.gmra.mxu0 %v1631
        %v2053 = vpop.f32.mrf.mxu0
        %v2054 = vadd.f32 %v1766, %v2053
        %v2055 = vpop.f32.mrf.mxu0
        %v2056 = vadd.f32 %v1770, %v2055
        %2057 = vmatprep.mubr.f32.mxu0 0.0
        %2058 = vmatmul.mubr.f32.gmra.mxu0 %v1632
        %v2059 = vpop.f32.mrf.mxu0
        %v2060 = vadd.f32 %v1766, %v2059
        %v2061 = vpop.f32.mrf.mxu0
        %v2062 = vadd.f32 %v1770, %v2061
        %2063 = vmatprep.mubr.f32.mxu0 0.0
        %2064 = vmatmul.mubr.f32.gmra.mxu0 %v1633
        %v2065 = vpop.f32.mrf.mxu0
        %v2066 = vadd.f32 %v1766, %v2065
        %v2067 = vpop.f32.mrf.mxu0
        %v2068 = vadd.f32 %v1770, %v2067
        %2069 = vmatprep.mubr.f32.mxu0 0.0
        %2070 = vmatmul.mubr.f32.gmra.mxu0 %v1634
        %v2071 = vpop.f32.mrf.mxu0
        %v2072 = vadd.f32 %v1766, %v2071
        %v2073 = vpop.f32.mrf.mxu0
        %v2074 = vadd.f32 %v1770, %v2073
        %2075 = vmatprep.mubr.f32.mxu0 0.0
        %2076 = vmatmul.mubr.f32.gmra.mxu0 %v1635
        %v2077 = vpop.f32.mrf.mxu0
        %v2078 = vadd.f32 %v1766, %v2077
        %v2079 = vpop.f32.mrf.mxu0
        %v2080 = vadd.f32 %v1770, %v2079
        %2081 = vmatprep.mubr.f32.mxu0 0.0
        %2082 = vmatmul.mubr.f32.gmra.mxu0 %v1636
        %v2083 = vpop.f32.mrf.mxu0
        %v2084 = vadd.f32 %v1766, %v2083
        %v2085 = vpop.f32.mrf.mxu0
        %v2086 = vadd.f32 %v1770, %v2085
        %2087 = vmatprep.mubr.f32.mxu0 0.0
        %2088 = vmatmul.mubr.f32.gmra.mxu0 %v1637
        %v2089 = vpop.f32.mrf.mxu0
        %v2090 = vadd.f32 %v1766, %v2089
        %v2091 = vpop.f32.mrf.mxu0
        %v2092 = vadd.f32 %v1770, %v2091
        %2093 = vmatprep.mubr.f32.mxu0 0.0
        %2094 = vmatmul.mubr.f32.gmra.mxu0 %v1638
        %v2095 = vpop.f32.mrf.mxu0
        %v2096 = vadd.f32 %v1766, %v2095
        %v2097 = vpop.f32.mrf.mxu0
        %v2098 = vadd.f32 %v1770, %v2097
        %2099 = vmatprep.mubr.f32.mxu0 0.0
        %2100 = vmatmul.mubr.f32.gmra.mxu0 %v1639
        %v2101 = vpop.f32.mrf.mxu0
        %v2102 = vadd.f32 %v1766, %v2101
        %v2103 = vpop.f32.mrf.mxu0
        %v2104 = vadd.f32 %v1770, %v2103
        %2105 = vmatprep.mubr.f32.mxu0 0.0
        %2106 = vmatmul.mubr.f32.gmra.mxu0 %v1640
        %v2107 = vpop.f32.mrf.mxu0
        %v2108 = vadd.f32 %v1766, %v2107
        %v2109 = vpop.f32.mrf.mxu0
        %v2110 = vadd.f32 %v1770, %v2109
        %2111 = vdwg.mxu0
        %2112 = vmatprep.subr.mxu0 %v1751
        %2113 = vmatpush1.msra.mxu0 %v1750
        %2114 = vmatprep.subr.mxu0 %v1744
        %2115 = vmatpush1.msra.mxu0 %v1743
        %2116 = vmatprep.subr.mxu0 %v1737
        %2117 = vmatpush1.msra.mxu0 %v1736
        %2118 = vmatprep.subr.mxu0 %v1730
        %2119 = vmatpush1.msra.mxu0 %v1729
        %2120 = vmatprep.subr.mxu0 %v1723
        %2121 = vmatpush1.msra.mxu0 %v1722
        %2122 = vmatprep.subr.mxu0 %v1716
        %2123 = vmatpush1.msra.mxu0 %v1715
        %2124 = vmatprep.subr.mxu0 %v1709
        %2125 = vmatpush1.msra.mxu0 %v1708
        %2126 = vmatprep.subr.mxu0 %v1702
        %2127 = vmatpush1.msra.mxu0 %v1701
        %2128 = vmatprep.subr.mxu0 %v1695
        %2129 = vmatpush1.msra.mxu0 %v1694
        %2130 = vmatprep.subr.mxu0 %v1688
        %2131 = vmatpush1.msra.mxu0 %v1687
        %2132 = vmatprep.subr.mxu0 %v1681
        %2133 = vmatpush1.msra.mxu0 %v1680
        %2134 = vmatprep.subr.mxu0 %v1674
        %2135 = vmatpush1.msra.mxu0 %v1673
        %2136 = vmatprep.subr.mxu0 %v1667
        %2137 = vmatpush1.msra.mxu0 %v1666
        %2138 = vmatprep.subr.mxu0 %v1660
        %2139 = vmatpush1.msra.mxu0 %v1659
        %2140 = vmatprep.subr.mxu0 %v1653
        %2141 = vmatpush1.msra.mxu0 %v1652
        %2142 = vmatprep.subr.mxu0 %v1646
        %2143 = vmatpush1.msra.mxu0 %v1645
        %2144 = vmatprep.subr.mxu0 0.0
        %2145 = vmatpush2.msra.mxu0 0.0
        %2146 = vmatprep.subr.mxu0 0.0
        %2147 = vmatpush2.msra.mxu0 0.0
        %2148 = vmatprep.subr.mxu0 0.0
        %2149 = vmatpush2.msra.mxu0 0.0
        %2150 = vmatprep.subr.mxu0 0.0
        %2151 = vmatpush2.msra.mxu0 0.0
        %2152 = vmatprep.subr.mxu0 0.0
        %2153 = vmatpush2.msra.mxu0 0.0
        %2154 = vmatprep.subr.mxu0 0.0
        %2155 = vmatpush2.msra.mxu0 0.0
        %2156 = vmatprep.subr.mxu0 0.0
        %2157 = vmatpush2.msra.mxu0 0.0
        %2158 = vmatprep.subr.mxu0 0.0
        %2159 = vmatpush2.msra.mxu0 0.0
        %2160 = vmatprep.subr.mxu0 0.0
        %2161 = vmatpush2.msra.mxu0 0.0
        %2162 = vmatprep.subr.mxu0 0.0
        %2163 = vmatpush2.msra.mxu0 0.0
        %2164 = vmatprep.subr.mxu0 0.0
        %2165 = vmatpush2.msra.mxu0 0.0
        %2166 = vmatprep.subr.mxu0 0.0
        %2167 = vmatpush2.msra.mxu0 0.0
        %2168 = vmatprep.subr.mxu0 0.0
        %2169 = vmatpush2.msra.mxu0 0.0
        %2170 = vmatprep.subr.mxu0 0.0
        %2171 = vmatpush2.msra.mxu0 0.0
        %2172 = vmatprep.subr.mxu0 0.0
        %2173 = vmatpush2.msra.mxu0 0.0
        %2174 = vmatprep.subr.mxu0 0.0
        %2175 = vmatpush2.msra.mxu0 0.0
        %2176 = vmatprep.mubr.f32.mxu0 0.0
        %2177 = vmatmul.mubr.f32.gmra.mxu0 %v1625
        %v2178 = vpop.f32.mrf.mxu0
        %v2179 = vadd.f32 %v1774, %v2178
        %v2180 = vpop.f32.mrf.mxu0
        %v2181 = vadd.f32 %v1778, %v2180
        %2182 = vmatprep.mubr.f32.mxu0 0.0
        %2183 = vmatmul.mubr.f32.gmra.mxu0 %v1626
        %v2184 = vpop.f32.mrf.mxu0
        %v2185 = vadd.f32 %v1774, %v2184
        %v2186 = vpop.f32.mrf.mxu0
        %v2187 = vadd.f32 %v1778, %v2186
        %2188 = vmatprep.mubr.f32.mxu0 0.0
        %2189 = vmatmul.mubr.f32.gmra.mxu0 %v1627
        %v2190 = vpop.f32.mrf.mxu0
        %v2191 = vadd.f32 %v1774, %v2190
        %v2192 = vpop.f32.mrf.mxu0
        %v2193 = vadd.f32 %v1778, %v2192
        %2194 = vmatprep.mubr.f32.mxu0 0.0
        %2195 = vmatmul.mubr.f32.gmra.mxu0 %v1628
        %v2196 = vpop.f32.mrf.mxu0
        %v2197 = vadd.f32 %v1774, %v2196
        %v2198 = vpop.f32.mrf.mxu0
        %v2199 = vadd.f32 %v1778, %v2198
        %2200 = vmatprep.mubr.f32.mxu0 0.0
        %2201 = vmatmul.mubr.f32.gmra.mxu0 %v1629
        %v2202 = vpop.f32.mrf.mxu0
        %v2203 = vadd.f32 %v1774, %v2202
        %v2204 = vpop.f32.mrf.mxu0
        %v2205 = vadd.f32 %v1778, %v2204
        %2206 = vmatprep.mubr.f32.mxu0 0.0
        %2207 = vmatmul.mubr.f32.gmra.mxu0 %v1630
        %v2208 = vpop.f32.mrf.mxu0
        %v2209 = vadd.f32 %v1774, %v2208
        %v2210 = vpop.f32.mrf.mxu0
        %v2211 = vadd.f32 %v1778, %v2210
        %2212 = vmatprep.mubr.f32.mxu0 0.0
        %2213 = vmatmul.mubr.f32.gmra.mxu0 %v1631
        %v2214 = vpop.f32.mrf.mxu0
        %v2215 = vadd.f32 %v1774, %v2214
        %v2216 = vpop.f32.mrf.mxu0
        %v2217 = vadd.f32 %v1778, %v2216
        %2218 = vmatprep.mubr.f32.mxu0 0.0
        %2219 = vmatmul.mubr.f32.gmra.mxu0 %v1632
        %v2220 = vpop.f32.mrf.mxu0
        %v2221 = vadd.f32 %v1774, %v2220
        %v2222 = vpop.f32.mrf.mxu0
        %v2223 = vadd.f32 %v1778, %v2222
        %2224 = vmatprep.mubr.f32.mxu0 0.0
        %2225 = vmatmul.mubr.f32.gmra.mxu0 %v1633
        %v2226 = vpop.f32.mrf.mxu0
        %v2227 = vadd.f32 %v1774, %v2226
        %v2228 = vpop.f32.mrf.mxu0
        %v2229 = vadd.f32 %v1778, %v2228
        %2230 = vmatprep.mubr.f32.mxu0 0.0
        %2231 = vmatmul.mubr.f32.gmra.mxu0 %v1634
        %v2232 = vpop.f32.mrf.mxu0
        %v2233 = vadd.f32 %v1774, %v2232
        %v2234 = vpop.f32.mrf.mxu0
        %v2235 = vadd.f32 %v1778, %v2234
        %2236 = vmatprep.mubr.f32.mxu0 0.0
        %2237 = vmatmul.mubr.f32.gmra.mxu0 %v1635
        %v2238 = vpop.f32.mrf.mxu0
        %v2239 = vadd.f32 %v1774, %v2238
        %v2240 = vpop.f32.mrf.mxu0
        %v2241 = vadd.f32 %v1778, %v2240
        %2242 = vmatprep.mubr.f32.mxu0 0.0
        %2243 = vmatmul.mubr.f32.gmra.mxu0 %v1636
        %v2244 = vpop.f32.mrf.mxu0
        %v2245 = vadd.f32 %v1774, %v2244
        %v2246 = vpop.f32.mrf.mxu0
        %v2247 = vadd.f32 %v1778, %v2246
        %2248 = vmatprep.mubr.f32.mxu0 0.0
        %2249 = vmatmul.mubr.f32.gmra.mxu0 %v1637
        %v2250 = vpop.f32.mrf.mxu0
        %v2251 = vadd.f32 %v1774, %v2250
        %v2252 = vpop.f32.mrf.mxu0
        %v2253 = vadd.f32 %v1778, %v2252
        %2254 = vmatprep.mubr.f32.mxu0 0.0
        %2255 = vmatmul.mubr.f32.gmra.mxu0 %v1638
        %v2256 = vpop.f32.mrf.mxu0
        %v2257 = vadd.f32 %v1774, %v2256
        %v2258 = vpop.f32.mrf.mxu0
        %v2259 = vadd.f32 %v1778, %v2258
        %2260 = vmatprep.mubr.f32.mxu0 0.0
        %2261 = vmatmul.mubr.f32.gmra.mxu0 %v1639
        %v2262 = vpop.f32.mrf.mxu0
        %v2263 = vadd.f32 %v1774, %v2262
        %v2264 = vpop.f32.mrf.mxu0
        %v2265 = vadd.f32 %v1778, %v2264
        %2266 = vmatprep.mubr.f32.mxu0 0.0
        %2267 = vmatmul.mubr.f32.gmra.mxu0 %v1640
        %v2268 = vpop.f32.mrf.mxu0
        %v2269 = vadd.f32 %v1774, %v2268
        %v2270 = vpop.f32.mrf.mxu0
        %v2271 = vadd.f32 %v1778, %v2270
        %2272 = vdwg.mxu0
        %2273 = vmatprep.subr.mxu0 0.0
        %2274 = vmatpush1.msra.mxu0 %v1752
        %2275 = vmatprep.subr.mxu0 0.0
        %2276 = vmatpush1.msra.mxu0 %v1745
        %2277 = vmatprep.subr.mxu0 0.0
        %2278 = vmatpush1.msra.mxu0 %v1738
        %2279 = vmatprep.subr.mxu0 0.0
        %2280 = vmatpush1.msra.mxu0 %v1731
        %2281 = vmatprep.subr.mxu0 0.0
        %2282 = vmatpush1.msra.mxu0 %v1724
        %2283 = vmatprep.subr.mxu0 0.0
        %2284 = vmatpush1.msra.mxu0 %v1717
        %2285 = vmatprep.subr.mxu0 0.0
        %2286 = vmatpush1.msra.mxu0 %v1710
        %2287 = vmatprep.subr.mxu0 0.0
        %2288 = vmatpush1.msra.mxu0 %v1703
        %2289 = vmatprep.subr.mxu0 0.0
        %2290 = vmatpush1.msra.mxu0 %v1696
        %2291 = vmatprep.subr.mxu0 0.0
        %2292 = vmatpush1.msra.mxu0 %v1689
        %2293 = vmatprep.subr.mxu0 0.0
        %2294 = vmatpush1.msra.mxu0 %v1682
        %2295 = vmatprep.subr.mxu0 0.0
        %2296 = vmatpush1.msra.mxu0 %v1675
        %2297 = vmatprep.subr.mxu0 0.0
        %2298 = vmatpush1.msra.mxu0 %v1668
        %2299 = vmatprep.subr.mxu0 0.0
        %2300 = vmatpush1.msra.mxu0 %v1661
        %2301 = vmatprep.subr.mxu0 0.0
        %2302 = vmatpush1.msra.mxu0 %v1654
        %2303 = vmatprep.subr.mxu0 0.0
        %2304 = vmatpush1.msra.mxu0 %v1647
        %2305 = vmatprep.subr.mxu0 0.0
        %2306 = vmatpush2.msra.mxu0 0.0
        %2307 = vmatprep.subr.mxu0 0.0
        %2308 = vmatpush2.msra.mxu0 0.0
        %2309 = vmatprep.subr.mxu0 0.0
        %2310 = vmatpush2.msra.mxu0 0.0
        %2311 = vmatprep.subr.mxu0 0.0
        %2312 = vmatpush2.msra.mxu0 0.0
        %2313 = vmatprep.subr.mxu0 0.0
        %2314 = vmatpush2.msra.mxu0 0.0
        %2315 = vmatprep.subr.mxu0 0.0
        %2316 = vmatpush2.msra.mxu0 0.0
        %2317 = vmatprep.subr.mxu0 0.0
        %2318 = vmatpush2.msra.mxu0 0.0
        %2319 = vmatprep.subr.mxu0 0.0
        %2320 = vmatpush2.msra.mxu0 0.0
        %2321 = vmatprep.subr.mxu0 0.0
        %2322 = vmatpush2.msra.mxu0 0.0
        %2323 = vmatprep.subr.mxu0 0.0
        %2324 = vmatpush2.msra.mxu0 0.0
        %2325 = vmatprep.subr.mxu0 0.0
        %2326 = vmatpush2.msra.mxu0 0.0
        %2327 = vmatprep.subr.mxu0 0.0
        %2328 = vmatpush2.msra.mxu0 0.0
        %2329 = vmatprep.subr.mxu0 0.0
        %2330 = vmatpush2.msra.mxu0 0.0
        %2331 = vmatprep.subr.mxu0 0.0
        %2332 = vmatpush2.msra.mxu0 0.0
        %2333 = vmatprep.subr.mxu0 0.0
        %2334 = vmatpush2.msra.mxu0 0.0
        %2335 = vmatprep.subr.mxu0 0.0
        %2336 = vmatpush2.msra.mxu0 0.0
        %2337 = vmatprep.mubr.f32.mxu0 0.0
        %2338 = vmatmul.mubr.f32.gmra.mxu0 %v1625
        %v2339 = vpop.f32.mrf.mxu0
        %v2340 = vadd.f32 %v1782, %v2339
        %v2341 = vpop.f32.mrf.mxu0
        %2342 = vmatprep.mubr.f32.mxu0 0.0
        %2343 = vmatmul.mubr.f32.gmra.mxu0 %v1626
        %v2344 = vpop.f32.mrf.mxu0
        %v2345 = vadd.f32 %v1782, %v2344
        %v2346 = vpop.f32.mrf.mxu0
        %2347 = vmatprep.mubr.f32.mxu0 0.0
        %2348 = vmatmul.mubr.f32.gmra.mxu0 %v1627
        %v2349 = vpop.f32.mrf.mxu0
        %v2350 = vadd.f32 %v1782, %v2349
        %v2351 = vpop.f32.mrf.mxu0
        %2352 = vmatprep.mubr.f32.mxu0 0.0
        %2353 = vmatmul.mubr.f32.gmra.mxu0 %v1628
        %v2354 = vpop.f32.mrf.mxu0
        %v2355 = vadd.f32 %v1782, %v2354
        %v2356 = vpop.f32.mrf.mxu0
        %2357 = vmatprep.mubr.f32.mxu0 0.0
        %2358 = vmatmul.mubr.f32.gmra.mxu0 %v1629
        %v2359 = vpop.f32.mrf.mxu0
        %v2360 = vadd.f32 %v1782, %v2359
        %v2361 = vpop.f32.mrf.mxu0
        %2362 = vmatprep.mubr.f32.mxu0 0.0
        %2363 = vmatmul.mubr.f32.gmra.mxu0 %v1630
        %v2364 = vpop.f32.mrf.mxu0
        %v2365 = vadd.f32 %v1782, %v2364
        %v2366 = vpop.f32.mrf.mxu0
        %2367 = vmatprep.mubr.f32.mxu0 0.0
        %2368 = vmatmul.mubr.f32.gmra.mxu0 %v1631
        %v2369 = vpop.f32.mrf.mxu0
        %v2370 = vadd.f32 %v1782, %v2369
        %v2371 = vpop.f32.mrf.mxu0
        %2372 = vmatprep.mubr.f32.mxu0 0.0
        %2373 = vmatmul.mubr.f32.gmra.mxu0 %v1632
        %v2374 = vpop.f32.mrf.mxu0
        %v2375 = vadd.f32 %v1782, %v2374
        %v2376 = vpop.f32.mrf.mxu0
        %2377 = vmatprep.mubr.f32.mxu0 0.0
        %2378 = vmatmul.mubr.f32.gmra.mxu0 %v1633
        %v2379 = vpop.f32.mrf.mxu0
        %v2380 = vadd.f32 %v1782, %v2379
        %v2381 = vpop.f32.mrf.mxu0
        %2382 = vmatprep.mubr.f32.mxu0 0.0
        %2383 = vmatmul.mubr.f32.gmra.mxu0 %v1634
        %v2384 = vpop.f32.mrf.mxu0
        %v2385 = vadd.f32 %v1782, %v2384
        %v2386 = vpop.f32.mrf.mxu0
        %2387 = vmatprep.mubr.f32.mxu0 0.0
        %2388 = vmatmul.mubr.f32.gmra.mxu0 %v1635
        %v2389 = vpop.f32.mrf.mxu0
        %v2390 = vadd.f32 %v1782, %v2389
        %v2391 = vpop.f32.mrf.mxu0
        %2392 = vmatprep.mubr.f32.mxu0 0.0
        %2393 = vmatmul.mubr.f32.gmra.mxu0 %v1636
        %v2394 = vpop.f32.mrf.mxu0
        %v2395 = vadd.f32 %v1782, %v2394
        %v2396 = vpop.f32.mrf.mxu0
        %2397 = vmatprep.mubr.f32.mxu0 0.0
        %2398 = vmatmul.mubr.f32.gmra.mxu0 %v1637
        %v2399 = vpop.f32.mrf.mxu0
        %v2400 = vadd.f32 %v1782, %v2399
        %v2401 = vpop.f32.mrf.mxu0
        %2402 = vmatprep.mubr.f32.mxu0 0.0
        %2403 = vmatmul.mubr.f32.gmra.mxu0 %v1638
        %v2404 = vpop.f32.mrf.mxu0
        %v2405 = vadd.f32 %v1782, %v2404
        %v2406 = vpop.f32.mrf.mxu0
        %2407 = vmatprep.mubr.f32.mxu0 0.0
        %2408 = vmatmul.mubr.f32.gmra.mxu0 %v1639
        %v2409 = vpop.f32.mrf.mxu0
        %v2410 = vadd.f32 %v1782, %v2409
        %v2411 = vpop.f32.mrf.mxu0
        %2412 = vmatprep.mubr.f32.mxu0 0.0
        %2413 = vmatmul.mubr.f32.gmra.mxu0 %v1640
        %v2414 = vpop.f32.mrf.mxu0
        %v2415 = vadd.f32 %v1782, %v2414
        %v2416 = vpop.f32.mrf.mxu0
        %2417 = vdwg.mxu0
        %v2418 = vxor.u32 %v1857, 2147483648
        %v2419 = vxor.u32 %v1859, 2147483648
        %v2420 = vxor.u32 %v2018, 2147483648
        %v2421 = vxor.u32 %v2020, 2147483648
        %v2422 = vxor.u32 %v2179, 2147483648
        %v2423 = vxor.u32 %v2181, 2147483648
        %v2424 = vxor.u32 %v2340, 2147483648
        %v2425 = vxor.u32 %v1863, 2147483648
        %v2426 = vxor.u32 %v1865, 2147483648
        %v2427 = vxor.u32 %v2024, 2147483648
        %v2428 = vxor.u32 %v2026, 2147483648
        %v2429 = vxor.u32 %v2185, 2147483648
        %v2430 = vxor.u32 %v2187, 2147483648
        %v2431 = vxor.u32 %v2345, 2147483648
        %v2432 = vxor.u32 %v1869, 2147483648
        %v2433 = vxor.u32 %v1871, 2147483648
        %v2434 = vxor.u32 %v2030, 2147483648
        %v2435 = vxor.u32 %v2032, 2147483648
        %v2436 = vxor.u32 %v2191, 2147483648
        %v2437 = vxor.u32 %v2193, 2147483648
        %v2438 = vxor.u32 %v2350, 2147483648
        %v2439 = vxor.u32 %v1875, 2147483648
        %v2440 = vxor.u32 %v1877, 2147483648
        %v2441 = vxor.u32 %v2036, 2147483648
        %v2442 = vxor.u32 %v2038, 2147483648
        %v2443 = vxor.u32 %v2197, 2147483648
        %v2444 = vxor.u32 %v2199, 2147483648
        %v2445 = vxor.u32 %v2355, 2147483648
        %v2446 = vxor.u32 %v1881, 2147483648
        %v2447 = vxor.u32 %v1883, 2147483648
        %v2448 = vxor.u32 %v2042, 2147483648
        %v2449 = vxor.u32 %v2044, 2147483648
        %v2450 = vxor.u32 %v2203, 2147483648
        %v2451 = vxor.u32 %v2205, 2147483648
        %v2452 = vxor.u32 %v2360, 2147483648
        %v2453 = vxor.u32 %v1887, 2147483648
        %v2454 = vxor.u32 %v1889, 2147483648
        %v2455 = vxor.u32 %v2048, 2147483648
        %v2456 = vxor.u32 %v2050, 2147483648
        %v2457 = vxor.u32 %v2209, 2147483648
        %v2458 = vxor.u32 %v2211, 2147483648
        %v2459 = vxor.u32 %v2365, 2147483648
        %v2460 = vxor.u32 %v1893, 2147483648
        %v2461 = vxor.u32 %v1895, 2147483648
        %v2462 = vxor.u32 %v2054, 2147483648
        %v2463 = vxor.u32 %v2056, 2147483648
        %v2464 = vxor.u32 %v2215, 2147483648
        %v2465 = vxor.u32 %v2217, 2147483648
        %v2466 = vxor.u32 %v2370, 2147483648
        %v2467 = vxor.u32 %v1899, 2147483648
        %v2468 = vxor.u32 %v1901, 2147483648
        %v2469 = vxor.u32 %v2060, 2147483648
        %v2470 = vxor.u32 %v2062, 2147483648
        %v2471 = vxor.u32 %v2221, 2147483648
        %v2472 = vxor.u32 %v2223, 2147483648
        %v2473 = vxor.u32 %v2375, 2147483648
        %v2474 = vxor.u32 %v1905, 2147483648
        %v2475 = vxor.u32 %v1907, 2147483648
        %v2476 = vxor.u32 %v2066, 2147483648
        %v2477 = vxor.u32 %v2068, 2147483648
        %v2478 = vxor.u32 %v2227, 2147483648
        %v2479 = vxor.u32 %v2229, 2147483648
        %v2480 = vxor.u32 %v2380, 2147483648
        %v2481 = vxor.u32 %v1911, 2147483648
        %v2482 = vxor.u32 %v1913, 2147483648
        %v2483 = vxor.u32 %v2072, 2147483648
        %v2484 = vxor.u32 %v2074, 2147483648
        %v2485 = vxor.u32 %v2233, 2147483648
        %v2486 = vxor.u32 %v2235, 2147483648
        %v2487 = vxor.u32 %v2385, 2147483648
        %v2488 = vxor.u32 %v1917, 2147483648
        %v2489 = vxor.u32 %v1919, 2147483648
        %v2490 = vxor.u32 %v2078, 2147483648
        %v2491 = vxor.u32 %v2080, 2147483648
        %v2492 = vxor.u32 %v2239, 2147483648
        %v2493 = vxor.u32 %v2241, 2147483648
        %v2494 = vxor.u32 %v2390, 2147483648
        %v2495 = vxor.u32 %v1923, 2147483648
        %v2496 = vxor.u32 %v1925, 2147483648
        %v2497 = vxor.u32 %v2084, 2147483648
        %v2498 = vxor.u32 %v2086, 2147483648
        %v2499 = vxor.u32 %v2245, 2147483648
        %v2500 = vxor.u32 %v2247, 2147483648
        %v2501 = vxor.u32 %v2395, 2147483648
        %v2502 = vxor.u32 %v1929, 2147483648
        %v2503 = vxor.u32 %v1931, 2147483648
        %v2504 = vxor.u32 %v2090, 2147483648
        %v2505 = vxor.u32 %v2092, 2147483648
        %v2506 = vxor.u32 %v2251, 2147483648
        %v2507 = vxor.u32 %v2253, 2147483648
        %v2508 = vxor.u32 %v2400, 2147483648
        %v2509 = vxor.u32 %v1935, 2147483648
        %v2510 = vxor.u32 %v1937, 2147483648
        %v2511 = vxor.u32 %v2096, 2147483648
        %v2512 = vxor.u32 %v2098, 2147483648
        %v2513 = vxor.u32 %v2257, 2147483648
        %v2514 = vxor.u32 %v2259, 2147483648
        %v2515 = vxor.u32 %v2405, 2147483648
        %v2516 = vxor.u32 %v1941, 2147483648
        %v2517 = vxor.u32 %v1943, 2147483648
        %v2518 = vxor.u32 %v2102, 2147483648
        %v2519 = vxor.u32 %v2104, 2147483648
        %v2520 = vxor.u32 %v2263, 2147483648
        %v2521 = vxor.u32 %v2265, 2147483648
        %v2522 = vxor.u32 %v2410, 2147483648
        %v2523 = vxor.u32 %v1947, 2147483648
        %v2524 = vxor.u32 %v1949, 2147483648
        %v2525 = vxor.u32 %v2108, 2147483648
        %v2526 = vxor.u32 %v2110, 2147483648
        %v2527 = vxor.u32 %v2269, 2147483648
        %v2528 = vxor.u32 %v2271, 2147483648
        %v2529 = vxor.u32 %v2415, 2147483648
        %v2530 = vmul.f32 %v2418, 1.442695
        %v2531 = vpow.pop %v2530
        %v2532 = vmul.f32 %v2419, 1.442695
        %v2533 = vpow.pop %v2532
        %v2534 = vmul.f32 %v2420, 1.442695
        %v2535 = vpow.pop %v2534
        %v2536 = vmul.f32 %v2421, 1.442695
        %v2537 = vpow.pop %v2536
        %v2538 = vmul.f32 %v2422, 1.442695
        %v2539 = vpow.pop %v2538
        %v2540 = vmul.f32 %v2423, 1.442695
        %v2541 = vpow.pop %v2540
        %v2542 = vmul.f32 %v2424, 1.442695
        %v2543 = vpow.pop %v2542
        %v2544 = vmul.f32 %v2425, 1.442695
        %v2545 = vpow.pop %v2544
        %v2546 = vmul.f32 %v2426, 1.442695
        %v2547 = vpow.pop %v2546
        %v2548 = vmul.f32 %v2427, 1.442695
        %v2549 = vpow.pop %v2548
        %v2550 = vmul.f32 %v2428, 1.442695
        %v2551 = vpow.pop %v2550
        %v2552 = vmul.f32 %v2429, 1.442695
        %v2553 = vpow.pop %v2552
        %v2554 = vmul.f32 %v2430, 1.442695
        %v2555 = vpow.pop %v2554
        %v2556 = vmul.f32 %v2431, 1.442695
        %v2557 = vpow.pop %v2556
        %v2558 = vmul.f32 %v2432, 1.442695
        %v2559 = vpow.pop %v2558
        %v2560 = vmul.f32 %v2433, 1.442695
        %v2561 = vpow.pop %v2560
        %v2562 = vmul.f32 %v2434, 1.442695
        %v2563 = vpow.pop %v2562
        %v2564 = vmul.f32 %v2435, 1.442695
        %v2565 = vpow.pop %v2564
        %v2566 = vmul.f32 %v2436, 1.442695
        %v2567 = vpow.pop %v2566
        %v2568 = vmul.f32 %v2437, 1.442695
        %v2569 = vpow.pop %v2568
        %v2570 = vmul.f32 %v2438, 1.442695
        %v2571 = vpow.pop %v2570
        %v2572 = vmul.f32 %v2439, 1.442695
        %v2573 = vpow.pop %v2572
        %v2574 = vmul.f32 %v2440, 1.442695
        %v2575 = vpow.pop %v2574
        %v2576 = vmul.f32 %v2441, 1.442695
        %v2577 = vpow.pop %v2576
        %v2578 = vmul.f32 %v2442, 1.442695
        %v2579 = vpow.pop %v2578
        %v2580 = vmul.f32 %v2443, 1.442695
        %v2581 = vpow.pop %v2580
        %v2582 = vmul.f32 %v2444, 1.442695
        %v2583 = vpow.pop %v2582
        %v2584 = vmul.f32 %v2445, 1.442695
        %v2585 = vpow.pop %v2584
        %v2586 = vmul.f32 %v2446, 1.442695
        %v2587 = vpow.pop %v2586
        %v2588 = vmul.f32 %v2447, 1.442695
        %v2589 = vpow.pop %v2588
        %v2590 = vmul.f32 %v2448, 1.442695
        %v2591 = vpow.pop %v2590
        %v2592 = vmul.f32 %v2449, 1.442695
        %v2593 = vpow.pop %v2592
        %v2594 = vmul.f32 %v2450, 1.442695
        %v2595 = vpow.pop %v2594
        %v2596 = vmul.f32 %v2451, 1.442695
        %v2597 = vpow.pop %v2596
        %v2598 = vmul.f32 %v2452, 1.442695
        %v2599 = vpow.pop %v2598
        %v2600 = vmul.f32 %v2453, 1.442695
        %v2601 = vpow.pop %v2600
        %v2602 = vmul.f32 %v2454, 1.442695
        %v2603 = vpow.pop %v2602
        %v2604 = vmul.f32 %v2455, 1.442695
        %v2605 = vpow.pop %v2604
        %v2606 = vmul.f32 %v2456, 1.442695
        %v2607 = vpow.pop %v2606
        %v2608 = vmul.f32 %v2457, 1.442695
        %v2609 = vpow.pop %v2608
        %v2610 = vmul.f32 %v2458, 1.442695
        %v2611 = vpow.pop %v2610
        %v2612 = vmul.f32 %v2459, 1.442695
        %v2613 = vpow.pop %v2612
        %v2614 = vmul.f32 %v2460, 1.442695
        %v2615 = vpow.pop %v2614
        %v2616 = vmul.f32 %v2461, 1.442695
        %v2617 = vpow.pop %v2616
        %v2618 = vmul.f32 %v2462, 1.442695
        %v2619 = vpow.pop %v2618
        %v2620 = vmul.f32 %v2463, 1.442695
        %v2621 = vpow.pop %v2620
        %v2622 = vmul.f32 %v2464, 1.442695
        %v2623 = vpow.pop %v2622
        %v2624 = vmul.f32 %v2465, 1.442695
        %v2625 = vpow.pop %v2624
        %v2626 = vmul.f32 %v2466, 1.442695
        %v2627 = vpow.pop %v2626
        %v2628 = vmul.f32 %v2467, 1.442695
        %v2629 = vpow.pop %v2628
        %v2630 = vmul.f32 %v2468, 1.442695
        %v2631 = vpow.pop %v2630
        %v2632 = vmul.f32 %v2469, 1.442695
        %v2633 = vpow.pop %v2632
        %v2634 = vmul.f32 %v2470, 1.442695
        %v2635 = vpow.pop %v2634
        %v2636 = vmul.f32 %v2471, 1.442695
        %v2637 = vpow.pop %v2636
        %v2638 = vmul.f32 %v2472, 1.442695
        %v2639 = vpow.pop %v2638
        %v2640 = vmul.f32 %v2473, 1.442695
        %v2641 = vpow.pop %v2640
        %v2642 = vmul.f32 %v2474, 1.442695
        %v2643 = vpow.pop %v2642
        %v2644 = vmul.f32 %v2475, 1.442695
        %v2645 = vpow.pop %v2644
        %v2646 = vmul.f32 %v2476, 1.442695
        %v2647 = vpow.pop %v2646
        %v2648 = vmul.f32 %v2477, 1.442695
        %v2649 = vpow.pop %v2648
        %v2650 = vmul.f32 %v2478, 1.442695
        %v2651 = vpow.pop %v2650
        %v2652 = vmul.f32 %v2479, 1.442695
        %v2653 = vpow.pop %v2652
        %v2654 = vmul.f32 %v2480, 1.442695
        %v2655 = vpow.pop %v2654
        %v2656 = vmul.f32 %v2481, 1.442695
        %v2657 = vpow.pop %v2656
        %v2658 = vmul.f32 %v2482, 1.442695
        %v2659 = vpow.pop %v2658
        %v2660 = vmul.f32 %v2483, 1.442695
        %v2661 = vpow.pop %v2660
        %v2662 = vmul.f32 %v2484, 1.442695
        %v2663 = vpow.pop %v2662
        %v2664 = vmul.f32 %v2485, 1.442695
        %v2665 = vpow.pop %v2664
        %v2666 = vmul.f32 %v2486, 1.442695
        %v2667 = vpow.pop %v2666
        %v2668 = vmul.f32 %v2487, 1.442695
        %v2669 = vpow.pop %v2668
        %v2670 = vmul.f32 %v2488, 1.442695
        %v2671 = vpow.pop %v2670
        %v2672 = vmul.f32 %v2489, 1.442695
        %v2673 = vpow.pop %v2672
        %v2674 = vmul.f32 %v2490, 1.442695
        %v2675 = vpow.pop %v2674
        %v2676 = vmul.f32 %v2491, 1.442695
        %v2677 = vpow.pop %v2676
        %v2678 = vmul.f32 %v2492, 1.442695
        %v2679 = vpow.pop %v2678
        %v2680 = vmul.f32 %v2493, 1.442695
        %v2681 = vpow.pop %v2680
        %v2682 = vmul.f32 %v2494, 1.442695
        %v2683 = vpow.pop %v2682
        %v2684 = vmul.f32 %v2495, 1.442695
        %v2685 = vpow.pop %v2684
        %v2686 = vmul.f32 %v2496, 1.442695
        %v2687 = vpow.pop %v2686
        %v2688 = vmul.f32 %v2497, 1.442695
        %v2689 = vpow.pop %v2688
        %v2690 = vmul.f32 %v2498, 1.442695
        %v2691 = vpow.pop %v2690
        %v2692 = vmul.f32 %v2499, 1.442695
        %v2693 = vpow.pop %v2692
        %v2694 = vmul.f32 %v2500, 1.442695
        %v2695 = vpow.pop %v2694
        %v2696 = vmul.f32 %v2501, 1.442695
        %v2697 = vpow.pop %v2696
        %v2698 = vmul.f32 %v2502, 1.442695
        %v2699 = vpow.pop %v2698
        %v2700 = vmul.f32 %v2503, 1.442695
        %v2701 = vpow.pop %v2700
        %v2702 = vmul.f32 %v2504, 1.442695
        %v2703 = vpow.pop %v2702
        %v2704 = vmul.f32 %v2505, 1.442695
        %v2705 = vpow.pop %v2704
        %v2706 = vmul.f32 %v2506, 1.442695
        %v2707 = vpow.pop %v2706
        %v2708 = vmul.f32 %v2507, 1.442695
        %v2709 = vpow.pop %v2708
        %v2710 = vmul.f32 %v2508, 1.442695
        %v2711 = vpow.pop %v2710
        %v2712 = vmul.f32 %v2509, 1.442695
        %v2713 = vpow.pop %v2712
        %v2714 = vmul.f32 %v2510, 1.442695
        %v2715 = vpow.pop %v2714
        %v2716 = vmul.f32 %v2511, 1.442695
        %v2717 = vpow.pop %v2716
        %v2718 = vmul.f32 %v2512, 1.442695
        %v2719 = vpow.pop %v2718
        %v2720 = vmul.f32 %v2513, 1.442695
        %v2721 = vpow.pop %v2720
        %v2722 = vmul.f32 %v2514, 1.442695
        %v2723 = vpow.pop %v2722
        %v2724 = vmul.f32 %v2515, 1.442695
        %v2725 = vpow.pop %v2724
        %v2726 = vmul.f32 %v2516, 1.442695
        %v2727 = vpow.pop %v2726
        %v2728 = vmul.f32 %v2517, 1.442695
        %v2729 = vpow.pop %v2728
        %v2730 = vmul.f32 %v2518, 1.442695
        %v2731 = vpow.pop %v2730
        %v2732 = vmul.f32 %v2519, 1.442695
        %v2733 = vpow.pop %v2732
        %v2734 = vmul.f32 %v2520, 1.442695
        %v2735 = vpow.pop %v2734
        %v2736 = vmul.f32 %v2521, 1.442695
        %v2737 = vpow.pop %v2736
        %v2738 = vmul.f32 %v2522, 1.442695
        %v2739 = vpow.pop %v2738
        %v2740 = vmul.f32 %v2523, 1.442695
        %v2741 = vpow.pop %v2740
        %v2742 = vmul.f32 %v2524, 1.442695
        %v2743 = vpow.pop %v2742
        %v2744 = vmul.f32 %v2525, 1.442695
        %v2745 = vpow.pop %v2744
        %v2746 = vmul.f32 %v2526, 1.442695
        %v2747 = vpow.pop %v2746
        %v2748 = vmul.f32 %v2527, 1.442695
        %v2749 = vpow.pop %v2748
        %v2750 = vmul.f32 %v2528, 1.442695
        %v2751 = vpow.pop %v2750
        %v2752 = vmul.f32 %v2529, 1.442695
        %v2753 = vpow.pop %v2752
        %v2754 = vadd.f32 %v2531, 1.0
        %v2755 = vadd.f32 %v2533, 1.0
        %v2756 = vadd.f32 %v2535, 1.0
        %v2757 = vadd.f32 %v2537, 1.0
        %v2758 = vadd.f32 %v2539, 1.0
        %v2759 = vadd.f32 %v2541, 1.0
        %v2760 = vadd.f32 %v2543, 1.0
        %v2761 = vadd.f32 %v2545, 1.0
        %v2762 = vadd.f32 %v2547, 1.0
        %v2763 = vadd.f32 %v2549, 1.0
        %v2764 = vadd.f32 %v2551, 1.0
        %v2765 = vadd.f32 %v2553, 1.0
        %v2766 = vadd.f32 %v2555, 1.0
        %v2767 = vadd.f32 %v2557, 1.0
        %v2768 = vadd.f32 %v2559, 1.0
        %v2769 = vadd.f32 %v2561, 1.0
        %v2770 = vadd.f32 %v2563, 1.0
        %v2771 = vadd.f32 %v2565, 1.0
        %v2772 = vadd.f32 %v2567, 1.0
        %v2773 = vadd.f32 %v2569, 1.0
        %v2774 = vadd.f32 %v2571, 1.0
        %v2775 = vadd.f32 %v2573, 1.0
        %v2776 = vadd.f32 %v2575, 1.0
        %v2777 = vadd.f32 %v2577, 1.0
        %v2778 = vadd.f32 %v2579, 1.0
        %v2779 = vadd.f32 %v2581, 1.0
        %v2780 = vadd.f32 %v2583, 1.0
        %v2781 = vadd.f32 %v2585, 1.0
        %v2782 = vadd.f32 %v2587, 1.0
        %v2783 = vadd.f32 %v2589, 1.0
        %v2784 = vadd.f32 %v2591, 1.0
        %v2785 = vadd.f32 %v2593, 1.0
        %v2786 = vadd.f32 %v2595, 1.0
        %v2787 = vadd.f32 %v2597, 1.0
        %v2788 = vadd.f32 %v2599, 1.0
        %v2789 = vadd.f32 %v2601, 1.0
        %v2790 = vadd.f32 %v2603, 1.0
        %v2791 = vadd.f32 %v2605, 1.0
        %v2792 = vadd.f32 %v2607, 1.0
        %v2793 = vadd.f32 %v2609, 1.0
        %v2794 = vadd.f32 %v2611, 1.0
        %v2795 = vadd.f32 %v2613, 1.0
        %v2796 = vadd.f32 %v2615, 1.0
        %v2797 = vadd.f32 %v2617, 1.0
        %v2798 = vadd.f32 %v2619, 1.0
        %v2799 = vadd.f32 %v2621, 1.0
        %v2800 = vadd.f32 %v2623, 1.0
        %v2801 = vadd.f32 %v2625, 1.0
        %v2802 = vadd.f32 %v2627, 1.0
        %v2803 = vadd.f32 %v2629, 1.0
        %v2804 = vadd.f32 %v2631, 1.0
        %v2805 = vadd.f32 %v2633, 1.0
        %v2806 = vadd.f32 %v2635, 1.0
        %v2807 = vadd.f32 %v2637, 1.0
        %v2808 = vadd.f32 %v2639, 1.0
        %v2809 = vadd.f32 %v2641, 1.0
        %v2810 = vadd.f32 %v2643, 1.0
        %v2811 = vadd.f32 %v2645, 1.0
        %v2812 = vadd.f32 %v2647, 1.0
        %v2813 = vadd.f32 %v2649, 1.0
        %v2814 = vadd.f32 %v2651, 1.0
        %v2815 = vadd.f32 %v2653, 1.0
        %v2816 = vadd.f32 %v2655, 1.0
        %v2817 = vadd.f32 %v2657, 1.0
        %v2818 = vadd.f32 %v2659, 1.0
        %v2819 = vadd.f32 %v2661, 1.0
        %v2820 = vadd.f32 %v2663, 1.0
        %v2821 = vadd.f32 %v2665, 1.0
        %v2822 = vadd.f32 %v2667, 1.0
        %v2823 = vadd.f32 %v2669, 1.0
        %v2824 = vadd.f32 %v2671, 1.0
        %v2825 = vadd.f32 %v2673, 1.0
        %v2826 = vadd.f32 %v2675, 1.0
        %v2827 = vadd.f32 %v2677, 1.0
        %v2828 = vadd.f32 %v2679, 1.0
        %v2829 = vadd.f32 %v2681, 1.0
        %v2830 = vadd.f32 %v2683, 1.0
        %v2831 = vadd.f32 %v2685, 1.0
        %v2832 = vadd.f32 %v2687, 1.0
        %v2833 = vadd.f32 %v2689, 1.0
        %v2834 = vadd.f32 %v2691, 1.0
        %v2835 = vadd.f32 %v2693, 1.0
        %v2836 = vadd.f32 %v2695, 1.0
        %v2837 = vadd.f32 %v2697, 1.0
        %v2838 = vadd.f32 %v2699, 1.0
        %v2839 = vadd.f32 %v2701, 1.0
        %v2840 = vadd.f32 %v2703, 1.0
        %v2841 = vadd.f32 %v2705, 1.0
        %v2842 = vadd.f32 %v2707, 1.0
        %v2843 = vadd.f32 %v2709, 1.0
        %v2844 = vadd.f32 %v2711, 1.0
        %v2845 = vadd.f32 %v2713, 1.0
        %v2846 = vadd.f32 %v2715, 1.0
        %v2847 = vadd.f32 %v2717, 1.0
        %v2848 = vadd.f32 %v2719, 1.0
        %v2849 = vadd.f32 %v2721, 1.0
        %v2850 = vadd.f32 %v2723, 1.0
        %v2851 = vadd.f32 %v2725, 1.0
        %v2852 = vadd.f32 %v2727, 1.0
        %v2853 = vadd.f32 %v2729, 1.0
        %v2854 = vadd.f32 %v2731, 1.0
        %v2855 = vadd.f32 %v2733, 1.0
        %v2856 = vadd.f32 %v2735, 1.0
        %v2857 = vadd.f32 %v2737, 1.0
        %v2858 = vadd.f32 %v2739, 1.0
        %v2859 = vadd.f32 %v2741, 1.0
        %v2860 = vadd.f32 %v2743, 1.0
        %v2861 = vadd.f32 %v2745, 1.0
        %v2862 = vadd.f32 %v2747, 1.0
        %v2863 = vadd.f32 %v2749, 1.0
        %v2864 = vadd.f32 %v2751, 1.0
        %v2865 = vadd.f32 %v2753, 1.0
        %v2866 = vrcp.pop %v2754
        %v2867 = vmul.f32 1.0, %v2866
        %v2868 = vrcp.pop %v2755
        %v2869 = vmul.f32 1.0, %v2868
        %v2870 = vrcp.pop %v2756
        %v2871 = vmul.f32 1.0, %v2870
        %v2872 = vrcp.pop %v2757
        %v2873 = vmul.f32 1.0, %v2872
        %v2874 = vrcp.pop %v2758
        %v2875 = vmul.f32 1.0, %v2874
        %v2876 = vrcp.pop %v2759
        %v2877 = vmul.f32 1.0, %v2876
        %v2878 = vrcp.pop %v2760
        %v2879 = vmul.f32 1.0, %v2878
        %v2880 = vrcp.pop %v2761
        %v2881 = vmul.f32 1.0, %v2880
        %v2882 = vrcp.pop %v2762
        %v2883 = vmul.f32 1.0, %v2882
        %v2884 = vrcp.pop %v2763
        %v2885 = vmul.f32 1.0, %v2884
        %v2886 = vrcp.pop %v2764
        %v2887 = vmul.f32 1.0, %v2886
        %v2888 = vrcp.pop %v2765
        %v2889 = vmul.f32 1.0, %v2888
        %v2890 = vrcp.pop %v2766
        %v2891 = vmul.f32 1.0, %v2890
        %v2892 = vrcp.pop %v2767
        %v2893 = vmul.f32 1.0, %v2892
        %v2894 = vrcp.pop %v2768
        %v2895 = vmul.f32 1.0, %v2894
        %v2896 = vrcp.pop %v2769
        %v2897 = vmul.f32 1.0, %v2896
        %v2898 = vrcp.pop %v2770
        %v2899 = vmul.f32 1.0, %v2898
        %v2900 = vrcp.pop %v2771
        %v2901 = vmul.f32 1.0, %v2900
        %v2902 = vrcp.pop %v2772
        %v2903 = vmul.f32 1.0, %v2902
        %v2904 = vrcp.pop %v2773
        %v2905 = vmul.f32 1.0, %v2904
        %v2906 = vrcp.pop %v2774
        %v2907 = vmul.f32 1.0, %v2906
        %v2908 = vrcp.pop %v2775
        %v2909 = vmul.f32 1.0, %v2908
        %v2910 = vrcp.pop %v2776
        %v2911 = vmul.f32 1.0, %v2910
        %v2912 = vrcp.pop %v2777
        %v2913 = vmul.f32 1.0, %v2912
        %v2914 = vrcp.pop %v2778
        %v2915 = vmul.f32 1.0, %v2914
        %v2916 = vrcp.pop %v2779
        %v2917 = vmul.f32 1.0, %v2916
        %v2918 = vrcp.pop %v2780
        %v2919 = vmul.f32 1.0, %v2918
        %v2920 = vrcp.pop %v2781
        %v2921 = vmul.f32 1.0, %v2920
        %v2922 = vrcp.pop %v2782
        %v2923 = vmul.f32 1.0, %v2922
        %v2924 = vrcp.pop %v2783
        %v2925 = vmul.f32 1.0, %v2924
        %v2926 = vrcp.pop %v2784
        %v2927 = vmul.f32 1.0, %v2926
        %v2928 = vrcp.pop %v2785
        %v2929 = vmul.f32 1.0, %v2928
        %v2930 = vrcp.pop %v2786
        %v2931 = vmul.f32 1.0, %v2930
        %v2932 = vrcp.pop %v2787
        %v2933 = vmul.f32 1.0, %v2932
        %v2934 = vrcp.pop %v2788
        %v2935 = vmul.f32 1.0, %v2934
        %v2936 = vrcp.pop %v2789
        %v2937 = vmul.f32 1.0, %v2936
        %v2938 = vrcp.pop %v2790
        %v2939 = vmul.f32 1.0, %v2938
        %v2940 = vrcp.pop %v2791
        %v2941 = vmul.f32 1.0, %v2940
        %v2942 = vrcp.pop %v2792
        %v2943 = vmul.f32 1.0, %v2942
        %v2944 = vrcp.pop %v2793
        %v2945 = vmul.f32 1.0, %v2944
        %v2946 = vrcp.pop %v2794
        %v2947 = vmul.f32 1.0, %v2946
        %v2948 = vrcp.pop %v2795
        %v2949 = vmul.f32 1.0, %v2948
        %v2950 = vrcp.pop %v2796
        %v2951 = vmul.f32 1.0, %v2950
        %v2952 = vrcp.pop %v2797
        %v2953 = vmul.f32 1.0, %v2952
        %v2954 = vrcp.pop %v2798
        %v2955 = vmul.f32 1.0, %v2954
        %v2956 = vrcp.pop %v2799
        %v2957 = vmul.f32 1.0, %v2956
        %v2958 = vrcp.pop %v2800
        %v2959 = vmul.f32 1.0, %v2958
        %v2960 = vrcp.pop %v2801
        %v2961 = vmul.f32 1.0, %v2960
        %v2962 = vrcp.pop %v2802
        %v2963 = vmul.f32 1.0, %v2962
        %v2964 = vrcp.pop %v2803
        %v2965 = vmul.f32 1.0, %v2964
        %v2966 = vrcp.pop %v2804
        %v2967 = vmul.f32 1.0, %v2966
        %v2968 = vrcp.pop %v2805
        %v2969 = vmul.f32 1.0, %v2968
        %v2970 = vrcp.pop %v2806
        %v2971 = vmul.f32 1.0, %v2970
        %v2972 = vrcp.pop %v2807
        %v2973 = vmul.f32 1.0, %v2972
        %v2974 = vrcp.pop %v2808
        %v2975 = vmul.f32 1.0, %v2974
        %v2976 = vrcp.pop %v2809
        %v2977 = vmul.f32 1.0, %v2976
        %v2978 = vrcp.pop %v2810
        %v2979 = vmul.f32 1.0, %v2978
        %v2980 = vrcp.pop %v2811
        %v2981 = vmul.f32 1.0, %v2980
        %v2982 = vrcp.pop %v2812
        %v2983 = vmul.f32 1.0, %v2982
        %v2984 = vrcp.pop %v2813
        %v2985 = vmul.f32 1.0, %v2984
        %v2986 = vrcp.pop %v2814
        %v2987 = vmul.f32 1.0, %v2986
        %v2988 = vrcp.pop %v2815
        %v2989 = vmul.f32 1.0, %v2988
        %v2990 = vrcp.pop %v2816
        %v2991 = vmul.f32 1.0, %v2990
        %v2992 = vrcp.pop %v2817
        %v2993 = vmul.f32 1.0, %v2992
        %v2994 = vrcp.pop %v2818
        %v2995 = vmul.f32 1.0, %v2994
        %v2996 = vrcp.pop %v2819
        %v2997 = vmul.f32 1.0, %v2996
        %v2998 = vrcp.pop %v2820
        %v2999 = vmul.f32 1.0, %v2998
        %v3000 = vrcp.pop %v2821
        %v3001 = vmul.f32 1.0, %v3000
        %v3002 = vrcp.pop %v2822
        %v3003 = vmul.f32 1.0, %v3002
        %v3004 = vrcp.pop %v2823
        %v3005 = vmul.f32 1.0, %v3004
        %v3006 = vrcp.pop %v2824
        %v3007 = vmul.f32 1.0, %v3006
        %v3008 = vrcp.pop %v2825
        %v3009 = vmul.f32 1.0, %v3008
        %v3010 = vrcp.pop %v2826
        %v3011 = vmul.f32 1.0, %v3010
        %v3012 = vrcp.pop %v2827
        %v3013 = vmul.f32 1.0, %v3012
        %v3014 = vrcp.pop %v2828
        %v3015 = vmul.f32 1.0, %v3014
        %v3016 = vrcp.pop %v2829
        %v3017 = vmul.f32 1.0, %v3016
        %v3018 = vrcp.pop %v2830
        %v3019 = vmul.f32 1.0, %v3018
        %v3020 = vrcp.pop %v2831
        %v3021 = vmul.f32 1.0, %v3020
        %v3022 = vrcp.pop %v2832
        %v3023 = vmul.f32 1.0, %v3022
        %v3024 = vrcp.pop %v2833
        %v3025 = vmul.f32 1.0, %v3024
        %v3026 = vrcp.pop %v2834
        %v3027 = vmul.f32 1.0, %v3026
        %v3028 = vrcp.pop %v2835
        %v3029 = vmul.f32 1.0, %v3028
        %v3030 = vrcp.pop %v2836
        %v3031 = vmul.f32 1.0, %v3030
        %v3032 = vrcp.pop %v2837
        %v3033 = vmul.f32 1.0, %v3032
        %v3034 = vrcp.pop %v2838
        %v3035 = vmul.f32 1.0, %v3034
        %v3036 = vrcp.pop %v2839
        %v3037 = vmul.f32 1.0, %v3036
        %v3038 = vrcp.pop %v2840
        %v3039 = vmul.f32 1.0, %v3038
        %v3040 = vrcp.pop %v2841
        %v3041 = vmul.f32 1.0, %v3040
        %v3042 = vrcp.pop %v2842
        %v3043 = vmul.f32 1.0, %v3042
        %v3044 = vrcp.pop %v2843
        %v3045 = vmul.f32 1.0, %v3044
        %v3046 = vrcp.pop %v2844
        %v3047 = vmul.f32 1.0, %v3046
        %v3048 = vrcp.pop %v2845
        %v3049 = vmul.f32 1.0, %v3048
        %v3050 = vrcp.pop %v2846
        %v3051 = vmul.f32 1.0, %v3050
        %v3052 = vrcp.pop %v2847
        %v3053 = vmul.f32 1.0, %v3052
        %v3054 = vrcp.pop %v2848
        %v3055 = vmul.f32 1.0, %v3054
        %v3056 = vrcp.pop %v2849
        %v3057 = vmul.f32 1.0, %v3056
        %v3058 = vrcp.pop %v2850
        %v3059 = vmul.f32 1.0, %v3058
        %v3060 = vrcp.pop %v2851
        %v3061 = vmul.f32 1.0, %v3060
        %v3062 = vrcp.pop %v2852
        %v3063 = vmul.f32 1.0, %v3062
        %v3064 = vrcp.pop %v2853
        %v3065 = vmul.f32 1.0, %v3064
        %v3066 = vrcp.pop %v2854
        %v3067 = vmul.f32 1.0, %v3066
        %v3068 = vrcp.pop %v2855
        %v3069 = vmul.f32 1.0, %v3068
        %v3070 = vrcp.pop %v2856
        %v3071 = vmul.f32 1.0, %v3070
        %v3072 = vrcp.pop %v2857
        %v3073 = vmul.f32 1.0, %v3072
        %v3074 = vrcp.pop %v2858
        %v3075 = vmul.f32 1.0, %v3074
        %v3076 = vrcp.pop %v2859
        %v3077 = vmul.f32 1.0, %v3076
        %v3078 = vrcp.pop %v2860
        %v3079 = vmul.f32 1.0, %v3078
        %v3080 = vrcp.pop %v2861
        %v3081 = vmul.f32 1.0, %v3080
        %v3082 = vrcp.pop %v2862
        %v3083 = vmul.f32 1.0, %v3082
        %v3084 = vrcp.pop %v2863
        %v3085 = vmul.f32 1.0, %v3084
        %v3086 = vrcp.pop %v2864
        %v3087 = vmul.f32 1.0, %v3086
        %v3088 = vrcp.pop %v2865
        %v3089 = vmul.f32 1.0, %v3088
        %3090 = vst [vmem:[%s459] sm:$0xff] %v2867
        %3091 = vst [vmem:[%s459 + $0x8] sm:$0xff] %v2869
        %3092 = vst [vmem:[%s459 + $0x10] sm:$0xff] %v2871
        %3093 = vst [vmem:[%s459 + $0x18] sm:$0xff] %v2873
        %3094 = vst [vmem:[%s459 + $0x20] sm:$0xff] %v2875
        %3095 = vst [vmem:[%s459 + $0x28] sm:$0xff] %v2877
        %3096 = vst [vmem:[%s459 + $0x30] sm:$0xff] %v2879
        %3097 = vst [vmem:[%s459 + $0x38] sm:$0xff] %v2881
        %3098 = vst [vmem:[%s459 + $0x40] sm:$0xff] %v2883
        %3099 = vst [vmem:[%s459 + $0x48] sm:$0xff] %v2885
        %3100 = vst [vmem:[%s459 + $0x50] sm:$0xff] %v2887
        %3101 = vst [vmem:[%s459 + $0x58] sm:$0xff] %v2889
        %3102 = vst [vmem:[%s459 + $0x60] sm:$0xff] %v2891
        %3103 = vst [vmem:[%s459 + $0x68] sm:$0xff] %v2893
        %3104 = vst [vmem:[%s459 + $0x70] sm:$0xff] %v2895
        %3105 = vst [vmem:[%s459 + $0x78] sm:$0xff] %v2897
        %3106 = vst [vmem:[%s459 + $0x80] sm:$0xff] %v2899
        %3107 = vst [vmem:[%s459 + $0x88] sm:$0xff] %v2901
        %3108 = vst [vmem:[%s459 + $0x90] sm:$0xff] %v2903
        %3109 = vst [vmem:[%s459 + $0x98] sm:$0xff] %v2905
        %3110 = vst [vmem:[%s459 + $0xa0] sm:$0xff] %v2907
        %3111 = vst [vmem:[%s459 + $0xa8] sm:$0xff] %v2909
        %3112 = vst [vmem:[%s459 + $0xb0] sm:$0xff] %v2911
        %3113 = vst [vmem:[%s459 + $0xb8] sm:$0xff] %v2913
        %3114 = vst [vmem:[%s459 + $0xc0] sm:$0xff] %v2915
        %3115 = vst [vmem:[%s459 + $0xc8] sm:$0xff] %v2917
        %3116 = vst [vmem:[%s459 + $0xd0] sm:$0xff] %v2919
        %3117 = vst [vmem:[%s459 + $0xd8] sm:$0xff] %v2921
        %3118 = vst [vmem:[%s459 + $0xe0] sm:$0xff] %v2923
        %3119 = vst [vmem:[%s459 + $0xe8] sm:$0xff] %v2925
        %3120 = vst [vmem:[%s459 + $0xf0] sm:$0xff] %v2927
        %3121 = vst [vmem:[%s459 + $0xf8] sm:$0xff] %v2929
        %3122 = vst [vmem:[%s459 + $0x100] sm:$0xff] %v2931
        %3123 = vst [vmem:[%s459 + $0x108] sm:$0xff] %v2933
        %3124 = vst [vmem:[%s459 + $0x110] sm:$0xff] %v2935
        %3125 = vst [vmem:[%s459 + $0x118] sm:$0xff] %v2937
        %3126 = vst [vmem:[%s459 + $0x120] sm:$0xff] %v2939
        %3127 = vst [vmem:[%s459 + $0x128] sm:$0xff] %v2941
        %3128 = vst [vmem:[%s459 + $0x130] sm:$0xff] %v2943
        %3129 = vst [vmem:[%s459 + $0x138] sm:$0xff] %v2945
        %3130 = vst [vmem:[%s459 + $0x140] sm:$0xff] %v2947
        %3131 = vst [vmem:[%s459 + $0x148] sm:$0xff] %v2949
        %3132 = vst [vmem:[%s459 + $0x150] sm:$0xff] %v2951
        %3133 = vst [vmem:[%s459 + $0x158] sm:$0xff] %v2953
        %3134 = vst [vmem:[%s459 + $0x160] sm:$0xff] %v2955
        %3135 = vst [vmem:[%s459 + $0x168] sm:$0xff] %v2957
        %3136 = vst [vmem:[%s459 + $0x170] sm:$0xff] %v2959
        %3137 = vst [vmem:[%s459 + $0x178] sm:$0xff] %v2961
        %3138 = vst [vmem:[%s459 + $0x180] sm:$0xff] %v2963
        %3139 = vst [vmem:[%s459 + $0x188] sm:$0xff] %v2965
        %3140 = vst [vmem:[%s459 + $0x190] sm:$0xff] %v2967
        %3141 = vst [vmem:[%s459 + $0x198] sm:$0xff] %v2969
        %3142 = vst [vmem:[%s459 + $0x1a0] sm:$0xff] %v2971
        %3143 = vst [vmem:[%s459 + $0x1a8] sm:$0xff] %v2973
        %3144 = vst [vmem:[%s459 + $0x1b0] sm:$0xff] %v2975
        %3145 = vst [vmem:[%s459 + $0x1b8] sm:$0xff] %v2977
        %3146 = vst [vmem:[%s459 + $0x1c0] sm:$0xff] %v2979
        %3147 = vst [vmem:[%s459 + $0x1c8] sm:$0xff] %v2981
        %3148 = vst [vmem:[%s459 + $0x1d0] sm:$0xff] %v2983
        %3149 = vst [vmem:[%s459 + $0x1d8] sm:$0xff] %v2985
        %3150 = vst [vmem:[%s459 + $0x1e0] sm:$0xff] %v2987
        %3151 = vst [vmem:[%s459 + $0x1e8] sm:$0xff] %v2989
        %3152 = vst [vmem:[%s459 + $0x1f0] sm:$0xff] %v2991
        %3153 = vst [vmem:[%s459 + $0x1f8] sm:$0xff] %v2993
        %3154 = vst [vmem:[%s459 + $0x200] sm:$0xff] %v2995
        %3155 = vst [vmem:[%s459 + $0x208] sm:$0xff] %v2997
        %3156 = vst [vmem:[%s459 + $0x210] sm:$0xff] %v2999
        %3157 = vst [vmem:[%s459 + $0x218] sm:$0xff] %v3001
        %3158 = vst [vmem:[%s459 + $0x220] sm:$0xff] %v3003
        %3159 = vst [vmem:[%s459 + $0x228] sm:$0xff] %v3005
        %3160 = vst [vmem:[%s459 + $0x230] sm:$0xff] %v3007
        %3161 = vst [vmem:[%s459 + $0x238] sm:$0xff] %v3009
        %3162 = vst [vmem:[%s459 + $0x240] sm:$0xff] %v3011
        %3163 = vst [vmem:[%s459 + $0x248] sm:$0xff] %v3013
        %3164 = vst [vmem:[%s459 + $0x250] sm:$0xff] %v3015
        %3165 = vst [vmem:[%s459 + $0x258] sm:$0xff] %v3017
        %3166 = vst [vmem:[%s459 + $0x260] sm:$0xff] %v3019
        %3167 = vst [vmem:[%s459 + $0x268] sm:$0xff] %v3021
        %3168 = vst [vmem:[%s459 + $0x270] sm:$0xff] %v3023
        %3169 = vst [vmem:[%s459 + $0x278] sm:$0xff] %v3025
        %3170 = vst [vmem:[%s459 + $0x280] sm:$0xff] %v3027
        %3171 = vst [vmem:[%s459 + $0x288] sm:$0xff] %v3029
        %3172 = vst [vmem:[%s459 + $0x290] sm:$0xff] %v3031
        %3173 = vst [vmem:[%s459 + $0x298] sm:$0xff] %v3033
        %3174 = vst [vmem:[%s459 + $0x2a0] sm:$0xff] %v3035
        %3175 = vst [vmem:[%s459 + $0x2a8] sm:$0xff] %v3037
        %3176 = vst [vmem:[%s459 + $0x2b0] sm:$0xff] %v3039
        %3177 = vst [vmem:[%s459 + $0x2b8] sm:$0xff] %v3041
        %3178 = vst [vmem:[%s459 + $0x2c0] sm:$0xff] %v3043
        %3179 = vst [vmem:[%s459 + $0x2c8] sm:$0xff] %v3045
        %3180 = vst [vmem:[%s459 + $0x2d0] sm:$0xff] %v3047
        %3181 = vst [vmem:[%s459 + $0x2d8] sm:$0xff] %v3049
        %3182 = vst [vmem:[%s459 + $0x2e0] sm:$0xff] %v3051
        %3183 = vst [vmem:[%s459 + $0x2e8] sm:$0xff] %v3053
        %3184 = vst [vmem:[%s459 + $0x2f0] sm:$0xff] %v3055
        %3185 = vst [vmem:[%s459 + $0x2f8] sm:$0xff] %v3057
        %3186 = vst [vmem:[%s459 + $0x300] sm:$0xff] %v3059
        %3187 = vst [vmem:[%s459 + $0x308] sm:$0xff] %v3061
        %3188 = vst [vmem:[%s459 + $0x310] sm:$0xff] %v3063
        %3189 = vst [vmem:[%s459 + $0x318] sm:$0xff] %v3065
        %3190 = vst [vmem:[%s459 + $0x320] sm:$0xff] %v3067
        %3191 = vst [vmem:[%s459 + $0x328] sm:$0xff] %v3069
        %3192 = vst [vmem:[%s459 + $0x330] sm:$0xff] %v3071
        %3193 = vst [vmem:[%s459 + $0x338] sm:$0xff] %v3073
        %3194 = vst [vmem:[%s459 + $0x340] sm:$0xff] %v3075
        %3195 = vst [vmem:[%s459 + $0x348] sm:$0xff] %v3077
        %3196 = vst [vmem:[%s459 + $0x350] sm:$0xff] %v3079
        %3197 = vst [vmem:[%s459 + $0x358] sm:$0xff] %v3081
        %3198 = vst [vmem:[%s459 + $0x360] sm:$0xff] %v3083
        %3199 = vst [vmem:[%s459 + $0x368] sm:$0xff] %v3085
        %3200 = vst [vmem:[%s459 + $0x370] sm:$0xff] %v3087
        %3201 = vst [vmem:[%s459 + $0x378] sm:$0xff] %v3089
        %s3202 = sand.u32 %s232, 1
        %s3203 = scalar_lea.sflag [#allocation4], %s3202
        %s3204 = sand.u32 %s232, 1
        %s3205 = smul.addr %s3204, 896
        %s3206 = scalar_lea.vmem [#allocation17], %s3205
        // Predicated region
        $region93: #{tpu_custom_call.1} parent=55 // pred_check
          %p3207 = pneg %p242
        $region94: #{tpu_custom_call.1} parent=55 // pred_check_branch
          %3209 = sbr.rel (%p3207) target = $region96
        $region95: #{tpu_custom_call.1} parent=55 // pred_region
          %s3210 = smul.u32 16, %s30
          %s3212 = ssub.s32 14336, 14336
          %3213 = vsyncadd %s3203, %s3212
          %s3214 = smul.addr %s3210, 7
          %s3215 = smul.addr %s3214, 128
          %s3216 = scalar_lea.hbm %s9, %s3215
          %s3217 = sshll.u32 %s3206, 4
          %s3218 = int_to_ptr.vmem [resolvable:$true] %s3217
          %3223 = dma.vmem_to_hbm [thread:$0]  %s3218, 14336, %s3216, %s3203, 896, 896, 56
        $region96: #{tpu_custom_call.1} parent=55 // pred_fallthru
          _
      $region56: #{tpu_custom_call.1} parent=5 // pred_fallthru
        _
      %p3224 = scmp.le.s32.totalorder 2, %s25
      // Predicated region
      $region97: #{tpu_custom_call.1} parent=5 // pred_check
        %p3225 = pneg %p3224
      $region98: #{tpu_custom_call.1} parent=5 // pred_check_branch
        %3227 = sbr.rel (%p3225) target = $region100
      $region99: #{tpu_custom_call.1} parent=5 // pred_region
        %s3228 = ssub.s32 %s25, 2
        // Predicated region
        $region101: #{tpu_custom_call.1} parent=99 // pred_check
          %p3229 = pneg %p248
        $region102: #{tpu_custom_call.1} parent=99 // pred_check_branch
          %3231 = sbr.rel (%p3229) target = $region104
        $region103: #{tpu_custom_call.1} parent=99 // pred_region
          %s3232 = sand.u32 %s233, 1
          %s3233 = scalar_lea.sflag [#allocation4], %s3232
          %s3234 = sand.u32 %s233, 1
          %s3235 = smul.addr %s3234, 896
          %s3236 = scalar_lea.vmem [#allocation17], %s3235
          %3237 = dma.done %s3233, 14336
        $region104: #{tpu_custom_call.1} parent=99 // pred_fallthru
          _
      $region100: #{tpu_custom_call.1} parent=5 // pred_fallthru
        _
    $region6: #{tpu_custom_call.1} parent=1 // loop_footer
      %s29 = sadd.s32 1, %s25
    $region7: #{tpu_custom_call.1} parent=1 // loop_footer_branch
      %24 = sbr.rel target = $region3
    $region8: #{tpu_custom_call.1} parent=1 // loop_exit
      _
    %3238 = vsyncpa [#allocation3], 1
    %s3239 = scalar_lea.sflag [#allocation3], 1
    %3240 = vsyncpa %s3239, 1
    %3241 = vsyncpa [#allocation6], 1
    %3242 = vsyncpa [#allocation9], 1
    %3243 = vsyncpa [#allocation12], 1
    %3244 = vsyncpa [#allocation15], 1
    %3245 = vsyncpa [#allocation4], 1
    %s3246 = scalar_lea.sflag [#allocation4], 1
    %3247 = vsyncpa %s3246, 1

</llo_original>
